<compile_context>
chip_gen: v7x
topology: tpu7x:2x2x1
jax: 0.10.0
libtpu: 0.0.40
codegen_flags: <defaults>
</compile_context>

<pallas_src>
import jax
import jax.numpy as jnp
from jax import lax
from jax.experimental import pallas as pl
from jax.experimental.pallas import tpu as pltpu

KERNEL = 4   # Conv2d kernel size (fixed by the module)
STRIDE = 2   # Conv2d stride (fixed by the module)


# ----------------------------- Pallas kernel --------------------------------

def _matmul_bias_relu_kernel(x_ref, w_ref, b_ref, o_ref):
    # x_ref: (tm, K) bf16 patch rows, w_ref: (K, OC) bf16 (resident), b_ref: (1, OC) f32.
    acc = jnp.dot(x_ref[...], w_ref[...], preferred_element_type=jnp.float32)
    acc = acc + b_ref[...]                        # bias + ReLU epilogue in f32
    o_ref[...] = jnp.maximum(acc, 0.0).astype(o_ref.dtype)


def _round_up(x, m):
    return ((x + m - 1) // m) * m


def _choose_tm(M, max_tm=512):
    """Row tile: multiple of 8, capped at max_tm, and (when M allows) small enough
    that the grid has >= 2 steps so ("parallel",) can use both v7x TensorCores."""
    tm = _round_up(max(1, -(-M // 2)), 8)
    if tm > 128:
        tm = _round_up(tm, 128)
    return max(8, min(max_tm, tm))


def matmul_bias_relu(x, w, b, *, max_tm=512):
    """relu(x @ w + b) fused in one Pallas TPU kernel.

    x: (M, K) patch rows (cast to bf16), w: (K, OC) bf16, b: (OC,) f32.
    Returns (M, OC) bf16.
    """
    M, K = x.shape
    K2, OC = w.shape
    assert K == K2, (K, K2)
    x = x.astype(jnp.bfloat16)
    w = w.astype(jnp.bfloat16)
    b2 = b.reshape(1, OC).astype(jnp.float32)

    tm = _choose_tm(M, max_tm)
    grid = (pl.cdiv(M, tm),)   # ragged last block handled by Pallas masking

    return pl.pallas_call(
        _matmul_bias_relu_kernel,
        out_shape=jax.ShapeDtypeStruct((M, OC), jnp.bfloat16),
        grid_spec=pltpu.PrefetchScalarGridSpec(
            num_scalar_prefetch=0,
            grid=grid,
            in_specs=[
                pl.BlockSpec((tm, K), lambda i: (i, 0)),   # patch rows, tiled over M
                pl.BlockSpec((K, OC), lambda i: (0, 0)),   # weight: VMEM-resident (bf16)
                pl.BlockSpec((1, OC), lambda i: (0, 0)),   # bias (f32)
            ],
            out_specs=pl.BlockSpec((tm, OC), lambda i: (i, 0)),
        ),
        compiler_params=pltpu.CompilerParams(
            dimension_semantics=("parallel",)),
        cost_estimate=pl.CostEstimate(
            flops=2 * M * K * OC,
            transcendentals=0,
            bytes_accessed=2 * M * K + 2 * K * OC + 2 * M * OC + 4 * OC),
    )(x, w, b2)


# ------------------------------- glue (JAX) ----------------------------------

def conv2d_relu_nhwc(x, w_mat, b, *, max_tm=512):
    """Conv2d(k=4, s=2, valid) + ReLU on an NHWC activation.

    x: (N, H, W, C) bf16, w_mat: (KH*KW*C, OC) bf16 (pre-reordered), b: (OC,) f32.
    Returns (N, OH, OW, OC) bf16.  No activation transposes.
    """
    N, H, W, C = x.shape
    K, OC = w_mat.shape
    assert K == KERNEL * KERNEL * C, (K, C)
    OH = (H - KERNEL) // STRIDE + 1
    OW = (W - KERNEL) // STRIDE + 1

    # NHWC im2col: 16 lane-contiguous strided slices concatenated on the channel
    # axis.  K ordering is (kh, kw, c) with c fastest -> matches the weight reorder.
    taps = []
    for i in range(KERNEL):
        for j in range(KERNEL):
            taps.append(x[:, i:i + STRIDE * OH:STRIDE, j:j + STRIDE * OW:STRIDE, :])
    patches = jnp.concatenate(taps, axis=-1).reshape(N * OH * OW, K)

    out_rows = matmul_bias_relu(patches, w_mat, b, max_tm=max_tm)  # (M, OC) bf16
    return out_rows.reshape(N, OH, OW, OC)


# ------------------------------ Encoder model --------------------------------

def init_encoder_params(key, depth=32, input_channels=3, kernel=KERNEL):
    """Deterministic synthetic parameters, PyTorch Conv2d layout (OC, IC, KH, KW)."""
    chans = [input_channels, depth, depth * 2, depth * 4, depth * 8]
    params = []
    for li in range(4):
        key, kw_, kb_ = jax.random.split(key, 3)
        ic, oc = chans[li], chans[li + 1]
        fan_in = ic * kernel * kernel
        scale = 1.0 / jnp.sqrt(jnp.asarray(fan_in, jnp.float32))
        w = jax.random.uniform(kw_, (oc, ic, kernel, kernel), jnp.float32, -scale, scale)
        b = jax.random.uniform(kb_, (oc,), jnp.float32, -scale, scale)
        params.append((w, b))
    return params


def prepare_encoder_params(params):
    """One-time reorder of PyTorch (OC, IC, KH, KW) weights to the NHWC im2col
    K ordering (kh, kw, ic) as a (KH*KW*IC, OC) bf16 matrix; bias stays f32."""
    prepared = []
    for w, b in params:
        OC, IC, KH, KW = w.shape
        assert KH == KERNEL and KW == KERNEL
        w_mat = jnp.transpose(w, (2, 3, 1, 0)).reshape(KH * KW * IC, OC)
        prepared.append((w_mat.astype(jnp.bfloat16), b.astype(jnp.float32)))
    return prepared


def encoder_forward(prepared_params, x):
    """x: (batch, horizon, C, 64, 64) -> (batch, horizon, depth*8 * 2 * 2)."""
    orig_shape = x.shape
    x = x.reshape((-1,) + x.shape[-3:])                          # (NB, C, H, W)
    # One-time NCHW -> NHWC (C is tiny) + bf16 cast; NHWC for all 4 layers.
    x = jnp.transpose(x, (0, 2, 3, 1)).astype(jnp.bfloat16)
    for (w_mat, b) in prepared_params:
        x = conv2d_relu_nhwc(x, w_mat, b)
    # Final tiny fix-up so the flatten order is (OC, OH, OW) like PyTorch NCHW.
    x = jnp.transpose(x, (0, 3, 1, 2))                           # (NB, OC, 2, 2)
    return x.reshape(orig_shape[:-3] + (-1,)).astype(jnp.float32)


# pure-JAX f32 reference (lax conv, NCHW) for a sanity check
def encoder_reference(params, x):
    orig_shape = x.shape
    x = x.reshape((-1,) + x.shape[-3:])
    for (w, b) in params:
        x = lax.conv_general_dilated(
            x, w, window_strides=(STRIDE, STRIDE), padding="VALID",
            dimension_numbers=("NCHW", "OIHW", "NCHW"))
        x = jnp.maximum(x + b.reshape(1, -1, 1, 1), 0.0)
    return x.reshape(orig_shape[:-3] + (-1,))


if __name__ == "__main__":
    key = jax.random.PRNGKey(0)
    depth = 8           # small synthetic size (paper uses 32)
    input_channels = 3
    batch, horizon = 2, 2

    kp, kx = jax.random.split(key)
    params = init_encoder_params(kp, depth=depth, input_channels=input_channels)
    prepared = prepare_encoder_params(params)
    # 64x64 spatial is required by the conv stack (4x [k=4, s=2, valid] -> 2x2)
    x = jax.random.normal(kx, (batch, horizon, input_channels, 64, 64), jnp.float32)

    out = jax.block_until_ready(jax.jit(encoder_forward)(prepared, x))
    ref = jax.block_until_ready(jax.jit(encoder_reference)(params, x))

    assert out.shape == (batch, horizon, depth * 8 * 2 * 2), out.shape
    max_err = float(jnp.max(jnp.abs(out - ref)))
    assert jnp.allclose(out, ref, rtol=2e-2, atol=2e-2), max_err

    print("KERNEL_OK")
</pallas_src>

<mosaic_0001>
module attributes {stable_mosaic.version = 11 : i64} {
  func.func @_matmul_bias_relu_kernel(%arg0: i32, %arg1: memref<512x48xbf16, #tpu.memory_space<vmem>>, %arg2: memref<48x8xbf16, #tpu.memory_space<vmem>>, %arg3: memref<1x8xf32, #tpu.memory_space<vmem>>, %arg4: memref<512x8xbf16, #tpu.memory_space<vmem>>) attributes {dimension_semantics = [#tpu.dimension_semantics<parallel>], iteration_bounds = array<i64: 8>, scalar_prefetch = 0 : i64, scratch_operands = 0 : i64, tpu.core_type = #tpu.core_type<tc>, window_params = [{transform_indices = @transform_0, window_bounds = array<i64: 512, 48>}, {pipeline_mode = #tpu.pipeline_mode<synchronous>, transform_indices = @transform_1, window_bounds = array<i64: 48, 8>}, {pipeline_mode = #tpu.pipeline_mode<synchronous>, transform_indices = @transform_2, window_bounds = array<i64: 1, 8>}, {transform_indices = @transform_3, window_bounds = array<i64: 512, 8>}]} {
    %c0 = arith.constant 0 : index
    %c0_0 = arith.constant 0 : index
    %0 = vector.load %arg1[%c0, %c0_0] : memref<512x48xbf16, #tpu.memory_space<vmem>>, vector<512x48xbf16>
    %c0_1 = arith.constant 0 : index
    %c0_2 = arith.constant 0 : index
    %1 = vector.load %arg2[%c0_1, %c0_2] : memref<48x8xbf16, #tpu.memory_space<vmem>>, vector<48x8xbf16>
    %cst = arith.constant dense<0.000000e+00> : vector<512x8xf32>
    %2 = tpu.matmul %0, %1, %cst {dimension_numbers = #tpu.dot_dimension_numbers<[1], [0], [0], [1], [0, 0, 1, 1], [], []>} : vector<512x48xbf16>, vector<48x8xbf16>, vector<512x8xf32> -> vector<512x8xf32>
    %c0_3 = arith.constant 0 : index
    %c0_4 = arith.constant 0 : index
    %3 = vector.load %arg3[%c0_3, %c0_4] : memref<1x8xf32, #tpu.memory_space<vmem>>, vector<1x8xf32>
    %4 = vector.broadcast %3 : vector<1x8xf32> to vector<512x8xf32>
    %5 = arith.addf %2, %4 : vector<512x8xf32>
    %cst_5 = arith.constant 0.000000e+00 : f32
    %6 = vector.broadcast %cst_5 : f32 to vector<512x8xf32>
    %7 = arith.maximumf %5, %6 : vector<512x8xf32>
    %8 = arith.truncf %7 : vector<512x8xf32> to vector<512x8xbf16>
    %c0_6 = arith.constant 0 : index
    %c0_7 = arith.constant 0 : index
    %9 = vector.load %arg4[%c0_6, %c0_7] : memref<512x8xbf16, #tpu.memory_space<vmem>>, vector<512x8xbf16>
    tpu.vector_store %arg4[%c0_6, %c0_7], %8 {strides = array<i32>} : memref<512x8xbf16, #tpu.memory_space<vmem>>, vector<512x8xbf16>,
    return
  }
  func.func @transform_0(%arg0: i32) -> (i32, i32) {
    %c0_i32 = arith.constant 0 : i32
    %c0_i32_0 = arith.constant 0 : i32
    return %arg0, %c0_i32 : i32, i32
  }
  func.func @transform_1(%arg0: i32) -> (i32, i32) {
    %c0_i32 = arith.constant 0 : i32
    %c0_i32_0 = arith.constant 0 : i32
    %c0_i32_1 = arith.constant 0 : i32
    return %c0_i32, %c0_i32_0 : i32, i32
  }
  func.func @transform_2(%arg0: i32) -> (i32, i32) {
    %c0_i32 = arith.constant 0 : i32
    %c0_i32_0 = arith.constant 0 : i32
    %c0_i32_1 = arith.constant 0 : i32
    return %c0_i32, %c0_i32_0 : i32, i32
  }
  func.func @transform_3(%arg0: i32) -> (i32, i32) {
    %c0_i32 = arith.constant 0 : i32
    %c0_i32_0 = arith.constant 0 : i32
    return %arg0, %c0_i32 : i32, i32
  }
}

module attributes {stable_mosaic.version = 11 : i64} {
  func.func @_matmul_bias_relu_kernel(%arg0: i32, %arg1: memref<512x128xbf16, #tpu.memory_space<vmem>>, %arg2: memref<128x16xbf16, #tpu.memory_space<vmem>>, %arg3: memref<1x16xf32, #tpu.memory_space<vmem>>, %arg4: memref<512x16xbf16, #tpu.memory_space<vmem>>) attributes {dimension_semantics = [#tpu.dimension_semantics<parallel>], iteration_bounds = array<i64: 2>, scalar_prefetch = 0 : i64, scratch_operands = 0 : i64, tpu.core_type = #tpu.core_type<tc>, window_params = [{transform_indices = @transform_0, window_bounds = array<i64: 512, 128>}, {pipeline_mode = #tpu.pipeline_mode<synchronous>, transform_indices = @transform_1, window_bounds = array<i64: 128, 16>}, {pipeline_mode = #tpu.pipeline_mode<synchronous>, transform_indices = @transform_2, window_bounds = array<i64: 1, 16>}, {transform_indices = @transform_3, window_bounds = array<i64: 512, 16>}]} {
    %c0 = arith.constant 0 : index
    %c0_0 = arith.constant 0 : index
    %0 = vector.load %arg1[%c0, %c0_0] : memref<512x128xbf16, #tpu.memory_space<vmem>>, vector<512x128xbf16>
    %c0_1 = arith.constant 0 : index
    %c0_2 = arith.constant 0 : index
    %1 = vector.load %arg2[%c0_1, %c0_2] : memref<128x16xbf16, #tpu.memory_space<vmem>>, vector<128x16xbf16>
    %cst = arith.constant dense<0.000000e+00> : vector<512x16xf32>
    %2 = tpu.matmul %0, %1, %cst {dimension_numbers = #tpu.dot_dimension_numbers<[1], [0], [0], [1], [0, 0, 1, 1], [], []>} : vector<512x128xbf16>, vector<128x16xbf16>, vector<512x16xf32> -> vector<512x16xf32>
    %c0_3 = arith.constant 0 : index
    %c0_4 = arith.constant 0 : index
    %3 = vector.load %arg3[%c0_3, %c0_4] : memref<1x16xf32, #tpu.memory_space<vmem>>, vector<1x16xf32>
    %4 = vector.broadcast %3 : vector<1x16xf32> to vector<512x16xf32>
    %5 = arith.addf %2, %4 : vector<512x16xf32>
    %cst_5 = arith.constant 0.000000e+00 : f32
    %6 = vector.broadcast %cst_5 : f32 to vector<512x16xf32>
    %7 = arith.maximumf %5, %6 : vector<512x16xf32>
    %8 = arith.truncf %7 : vector<512x16xf32> to vector<512x16xbf16>
    %c0_6 = arith.constant 0 : index
    %c0_7 = arith.constant 0 : index
    %9 = vector.load %arg4[%c0_6, %c0_7] : memref<512x16xbf16, #tpu.memory_space<vmem>>, vector<512x16xbf16>
    tpu.vector_store %arg4[%c0_6, %c0_7], %8 {strides = array<i32>} : memref<512x16xbf16, #tpu.memory_space<vmem>>, vector<512x16xbf16>,
    return
  }
  func.func @transform_0(%arg0: i32) -> (i32, i32) {
    %c0_i32 = arith.constant 0 : i32
    %c0_i32_0 = arith.constant 0 : i32
    return %arg0, %c0_i32 : i32, i32
  }
  func.func @transform_1(%arg0: i32) -> (i32, i32) {
    %c0_i32 = arith.constant 0 : i32
    %c0_i32_0 = arith.constant 0 : i32
    %c0_i32_1 = arith.constant 0 : i32
    return %c0_i32, %c0_i32_0 : i32, i32
  }
  func.func @transform_2(%arg0: i32) -> (i32, i32) {
    %c0_i32 = arith.constant 0 : i32
    %c0_i32_0 = arith.constant 0 : i32
    %c0_i32_1 = arith.constant 0 : i32
    return %c0_i32, %c0_i32_0 : i32, i32
  }
  func.func @transform_3(%arg0: i32) -> (i32, i32) {
    %c0_i32 = arith.constant 0 : i32
    %c0_i32_0 = arith.constant 0 : i32
    return %arg0, %c0_i32 : i32, i32
  }
}

module attributes {stable_mosaic.version = 11 : i64} {
  func.func @_matmul_bias_relu_kernel(%arg0: i32, %arg1: memref<72x256xbf16, #tpu.memory_space<vmem>>, %arg2: memref<256x32xbf16, #tpu.memory_space<vmem>>, %arg3: memref<1x32xf32, #tpu.memory_space<vmem>>, %arg4: memref<72x32xbf16, #tpu.memory_space<vmem>>) attributes {dimension_semantics = [#tpu.dimension_semantics<parallel>], iteration_bounds = array<i64: 2>, scalar_prefetch = 0 : i64, scratch_operands = 0 : i64, tpu.core_type = #tpu.core_type<tc>, window_params = [{transform_indices = @transform_0, window_bounds = array<i64: 72, 256>}, {pipeline_mode = #tpu.pipeline_mode<synchronous>, transform_indices = @transform_1, window_bounds = array<i64: 256, 32>}, {pipeline_mode = #tpu.pipeline_mode<synchronous>, transform_indices = @transform_2, window_bounds = array<i64: 1, 32>}, {transform_indices = @transform_3, window_bounds = array<i64: 72, 32>}]} {
    %c0 = arith.constant 0 : index
    %c0_0 = arith.constant 0 : index
    %0 = vector.load %arg1[%c0, %c0_0] : memref<72x256xbf16, #tpu.memory_space<vmem>>, vector<72x256xbf16>
    %c0_1 = arith.constant 0 : index
    %c0_2 = arith.constant 0 : index
    %1 = vector.load %arg2[%c0_1, %c0_2] : memref<256x32xbf16, #tpu.memory_space<vmem>>, vector<256x32xbf16>
    %cst = arith.constant dense<0.000000e+00> : vector<72x32xf32>
    %2 = tpu.matmul %0, %1, %cst {dimension_numbers = #tpu.dot_dimension_numbers<[1], [0], [0], [1], [0, 0, 1, 1], [], []>} : vector<72x256xbf16>, vector<256x32xbf16>, vector<72x32xf32> -> vector<72x32xf32>
    %c0_3 = arith.constant 0 : index
    %c0_4 = arith.constant 0 : index
    %3 = vector.load %arg3[%c0_3, %c0_4] : memref<1x32xf32, #tpu.memory_space<vmem>>, vector<1x32xf32>
    %4 = vector.broadcast %3 : vector<1x32xf32> to vector<72x32xf32>
    %5 = arith.addf %2, %4 : vector<72x32xf32>
    %cst_5 = arith.constant 0.000000e+00 : f32
    %6 = vector.broadcast %cst_5 : f32 to vector<72x32xf32>
    %7 = arith.maximumf %5, %6 : vector<72x32xf32>
    %8 = arith.truncf %7 : vector<72x32xf32> to vector<72x32xbf16>
    %c0_6 = arith.constant 0 : index
    %c0_7 = arith.constant 0 : index
    %9 = vector.load %arg4[%c0_6, %c0_7] : memref<72x32xbf16, #tpu.memory_space<vmem>>, vector<72x32xbf16>
    tpu.vector_store %arg4[%c0_6, %c0_7], %8 {strides = array<i32>} : memref<72x32xbf16, #tpu.memory_space<vmem>>, vector<72x32xbf16>,
    return
  }
  func.func @transform_0(%arg0: i32) -> (i32, i32) {
    %c0_i32 = arith.constant 0 : i32
    %c0_i32_0 = arith.constant 0 : i32
    return %arg0, %c0_i32 : i32, i32
  }
  func.func @transform_1(%arg0: i32) -> (i32, i32) {
    %c0_i32 = arith.constant 0 : i32
    %c0_i32_0 = arith.constant 0 : i32
    %c0_i32_1 = arith.constant 0 : i32
    return %c0_i32, %c0_i32_0 : i32, i32
  }
  func.func @transform_2(%arg0: i32) -> (i32, i32) {
    %c0_i32 = arith.constant 0 : i32
    %c0_i32_0 = arith.constant 0 : i32
    %c0_i32_1 = arith.constant 0 : i32
    return %c0_i32, %c0_i32_0 : i32, i32
  }
  func.func @transform_3(%arg0: i32) -> (i32, i32) {
    %c0_i32 = arith.constant 0 : i32
    %c0_i32_0 = arith.constant 0 : i32
    return %arg0, %c0_i32 : i32, i32
  }
}

module attributes {stable_mosaic.version = 11 : i64} {
  func.func @_matmul_bias_relu_kernel(%arg0: i32, %arg1: memref<8x512xbf16, #tpu.memory_space<vmem>>, %arg2: memref<512x64xbf16, #tpu.memory_space<vmem>>, %arg3: memref<1x64xf32, #tpu.memory_space<vmem>>, %arg4: memref<8x64xbf16, #tpu.memory_space<vmem>>) attributes {dimension_semantics = [#tpu.dimension_semantics<parallel>], iteration_bounds = array<i64: 2>, scalar_prefetch = 0 : i64, scratch_operands = 0 : i64, tpu.core_type = #tpu.core_type<tc>, window_params = [{transform_indices = @transform_0, window_bounds = array<i64: 8, 512>}, {pipeline_mode = #tpu.pipeline_mode<synchronous>, transform_indices = @transform_1, window_bounds = array<i64: 512, 64>}, {pipeline_mode = #tpu.pipeline_mode<synchronous>, transform_indices = @transform_2, window_bounds = array<i64: 1, 64>}, {transform_indices = @transform_3, window_bounds = array<i64: 8, 64>}]} {
    %c0 = arith.constant 0 : index
    %c0_0 = arith.constant 0 : index
    %0 = vector.load %arg1[%c0, %c0_0] : memref<8x512xbf16, #tpu.memory_space<vmem>>, vector<8x512xbf16>
    %c0_1 = arith.constant 0 : index
    %c0_2 = arith.constant 0 : index
    %1 = vector.load %arg2[%c0_1, %c0_2] : memref<512x64xbf16, #tpu.memory_space<vmem>>, vector<512x64xbf16>
    %cst = arith.constant dense<0.000000e+00> : vector<8x64xf32>
    %2 = tpu.matmul %0, %1, %cst {dimension_numbers = #tpu.dot_dimension_numbers<[1], [0], [0], [1], [0, 0, 1, 1], [], []>} : vector<8x512xbf16>, vector<512x64xbf16>, vector<8x64xf32> -> vector<8x64xf32>
    %c0_3 = arith.constant 0 : index
    %c0_4 = arith.constant 0 : index
    %3 = vector.load %arg3[%c0_3, %c0_4] : memref<1x64xf32, #tpu.memory_space<vmem>>, vector<1x64xf32>
    %4 = vector.broadcast %3 : vector<1x64xf32> to vector<8x64xf32>
    %5 = arith.addf %2, %4 : vector<8x64xf32>
    %cst_5 = arith.constant 0.000000e+00 : f32
    %6 = vector.broadcast %cst_5 : f32 to vector<8x64xf32>
    %7 = arith.maximumf %5, %6 : vector<8x64xf32>
    %8 = arith.truncf %7 : vector<8x64xf32> to vector<8x64xbf16>
    %c0_6 = arith.constant 0 : index
    %c0_7 = arith.constant 0 : index
    %9 = vector.load %arg4[%c0_6, %c0_7] : memref<8x64xbf16, #tpu.memory_space<vmem>>, vector<8x64xbf16>
    tpu.vector_store %arg4[%c0_6, %c0_7], %8 {strides = array<i32>} : memref<8x64xbf16, #tpu.memory_space<vmem>>, vector<8x64xbf16>,
    return
  }
  func.func @transform_0(%arg0: i32) -> (i32, i32) {
    %c0_i32 = arith.constant 0 : i32
    %c0_i32_0 = arith.constant 0 : i32
    return %arg0, %c0_i32 : i32, i32
  }
  func.func @transform_1(%arg0: i32) -> (i32, i32) {
    %c0_i32 = arith.constant 0 : i32
    %c0_i32_0 = arith.constant 0 : i32
    %c0_i32_1 = arith.constant 0 : i32
    return %c0_i32, %c0_i32_0 : i32, i32
  }
  func.func @transform_2(%arg0: i32) -> (i32, i32) {
    %c0_i32 = arith.constant 0 : i32
    %c0_i32_0 = arith.constant 0 : i32
    %c0_i32_1 = arith.constant 0 : i32
    return %c0_i32, %c0_i32_0 : i32, i32
  }
  func.func @transform_3(%arg0: i32) -> (i32, i32) {
    %c0_i32 = arith.constant 0 : i32
    %c0_i32_0 = arith.constant 0 : i32
    return %arg0, %c0_i32 : i32, i32
  }
}

</mosaic_0001>

<llo_original>
// kernel: encoder_forward.4
$region0: #{encoder_forward.4}
  #allocation0 [shape = 'u32[]', space=smem, size = 0x4, offset = 0x4, fixed_abs, tag = 'smem constant byte address 0x4 - core index']
  #allocation1 [shape = 'u32[144,128]{1,0:T(1,128)}', space=vmem, size = 0x12000, scoped, tag = 'internal scratch']
  %s0 = inlined_call_operand.vmem [shape: bf16[3844,48], index: 0, kind: input, shape index: {}]
  %s1 = inlined_call_operand.vmem [shape: bf16[48,8], index: 1, kind: input, shape index: {}]
  %s2 = inlined_call_operand.vmem [shape: f32[1,8], index: 2, kind: input, shape index: {}]
  %s3 = inlined_call_operand.vmem [shape: bf16[3844,8], index: 3, kind: output, shape index: {}]
  %s4 = sld [smem:[#allocation0]]
  $region89: #{encoder_forward.4} parent=0
    _
  %s6 = ssub.s32 1, %s4
  %s7 = scalar_select 0, %s6, %s4
  $region1: #{encoder_forward.4} parent=0
    #allocation2 [shape = 'u8[262144]{0}', space=vmem, size = 0x40000, scoped, tag = 'output window, operand 0']
    loop: start=0, step=1, limit=10
    $region2: #{encoder_forward.4} parent=1 // loop_pre_header
      _
    $region3: #{encoder_forward.4} parent=1 // loop_header
      %s9 = sphi 0, %s13
      %p10 = scmp.ge.s32.totalorder %s9, 10
      %s19 = sphi 0, %s21
      %s22 = sphi 0, %s19
      %s23 = sphi 0, %s22
      %s39 = sphi 0, %s23
      %s43 = sphi 0, %s43
      %s45 = sphi 0, %s43
      %s46 = sphi 0, %s45
      %s60 = sphi 0, %s46
      %s64 = sphi 0, %s64
      %s66 = sphi 0, %s64
      %s67 = sphi 0, %s66
      %s81 = sphi 0, %s67
      %s87 = sphi 0, %s89
      %s90 = sphi 0, %s87
      %s91 = sphi 0, %s90
      %s107 = sphi 0, %s91
    $region4: #{encoder_forward.4} parent=1 // loop_header_branch
      %12 = sbr.rel (%p10) target = $region8
    $region5: #{encoder_forward.4} parent=1 // loop_body
      %s14 = ssub.s32 %s9, 1
      %s15 = ssub.s32 %s9, 2
      %s16 = sadd.s32 %s9, 1
      %s17 = ssub.s32 %s9, %s16
      %p18 = scmp.eq.s32.totalorder %s17, 0
      %s20 = sadd.s32 %s19, 1
      %s21 = scalar_select %p18, %s19, %s20
      %p24 = pneg %p18
      %p25 = scmp.eq.s32.totalorder %s9, 7
      %p26 = por %p24, %p25
      %p27 = scmp.ne.s32.totalorder %s19, %s22
      %p28 = scmp.eq.s32.totalorder %s9, 0
      %p29 = por %p27, %p28
      %p30 = scmp.ne.s32.totalorder %s19, %s22
      %p31 = scmp.eq.s32.totalorder %s14, 7
      %p32 = por %p30, %p31
      %p33 = scmp.ne.s32.totalorder %s22, %s23
      %p34 = scmp.eq.s32.totalorder %s14, 0
      %p35 = por %p33, %p34
      %p36 = scmp.ne.s32.totalorder %s22, %s23
      %p37 = scmp.eq.s32.totalorder %s15, 7
      %p38 = por %p36, %p37
      %p40 = scmp.ne.s32.totalorder %s23, %s39
      %p41 = scmp.eq.s32.totalorder %s15, 0
      %p42 = por %p40, %p41
      %s44 = sadd.s32 %s43, 1
      %p47 = scmp.eq.s32.totalorder %s9, 7
      %p48 = scmp.ne.s32.totalorder %s43, %s45
      %p49 = scmp.eq.s32.totalorder %s9, 0
      %p50 = por %p48, %p49
      %p51 = scmp.ne.s32.totalorder %s43, %s45
      %p52 = scmp.eq.s32.totalorder %s14, 7
      %p53 = por %p51, %p52
      %p54 = scmp.ne.s32.totalorder %s45, %s46
      %p55 = scmp.eq.s32.totalorder %s14, 0
      %p56 = por %p54, %p55
      %p57 = scmp.ne.s32.totalorder %s45, %s46
      %p58 = scmp.eq.s32.totalorder %s15, 7
      %p59 = por %p57, %p58
      %p61 = scmp.ne.s32.totalorder %s46, %s60
      %p62 = scmp.eq.s32.totalorder %s15, 0
      %p63 = por %p61, %p62
      %s65 = sadd.s32 %s64, 1
      %p68 = scmp.eq.s32.totalorder %s9, 7
      %p69 = scmp.ne.s32.totalorder %s64, %s66
      %p70 = scmp.eq.s32.totalorder %s9, 0
      %p71 = por %p69, %p70
      %p72 = scmp.ne.s32.totalorder %s64, %s66
      %p73 = scmp.eq.s32.totalorder %s14, 7
      %p74 = por %p72, %p73
      %p75 = scmp.ne.s32.totalorder %s66, %s67
      %p76 = scmp.eq.s32.totalorder %s14, 0
      %p77 = por %p75, %p76
      %p78 = scmp.ne.s32.totalorder %s66, %s67
      %p79 = scmp.eq.s32.totalorder %s15, 7
      %p80 = por %p78, %p79
      %p82 = scmp.ne.s32.totalorder %s67, %s81
      %p83 = scmp.eq.s32.totalorder %s15, 0
      %p84 = por %p82, %p83
      %s85 = ssub.s32 %s9, %s16
      %p86 = scmp.eq.s32.totalorder %s85, 0
      %s88 = sadd.s32 %s87, 1
      %s89 = scalar_select %p86, %s87, %s88
      %p92 = pneg %p86
      %p93 = scmp.eq.s32.totalorder %s9, 7
      %p94 = por %p92, %p93
      %p95 = scmp.ne.s32.totalorder %s87, %s90
      %p96 = scmp.eq.s32.totalorder %s9, 0
      %p97 = por %p95, %p96
      %p98 = scmp.ne.s32.totalorder %s87, %s90
      %p99 = scmp.eq.s32.totalorder %s14, 7
      %p100 = por %p98, %p99
      %p101 = scmp.ne.s32.totalorder %s90, %s91
      %p102 = scmp.eq.s32.totalorder %s14, 0
      %p103 = por %p101, %p102
      %p104 = scmp.ne.s32.totalorder %s90, %s91
      %p105 = scmp.eq.s32.totalorder %s15, 7
      %p106 = por %p104, %p105
      %p108 = scmp.ne.s32.totalorder %s91, %s107
      %p109 = scmp.eq.s32.totalorder %s15, 0
      %p110 = por %p108, %p109
      %p111 = scmp.le.s32.totalorder 1, %s9
      %p112 = scmp.lt.s32.totalorder %s9, 9
      %p113 = pnand %p111, %p112
      %p114 = pneg %p113
      // Predicated region
      $region9: #{encoder_forward.4} parent=5 // pred_check
        _
      $region10: #{encoder_forward.4} parent=5 // pred_check_branch
        %116 = sbr.rel (%p113) target = $region12
      $region11: #{encoder_forward.4} parent=5 // pred_region
        %s117 = ssub.s32 %s9, 1
        // Predicated region
        $region13: #{encoder_forward.4} parent=11 // pred_check
          %p118 = pneg %p56
        $region14: #{encoder_forward.4} parent=11 // pred_check_branch
          %120 = sbr.rel (%p118) target = $region16
        $region15: #{encoder_forward.4} parent=11 // pred_region
          _
        $region16: #{encoder_forward.4} parent=11 // pred_fallthru
          _
        // Predicated region
        $region17: #{encoder_forward.4} parent=11 // pred_check
          %p121 = pneg %p77
        $region18: #{encoder_forward.4} parent=11 // pred_check_branch
          %123 = sbr.rel (%p121) target = $region20
        $region19: #{encoder_forward.4} parent=11 // pred_region
          _
        $region20: #{encoder_forward.4} parent=11 // pred_fallthru
          _
      $region12: #{encoder_forward.4} parent=5 // pred_fallthru
        _
      %p124 = scmp.lt.s32.totalorder %s9, 8
      // Predicated region
      $region21: #{encoder_forward.4} parent=5 // pred_check
        %p125 = pneg %p124
      $region22: #{encoder_forward.4} parent=5 // pred_check_branch
        %127 = sbr.rel (%p125) target = $region24
      $region23: #{encoder_forward.4} parent=5 // pred_region
        // Predicated region
        $region25: #{encoder_forward.4} parent=23 // pred_check
          %p128 = pneg %p29
        $region26: #{encoder_forward.4} parent=23 // pred_check_branch
          %130 = sbr.rel (%p128) target = $region28
        $region27: #{encoder_forward.4} parent=23 // pred_region
          %s131 = smul.u32 64, %s9
          %s132 = ssub.s32 481, %s131
          %p133 = scmp.lt.s32.totalorder %s132, 64
          %s134 = scalar_select %p133, %s132, 64
          %s135 = smul.u32 64, %s134
          %p136 = scmp.lt.s32.totalorder %s131, 480
          %s137 = scalar_select %p136, %s131, 480
          %s138 = smul.addr %s137, 4
          %s139 = scalar_lea.vmem %s0, %s138
          %s140 = smul.u32 64, %s9
          %s141 = ssub.s32 481, %s140
          %p142 = scmp.lt.s32.totalorder %s141, 64
          %s143 = scalar_select %p142, %s141, 64
          %s144 = smul.u32 64, %s143
        $region28: #{encoder_forward.4} parent=23 // pred_fallthru
          _
      $region24: #{encoder_forward.4} parent=5 // pred_fallthru
        _
      %p145 = scmp.le.s32.totalorder 1, %s9
      %p146 = scmp.lt.s32.totalorder %s9, 9
      %p147 = pnand %p145, %p146
      %p148 = pneg %p147
      // Predicated region
      $region29: #{encoder_forward.4} parent=5 // pred_check
        _
      $region30: #{encoder_forward.4} parent=5 // pred_check_branch
        %150 = sbr.rel (%p147) target = $region32
      $region31: #{encoder_forward.4} parent=5 // pred_region
        %s151 = ssub.s32 %s9, 1
        %s152 = smul.u32 64, %s14
        %s153 = ssub.s32 481, %s152
        %p154 = scmp.lt.s32.totalorder %s153, 64
        %s155 = scalar_select %p154, %s153, 64
        %s156 = smul.u32 64, %s155
        %p157 = scmp.lt.s32.totalorder %s152, 480
        %s158 = scalar_select %p157, %s152, 480
        %s159 = smul.addr %s158, 4
        %s160 = scalar_lea.vmem %s0, %s159
        %p161 = pneg %p35
        %p162 = pneg %p32
        %p163 = pneg %p56
        %p164 = pneg %p53
        %p165 = pneg %p77
        %p166 = pneg %p74
        %p167 = pneg %p103
        %p168 = pneg %p100
        %s169 = sand.u32 %s90, 1
        %s170 = sand.u32 %s90, 1
        %s171 = smul.addr %s170, 256
        %s172 = scalar_lea.vmem [#allocation2], %s171
        %s173 = smul.u32 64, %s14
        %s174 = ssub.s32 481, %s173
        %p175 = scmp.lt.s32.totalorder %s174, 64
        %s176 = scalar_select %p175, %s174, 64
        %s177 = smul.u32 64, %s176
        %p178 = scmp.lt.s32.totalorder %s173, 480
        %s179 = scalar_select %p178, %s173, 480
        %s180 = smul.addr %s179, 4
        %s181 = scalar_lea.vmem %s0, %s180
        %s182 = smul.u32 64, %s14
        %s183 = ssub.s32 481, %s182
        %p184 = scmp.lt.s32.totalorder %s183, 64
        %s185 = scalar_select %p184, %s183, 64
        %s186 = smul.u32 64, %s185
        %s187 = smul.u32 64, %s14
        %s188 = ssub.s32 481, %s187
        %p189 = scmp.lt.s32.totalorder %s188, 64
        %s190 = scalar_select %p189, %s188, 64
        %s191 = smul.u32 64, %s190
        %v193 = vld [vmem:[%s181] sm:$0xf]
        %v194 = vld [vmem:[%s181 + $0x4] sm:$0xf]
        %v195 = vld [vmem:[%s181 + $0x8] sm:$0xf]
        %v196 = vld [vmem:[%s181 + $0xc] sm:$0xf]
        %v197 = vld [vmem:[%s181 + $0x10] sm:$0xf]
        %v198 = vld [vmem:[%s181 + $0x14] sm:$0xf]
        %v199 = vld [vmem:[%s181 + $0x18] sm:$0xf]
        %v200 = vld [vmem:[%s181 + $0x1c] sm:$0xf]
        %v201 = vld [vmem:[%s181 + $0x20] sm:$0xf]
        %v202 = vld [vmem:[%s181 + $0x24] sm:$0xf]
        %v203 = vld [vmem:[%s181 + $0x28] sm:$0xf]
        %v204 = vld [vmem:[%s181 + $0x2c] sm:$0xf]
        %v205 = vld [vmem:[%s181 + $0x30] sm:$0xf]
        %v206 = vld [vmem:[%s181 + $0x34] sm:$0xf]
        %v207 = vld [vmem:[%s181 + $0x38] sm:$0xf]
        %v208 = vld [vmem:[%s181 + $0x3c] sm:$0xf]
        %v209 = vld [vmem:[%s181 + $0x40] sm:$0xf]
        %v210 = vld [vmem:[%s181 + $0x44] sm:$0xf]
        %v211 = vld [vmem:[%s181 + $0x48] sm:$0xf]
        %v212 = vld [vmem:[%s181 + $0x4c] sm:$0xf]
        %v213 = vld [vmem:[%s181 + $0x50] sm:$0xf]
        %v214 = vld [vmem:[%s181 + $0x54] sm:$0xf]
        %v215 = vld [vmem:[%s181 + $0x58] sm:$0xf]
        %v216 = vld [vmem:[%s181 + $0x5c] sm:$0xf]
        %v217 = vld [vmem:[%s181 + $0x60] sm:$0xf]
        %v218 = vld [vmem:[%s181 + $0x64] sm:$0xf]
        %v219 = vld [vmem:[%s181 + $0x68] sm:$0xf]
        %v220 = vld [vmem:[%s181 + $0x6c] sm:$0xf]
        %v221 = vld [vmem:[%s181 + $0x70] sm:$0xf]
        %v222 = vld [vmem:[%s181 + $0x74] sm:$0xf]
        %v223 = vld [vmem:[%s181 + $0x78] sm:$0xf]
        %v224 = vld [vmem:[%s181 + $0x7c] sm:$0xf]
        %v225 = vld [vmem:[%s181 + $0x80] sm:$0xf]
        %v226 = vld [vmem:[%s181 + $0x84] sm:$0xf]
        %v227 = vld [vmem:[%s181 + $0x88] sm:$0xf]
        %v228 = vld [vmem:[%s181 + $0x8c] sm:$0xf]
        %v229 = vld [vmem:[%s181 + $0x90] sm:$0xf]
        %v230 = vld [vmem:[%s181 + $0x94] sm:$0xf]
        %v231 = vld [vmem:[%s181 + $0x98] sm:$0xf]
        %v232 = vld [vmem:[%s181 + $0x9c] sm:$0xf]
        %v233 = vld [vmem:[%s181 + $0xa0] sm:$0xf]
        %v234 = vld [vmem:[%s181 + $0xa4] sm:$0xf]
        %v235 = vld [vmem:[%s181 + $0xa8] sm:$0xf]
        %v236 = vld [vmem:[%s181 + $0xac] sm:$0xf]
        %v237 = vld [vmem:[%s181 + $0xb0] sm:$0xf]
        %v238 = vld [vmem:[%s181 + $0xb4] sm:$0xf]
        %v239 = vld [vmem:[%s181 + $0xb8] sm:$0xf]
        %v240 = vld [vmem:[%s181 + $0xbc] sm:$0xf]
        %v241 = vld [vmem:[%s181 + $0xc0] sm:$0xf]
        %v242 = vld [vmem:[%s181 + $0xc4] sm:$0xf]
        %v243 = vld [vmem:[%s181 + $0xc8] sm:$0xf]
        %v244 = vld [vmem:[%s181 + $0xcc] sm:$0xf]
        %v245 = vld [vmem:[%s181 + $0xd0] sm:$0xf]
        %v246 = vld [vmem:[%s181 + $0xd4] sm:$0xf]
        %v247 = vld [vmem:[%s181 + $0xd8] sm:$0xf]
        %v248 = vld [vmem:[%s181 + $0xdc] sm:$0xf]
        %v249 = vld [vmem:[%s181 + $0xe0] sm:$0xf]
        %v250 = vld [vmem:[%s181 + $0xe4] sm:$0xf]
        %v251 = vld [vmem:[%s181 + $0xe8] sm:$0xf]
        %v252 = vld [vmem:[%s181 + $0xec] sm:$0xf]
        %v253 = vld [vmem:[%s181 + $0xf0] sm:$0xf]
        %v254 = vld [vmem:[%s181 + $0xf4] sm:$0xf]
        %v255 = vld [vmem:[%s181 + $0xf8] sm:$0xf]
        %v256 = vld [vmem:[%s181 + $0xfc] sm:$0xf]
        %v257 = vld [vmem:[%s1] sm:$0xf]
        %v258 = vld [vmem:[%s1 + $0x4] sm:$0xf]
        %v259 = vld [vmem:[%s1 + $0x8] sm:$0xf]
        %v260 = vld [vmem:[%s1 + $0xc] sm:$0xf]
        %v261 = vld [vmem:[%s1 + $0x10] sm:$0xf]
        %v262 = vld [vmem:[%s1 + $0x14] sm:$0xf]
        %v263 = vld [vmem:[%s2] sm:$0x1]
        %v265 = vlaneseq
        %v266 = vshrl.u32 %v265, 7
        %v267 = vsub.s32 0, %v266
        %v268 = vrot.slane %v263, %v267
        %v334 = vunpack.c.l.b16 %v193
        %v335 = vunpack.c.l.b16 %v194
        %v336 = vunpack.c.l.b16 %v195
        %v337 = vunpack.c.l.b16 %v196
        %v338 = vunpack.c.l.b16 %v197
        %v339 = vunpack.c.l.b16 %v198
        %v340 = vunpack.c.l.b16 %v199
        %v341 = vunpack.c.l.b16 %v200
        %v342 = vunpack.c.l.b16 %v201
        %v343 = vunpack.c.l.b16 %v202
        %v344 = vunpack.c.l.b16 %v203
        %v345 = vunpack.c.l.b16 %v204
        %v346 = vunpack.c.l.b16 %v205
        %v347 = vunpack.c.l.b16 %v206
        %v348 = vunpack.c.l.b16 %v207
        %v349 = vunpack.c.l.b16 %v208
        %v350 = vunpack.c.l.b16 %v209
        %v351 = vunpack.c.l.b16 %v210
        %v352 = vunpack.c.l.b16 %v211
        %v353 = vunpack.c.l.b16 %v212
        %v354 = vunpack.c.l.b16 %v213
        %v355 = vunpack.c.l.b16 %v214
        %v356 = vunpack.c.l.b16 %v215
        %v357 = vunpack.c.l.b16 %v216
        %v358 = vunpack.c.l.b16 %v217
        %v359 = vunpack.c.l.b16 %v218
        %v360 = vunpack.c.l.b16 %v219
        %v361 = vunpack.c.l.b16 %v220
        %v362 = vunpack.c.l.b16 %v221
        %v363 = vunpack.c.l.b16 %v222
        %v364 = vunpack.c.l.b16 %v223
        %v365 = vunpack.c.l.b16 %v224
        %v366 = vunpack.c.l.b16 %v225
        %v367 = vunpack.c.l.b16 %v226
        %v368 = vunpack.c.l.b16 %v227
        %v369 = vunpack.c.l.b16 %v228
        %v370 = vunpack.c.l.b16 %v229
        %v371 = vunpack.c.l.b16 %v230
        %v372 = vunpack.c.l.b16 %v231
        %v373 = vunpack.c.l.b16 %v232
        %v374 = vunpack.c.l.b16 %v233
        %v375 = vunpack.c.l.b16 %v234
        %v376 = vunpack.c.l.b16 %v235
        %v377 = vunpack.c.l.b16 %v236
        %v378 = vunpack.c.l.b16 %v237
        %v379 = vunpack.c.l.b16 %v238
        %v380 = vunpack.c.l.b16 %v239
        %v381 = vunpack.c.l.b16 %v240
        %v382 = vunpack.c.l.b16 %v241
        %v383 = vunpack.c.l.b16 %v242
        %v384 = vunpack.c.l.b16 %v243
        %v385 = vunpack.c.l.b16 %v244
        %v386 = vunpack.c.l.b16 %v245
        %v387 = vunpack.c.l.b16 %v246
        %v388 = vunpack.c.l.b16 %v247
        %v389 = vunpack.c.l.b16 %v248
        %v390 = vunpack.c.l.b16 %v249
        %v391 = vunpack.c.l.b16 %v250
        %v392 = vunpack.c.l.b16 %v251
        %v393 = vunpack.c.l.b16 %v252
        %v394 = vunpack.c.l.b16 %v253
        %v395 = vunpack.c.l.b16 %v254
        %v396 = vunpack.c.l.b16 %v255
        %v397 = vunpack.c.l.b16 %v256
        %v398 = vpack.c.b16 %v335, %v334
        %v399 = vpack.c.b16 %v337, %v336
        %v400 = vpack.c.b16 %v339, %v338
        %v401 = vpack.c.b16 %v341, %v340
        %v402 = vpack.c.b16 %v343, %v342
        %v403 = vpack.c.b16 %v345, %v344
        %v404 = vpack.c.b16 %v347, %v346
        %v405 = vpack.c.b16 %v349, %v348
        %v406 = vpack.c.b16 %v351, %v350
        %v407 = vpack.c.b16 %v353, %v352
        %v408 = vpack.c.b16 %v355, %v354
        %v409 = vpack.c.b16 %v357, %v356
        %v410 = vpack.c.b16 %v359, %v358
        %v411 = vpack.c.b16 %v361, %v360
        %v412 = vpack.c.b16 %v363, %v362
        %v413 = vpack.c.b16 %v365, %v364
        %v414 = vpack.c.b16 %v367, %v366
        %v415 = vpack.c.b16 %v369, %v368
        %v416 = vpack.c.b16 %v371, %v370
        %v417 = vpack.c.b16 %v373, %v372
        %v418 = vpack.c.b16 %v375, %v374
        %v419 = vpack.c.b16 %v377, %v376
        %v420 = vpack.c.b16 %v379, %v378
        %v421 = vpack.c.b16 %v381, %v380
        %v422 = vpack.c.b16 %v383, %v382
        %v423 = vpack.c.b16 %v385, %v384
        %v424 = vpack.c.b16 %v387, %v386
        %v425 = vpack.c.b16 %v389, %v388
        %v426 = vpack.c.b16 %v391, %v390
        %v427 = vpack.c.b16 %v393, %v392
        %v428 = vpack.c.b16 %v395, %v394
        %v429 = vpack.c.b16 %v397, %v396
        %v436 = vunpack.c.l.b16 %v257
        %v437 = vunpack.c.l.b16 %v258
        %v438 = vunpack.c.l.b16 %v259
        %v439 = vunpack.c.l.b16 %v260
        %v440 = vunpack.c.l.b16 %v261
        %v441 = vunpack.c.l.b16 %v262
        %v442 = vpack.c.b16 %v437, %v436
        %v443 = vpack.c.b16 %v439, %v438
        %v444 = vpack.c.b16 %v441, %v440
        %vm448 = vcmask 392192
        %v450 = vsel %vm448, %v398, 0
        %v453 = vsel %vm448, %v399, 0
        %v456 = vsel %vm448, %v400, 0
        %v459 = vsel %vm448, %v401, 0
        %v462 = vsel %vm448, %v402, 0
        %v465 = vsel %vm448, %v403, 0
        %v468 = vsel %vm448, %v404, 0
        %v471 = vsel %vm448, %v405, 0
        %v474 = vsel %vm448, %v406, 0
        %v477 = vsel %vm448, %v407, 0
        %v480 = vsel %vm448, %v408, 0
        %v483 = vsel %vm448, %v409, 0
        %v486 = vsel %vm448, %v410, 0
        %v489 = vsel %vm448, %v411, 0
        %v492 = vsel %vm448, %v412, 0
        %v495 = vsel %vm448, %v413, 0
        %v498 = vsel %vm448, %v414, 0
        %v501 = vsel %vm448, %v415, 0
        %v504 = vsel %vm448, %v416, 0
        %v507 = vsel %vm448, %v417, 0
        %v510 = vsel %vm448, %v418, 0
        %v513 = vsel %vm448, %v419, 0
        %v516 = vsel %vm448, %v420, 0
        %v519 = vsel %vm448, %v421, 0
        %v522 = vsel %vm448, %v422, 0
        %v525 = vsel %vm448, %v423, 0
        %v528 = vsel %vm448, %v424, 0
        %v531 = vsel %vm448, %v425, 0
        %v534 = vsel %vm448, %v426, 0
        %v537 = vsel %vm448, %v427, 0
        %v540 = vsel %vm448, %v428, 0
        %v543 = vsel %vm448, %v429, 0
        %545 = vmatprep.subr.bf16.mxu0 0
        %546 = vmatpush1.bf16.msra.mxu0 %v442
        %547 = vmatprep.subr.bf16.mxu0 0
        %548 = vmatpush1.bf16.msra.mxu0 %v443
        %549 = vmatprep.subr.bf16.mxu0 0
        %550 = vmatpush1.bf16.msra.mxu0 %v444
        %551 = vmatprep.subr.bf16.mxu0 0
        %552 = vmatpush1.bf16.msra.mxu0 0
        %553 = vmatprep.subr.bf16.mxu0 0
        %554 = vmatpush1.bf16.msra.mxu0 0
        %555 = vmatprep.subr.bf16.mxu0 0
        %556 = vmatpush1.bf16.msra.mxu0 0
        %557 = vmatprep.subr.bf16.mxu0 0
        %558 = vmatpush1.bf16.msra.mxu0 0
        %559 = vmatprep.subr.bf16.mxu0 0
        %560 = vmatpush1.bf16.msra.mxu0 0
        %561 = vmatprep.subr.bf16.mxu0 0
        %562 = vmatpush1.bf16.msra.mxu0 0
        %563 = vmatprep.subr.bf16.mxu0 0
        %564 = vmatpush1.bf16.msra.mxu0 0
        %565 = vmatprep.subr.bf16.mxu0 0
        %566 = vmatpush1.bf16.msra.mxu0 0
        %567 = vmatprep.subr.bf16.mxu0 0
        %568 = vmatpush1.bf16.msra.mxu0 0
        %569 = vmatprep.subr.bf16.mxu0 0
        %570 = vmatpush1.bf16.msra.mxu0 0
        %571 = vmatprep.subr.bf16.mxu0 0
        %572 = vmatpush1.bf16.msra.mxu0 0
        %573 = vmatprep.subr.bf16.mxu0 0
        %574 = vmatpush1.bf16.msra.mxu0 0
        %575 = vmatprep.subr.bf16.mxu0 0
        %576 = vmatpush1.bf16.msra.mxu0 0
        %577 = vmatprep.mubr.bf16.mxu0 0
        %578 = vmatmul.mubr.bf16.gmra.mrb[0].mxu0 %v450
        %v579 = vpop.f32.mrb[0].mxu0
        %v580 = vadd.f32 %v268, %v579
        %v581 = vpop.f32.mrb[0].mxu0
        %v582 = vpop.f32.mrb[0].mxu0
        %v583 = vadd.f32 %v268, %v582
        %v584 = vpop.f32.mrb[0].mxu0
        %585 = vmatprep.mubr.bf16.mxu0 0
        %586 = vmatmul.mubr.bf16.gmra.mrb[0].mxu0 %v453
        %v587 = vpop.f32.mrb[0].mxu0
        %v588 = vadd.f32 %v268, %v587
        %v589 = vpop.f32.mrb[0].mxu0
        %v590 = vpop.f32.mrb[0].mxu0
        %v591 = vadd.f32 %v268, %v590
        %v592 = vpop.f32.mrb[0].mxu0
        %593 = vmatprep.mubr.bf16.mxu0 0
        %594 = vmatmul.mubr.bf16.gmra.mrb[0].mxu0 %v456
        %v595 = vpop.f32.mrb[0].mxu0
        %v596 = vadd.f32 %v268, %v595
        %v597 = vpop.f32.mrb[0].mxu0
        %v598 = vpop.f32.mrb[0].mxu0
        %v599 = vadd.f32 %v268, %v598
        %v600 = vpop.f32.mrb[0].mxu0
        %601 = vmatprep.mubr.bf16.mxu0 0
        %602 = vmatmul.mubr.bf16.gmra.mrb[0].mxu0 %v459
        %v603 = vpop.f32.mrb[0].mxu0
        %v604 = vadd.f32 %v268, %v603
        %v605 = vpop.f32.mrb[0].mxu0
        %v606 = vpop.f32.mrb[0].mxu0
        %v607 = vadd.f32 %v268, %v606
        %v608 = vpop.f32.mrb[0].mxu0
        %609 = vmatprep.mubr.bf16.mxu0 0
        %610 = vmatmul.mubr.bf16.gmra.mrb[0].mxu0 %v462
        %v611 = vpop.f32.mrb[0].mxu0
        %v612 = vadd.f32 %v268, %v611
        %v613 = vpop.f32.mrb[0].mxu0
        %v614 = vpop.f32.mrb[0].mxu0
        %v615 = vadd.f32 %v268, %v614
        %v616 = vpop.f32.mrb[0].mxu0
        %617 = vmatprep.mubr.bf16.mxu0 0
        %618 = vmatmul.mubr.bf16.gmra.mrb[0].mxu0 %v465
        %v619 = vpop.f32.mrb[0].mxu0
        %v620 = vadd.f32 %v268, %v619
        %v621 = vpop.f32.mrb[0].mxu0
        %v622 = vpop.f32.mrb[0].mxu0
        %v623 = vadd.f32 %v268, %v622
        %v624 = vpop.f32.mrb[0].mxu0
        %625 = vmatprep.mubr.bf16.mxu0 0
        %626 = vmatmul.mubr.bf16.gmra.mrb[0].mxu0 %v468
        %v627 = vpop.f32.mrb[0].mxu0
        %v628 = vadd.f32 %v268, %v627
        %v629 = vpop.f32.mrb[0].mxu0
        %v630 = vpop.f32.mrb[0].mxu0
        %v631 = vadd.f32 %v268, %v630
        %v632 = vpop.f32.mrb[0].mxu0
        %633 = vmatprep.mubr.bf16.mxu0 0
        %634 = vmatmul.mubr.bf16.gmra.mrb[0].mxu0 %v471
        %v635 = vpop.f32.mrb[0].mxu0
        %v636 = vadd.f32 %v268, %v635
        %v637 = vpop.f32.mrb[0].mxu0
        %v638 = vpop.f32.mrb[0].mxu0
        %v639 = vadd.f32 %v268, %v638
        %v640 = vpop.f32.mrb[0].mxu0
        %641 = vmatprep.mubr.bf16.mxu0 0
        %642 = vmatmul.mubr.bf16.gmra.mrb[0].mxu0 %v474
        %v643 = vpop.f32.mrb[0].mxu0
        %v644 = vadd.f32 %v268, %v643
        %v645 = vpop.f32.mrb[0].mxu0
        %v646 = vpop.f32.mrb[0].mxu0
        %v647 = vadd.f32 %v268, %v646
        %v648 = vpop.f32.mrb[0].mxu0
        %649 = vmatprep.mubr.bf16.mxu0 0
        %650 = vmatmul.mubr.bf16.gmra.mrb[0].mxu0 %v477
        %v651 = vpop.f32.mrb[0].mxu0
        %v652 = vadd.f32 %v268, %v651
        %v653 = vpop.f32.mrb[0].mxu0
        %v654 = vpop.f32.mrb[0].mxu0
        %v655 = vadd.f32 %v268, %v654
        %v656 = vpop.f32.mrb[0].mxu0
        %657 = vmatprep.mubr.bf16.mxu0 0
        %658 = vmatmul.mubr.bf16.gmra.mrb[0].mxu0 %v480
        %v659 = vpop.f32.mrb[0].mxu0
        %v660 = vadd.f32 %v268, %v659
        %v661 = vpop.f32.mrb[0].mxu0
        %v662 = vpop.f32.mrb[0].mxu0
        %v663 = vadd.f32 %v268, %v662
        %v664 = vpop.f32.mrb[0].mxu0
        %665 = vmatprep.mubr.bf16.mxu0 0
        %666 = vmatmul.mubr.bf16.gmra.mrb[0].mxu0 %v483
        %v667 = vpop.f32.mrb[0].mxu0
        %v668 = vadd.f32 %v268, %v667
        %v669 = vpop.f32.mrb[0].mxu0
        %v670 = vpop.f32.mrb[0].mxu0
        %v671 = vadd.f32 %v268, %v670
        %v672 = vpop.f32.mrb[0].mxu0
        %673 = vmatprep.mubr.bf16.mxu0 0
        %674 = vmatmul.mubr.bf16.gmra.mrb[0].mxu0 %v486
        %v675 = vpop.f32.mrb[0].mxu0
        %v676 = vadd.f32 %v268, %v675
        %v677 = vpop.f32.mrb[0].mxu0
        %v678 = vpop.f32.mrb[0].mxu0
        %v679 = vadd.f32 %v268, %v678
        %v680 = vpop.f32.mrb[0].mxu0
        %681 = vmatprep.mubr.bf16.mxu0 0
        %682 = vmatmul.mubr.bf16.gmra.mrb[0].mxu0 %v489
        %v683 = vpop.f32.mrb[0].mxu0
        %v684 = vadd.f32 %v268, %v683
        %v685 = vpop.f32.mrb[0].mxu0
        %v686 = vpop.f32.mrb[0].mxu0
        %v687 = vadd.f32 %v268, %v686
        %v688 = vpop.f32.mrb[0].mxu0
        %689 = vmatprep.mubr.bf16.mxu0 0
        %690 = vmatmul.mubr.bf16.gmra.mrb[0].mxu0 %v492
        %v691 = vpop.f32.mrb[0].mxu0
        %v692 = vadd.f32 %v268, %v691
        %v693 = vpop.f32.mrb[0].mxu0
        %v694 = vpop.f32.mrb[0].mxu0
        %v695 = vadd.f32 %v268, %v694
        %v696 = vpop.f32.mrb[0].mxu0
        %697 = vmatprep.mubr.bf16.mxu0 0
        %698 = vmatmul.mubr.bf16.gmra.mrb[0].mxu0 %v495
        %v699 = vpop.f32.mrb[0].mxu0
        %v700 = vadd.f32 %v268, %v699
        %v701 = vpop.f32.mrb[0].mxu0
        %v702 = vpop.f32.mrb[0].mxu0
        %v703 = vadd.f32 %v268, %v702
        %v704 = vpop.f32.mrb[0].mxu0
        %705 = vmatprep.mubr.bf16.mxu0 0
        %706 = vmatmul.mubr.bf16.gmra.mrb[0].mxu0 %v498
        %v707 = vpop.f32.mrb[0].mxu0
        %v708 = vadd.f32 %v268, %v707
        %v709 = vpop.f32.mrb[0].mxu0
        %v710 = vpop.f32.mrb[0].mxu0
        %v711 = vadd.f32 %v268, %v710
        %v712 = vpop.f32.mrb[0].mxu0
        %713 = vmatprep.mubr.bf16.mxu0 0
        %714 = vmatmul.mubr.bf16.gmra.mrb[0].mxu0 %v501
        %v715 = vpop.f32.mrb[0].mxu0
        %v716 = vadd.f32 %v268, %v715
        %v717 = vpop.f32.mrb[0].mxu0
        %v718 = vpop.f32.mrb[0].mxu0
        %v719 = vadd.f32 %v268, %v718
        %v720 = vpop.f32.mrb[0].mxu0
        %721 = vmatprep.mubr.bf16.mxu0 0
        %722 = vmatmul.mubr.bf16.gmra.mrb[0].mxu0 %v504
        %v723 = vpop.f32.mrb[0].mxu0
        %v724 = vadd.f32 %v268, %v723
        %v725 = vpop.f32.mrb[0].mxu0
        %v726 = vpop.f32.mrb[0].mxu0
        %v727 = vadd.f32 %v268, %v726
        %v728 = vpop.f32.mrb[0].mxu0
        %729 = vmatprep.mubr.bf16.mxu0 0
        %730 = vmatmul.mubr.bf16.gmra.mrb[0].mxu0 %v507
        %v731 = vpop.f32.mrb[0].mxu0
        %v732 = vadd.f32 %v268, %v731
        %v733 = vpop.f32.mrb[0].mxu0
        %v734 = vpop.f32.mrb[0].mxu0
        %v735 = vadd.f32 %v268, %v734
        %v736 = vpop.f32.mrb[0].mxu0
        %737 = vmatprep.mubr.bf16.mxu0 0
        %738 = vmatmul.mubr.bf16.gmra.mrb[0].mxu0 %v510
        %v739 = vpop.f32.mrb[0].mxu0
        %v740 = vadd.f32 %v268, %v739
        %v741 = vpop.f32.mrb[0].mxu0
        %v742 = vpop.f32.mrb[0].mxu0
        %v743 = vadd.f32 %v268, %v742
        %v744 = vpop.f32.mrb[0].mxu0
        %745 = vmatprep.mubr.bf16.mxu0 0
        %746 = vmatmul.mubr.bf16.gmra.mrb[0].mxu0 %v513
        %v747 = vpop.f32.mrb[0].mxu0
        %v748 = vadd.f32 %v268, %v747
        %v749 = vpop.f32.mrb[0].mxu0
        %v750 = vpop.f32.mrb[0].mxu0
        %v751 = vadd.f32 %v268, %v750
        %v752 = vpop.f32.mrb[0].mxu0
        %753 = vmatprep.mubr.bf16.mxu0 0
        %754 = vmatmul.mubr.bf16.gmra.mrb[0].mxu0 %v516
        %v755 = vpop.f32.mrb[0].mxu0
        %v756 = vadd.f32 %v268, %v755
        %v757 = vpop.f32.mrb[0].mxu0
        %v758 = vpop.f32.mrb[0].mxu0
        %v759 = vadd.f32 %v268, %v758
        %v760 = vpop.f32.mrb[0].mxu0
        %761 = vmatprep.mubr.bf16.mxu0 0
        %762 = vmatmul.mubr.bf16.gmra.mrb[0].mxu0 %v519
        %v763 = vpop.f32.mrb[0].mxu0
        %v764 = vadd.f32 %v268, %v763
        %v765 = vpop.f32.mrb[0].mxu0
        %v766 = vpop.f32.mrb[0].mxu0
        %v767 = vadd.f32 %v268, %v766
        %v768 = vpop.f32.mrb[0].mxu0
        %769 = vmatprep.mubr.bf16.mxu0 0
        %770 = vmatmul.mubr.bf16.gmra.mrb[0].mxu0 %v522
        %v771 = vpop.f32.mrb[0].mxu0
        %v772 = vadd.f32 %v268, %v771
        %v773 = vpop.f32.mrb[0].mxu0
        %v774 = vpop.f32.mrb[0].mxu0
        %v775 = vadd.f32 %v268, %v774
        %v776 = vpop.f32.mrb[0].mxu0
        %777 = vmatprep.mubr.bf16.mxu0 0
        %778 = vmatmul.mubr.bf16.gmra.mrb[0].mxu0 %v525
        %v779 = vpop.f32.mrb[0].mxu0
        %v780 = vadd.f32 %v268, %v779
        %v781 = vpop.f32.mrb[0].mxu0
        %v782 = vpop.f32.mrb[0].mxu0
        %v783 = vadd.f32 %v268, %v782
        %v784 = vpop.f32.mrb[0].mxu0
        %785 = vmatprep.mubr.bf16.mxu0 0
        %786 = vmatmul.mubr.bf16.gmra.mrb[0].mxu0 %v528
        %v787 = vpop.f32.mrb[0].mxu0
        %v788 = vadd.f32 %v268, %v787
        %v789 = vpop.f32.mrb[0].mxu0
        %v790 = vpop.f32.mrb[0].mxu0
        %v791 = vadd.f32 %v268, %v790
        %v792 = vpop.f32.mrb[0].mxu0
        %793 = vmatprep.mubr.bf16.mxu0 0
        %794 = vmatmul.mubr.bf16.gmra.mrb[0].mxu0 %v531
        %v795 = vpop.f32.mrb[0].mxu0
        %v796 = vadd.f32 %v268, %v795
        %v797 = vpop.f32.mrb[0].mxu0
        %v798 = vpop.f32.mrb[0].mxu0
        %v799 = vadd.f32 %v268, %v798
        %v800 = vpop.f32.mrb[0].mxu0
        %801 = vmatprep.mubr.bf16.mxu0 0
        %802 = vmatmul.mubr.bf16.gmra.mrb[0].mxu0 %v534
        %v803 = vpop.f32.mrb[0].mxu0
        %v804 = vadd.f32 %v268, %v803
        %v805 = vpop.f32.mrb[0].mxu0
        %v806 = vpop.f32.mrb[0].mxu0
        %v807 = vadd.f32 %v268, %v806
        %v808 = vpop.f32.mrb[0].mxu0
        %809 = vmatprep.mubr.bf16.mxu0 0
        %810 = vmatmul.mubr.bf16.gmra.mrb[0].mxu0 %v537
        %v811 = vpop.f32.mrb[0].mxu0
        %v812 = vadd.f32 %v268, %v811
        %v813 = vpop.f32.mrb[0].mxu0
        %v814 = vpop.f32.mrb[0].mxu0
        %v815 = vadd.f32 %v268, %v814
        %v816 = vpop.f32.mrb[0].mxu0
        %817 = vmatprep.mubr.bf16.mxu0 0
        %818 = vmatmul.mubr.bf16.gmra.mrb[0].mxu0 %v540
        %v819 = vpop.f32.mrb[0].mxu0
        %v820 = vadd.f32 %v268, %v819
        %v821 = vpop.f32.mrb[0].mxu0
        %v822 = vpop.f32.mrb[0].mxu0
        %v823 = vadd.f32 %v268, %v822
        %v824 = vpop.f32.mrb[0].mxu0
        %825 = vmatprep.mubr.bf16.mxu0 0
        %826 = vmatmul.mubr.bf16.gmra.mrb[0].mxu0 %v543
        %v827 = vpop.f32.mrb[0].mxu0
        %v828 = vadd.f32 %v268, %v827
        %v829 = vpop.f32.mrb[0].mxu0
        %v830 = vpop.f32.mrb[0].mxu0
        %v831 = vadd.f32 %v268, %v830
        %v832 = vpop.f32.mrb[0].mxu0
        %833 = vdwg.mxu0
        %v834 = vmax.f32 %v580, 0.0
        %v835 = vmax.f32 %v583, 0.0
        %v836 = vmax.f32 %v588, 0.0
        %v837 = vmax.f32 %v591, 0.0
        %v838 = vmax.f32 %v596, 0.0
        %v839 = vmax.f32 %v599, 0.0
        %v840 = vmax.f32 %v604, 0.0
        %v841 = vmax.f32 %v607, 0.0
        %v842 = vmax.f32 %v612, 0.0
        %v843 = vmax.f32 %v615, 0.0
        %v844 = vmax.f32 %v620, 0.0
        %v845 = vmax.f32 %v623, 0.0
        %v846 = vmax.f32 %v628, 0.0
        %v847 = vmax.f32 %v631, 0.0
        %v848 = vmax.f32 %v636, 0.0
        %v849 = vmax.f32 %v639, 0.0
        %v850 = vmax.f32 %v644, 0.0
        %v851 = vmax.f32 %v647, 0.0
        %v852 = vmax.f32 %v652, 0.0
        %v853 = vmax.f32 %v655, 0.0
        %v854 = vmax.f32 %v660, 0.0
        %v855 = vmax.f32 %v663, 0.0
        %v856 = vmax.f32 %v668, 0.0
        %v857 = vmax.f32 %v671, 0.0
        %v858 = vmax.f32 %v676, 0.0
        %v859 = vmax.f32 %v679, 0.0
        %v860 = vmax.f32 %v684, 0.0
        %v861 = vmax.f32 %v687, 0.0
        %v862 = vmax.f32 %v692, 0.0
        %v863 = vmax.f32 %v695, 0.0
        %v864 = vmax.f32 %v700, 0.0
        %v865 = vmax.f32 %v703, 0.0
        %v866 = vmax.f32 %v708, 0.0
        %v867 = vmax.f32 %v711, 0.0
        %v868 = vmax.f32 %v716, 0.0
        %v869 = vmax.f32 %v719, 0.0
        %v870 = vmax.f32 %v724, 0.0
        %v871 = vmax.f32 %v727, 0.0
        %v872 = vmax.f32 %v732, 0.0
        %v873 = vmax.f32 %v735, 0.0
        %v874 = vmax.f32 %v740, 0.0
        %v875 = vmax.f32 %v743, 0.0
        %v876 = vmax.f32 %v748, 0.0
        %v877 = vmax.f32 %v751, 0.0
        %v878 = vmax.f32 %v756, 0.0
        %v879 = vmax.f32 %v759, 0.0
        %v880 = vmax.f32 %v764, 0.0
        %v881 = vmax.f32 %v767, 0.0
        %v882 = vmax.f32 %v772, 0.0
        %v883 = vmax.f32 %v775, 0.0
        %v884 = vmax.f32 %v780, 0.0
        %v885 = vmax.f32 %v783, 0.0
        %v886 = vmax.f32 %v788, 0.0
        %v887 = vmax.f32 %v791, 0.0
        %v888 = vmax.f32 %v796, 0.0
        %v889 = vmax.f32 %v799, 0.0
        %v890 = vmax.f32 %v804, 0.0
        %v891 = vmax.f32 %v807, 0.0
        %v892 = vmax.f32 %v812, 0.0
        %v893 = vmax.f32 %v815, 0.0
        %v894 = vmax.f32 %v820, 0.0
        %v895 = vmax.f32 %v823, 0.0
        %v896 = vmax.f32 %v828, 0.0
        %v897 = vmax.f32 %v831, 0.0
        %v898 = vpack.c.bf16 %v835, %v834
        %v899 = vpack.c.bf16 %v837, %v836
        %v900 = vpack.c.bf16 %v839, %v838
        %v901 = vpack.c.bf16 %v841, %v840
        %v902 = vpack.c.bf16 %v843, %v842
        %v903 = vpack.c.bf16 %v845, %v844
        %v904 = vpack.c.bf16 %v847, %v846
        %v905 = vpack.c.bf16 %v849, %v848
        %v906 = vpack.c.bf16 %v851, %v850
        %v907 = vpack.c.bf16 %v853, %v852
        %v908 = vpack.c.bf16 %v855, %v854
        %v909 = vpack.c.bf16 %v857, %v856
        %v910 = vpack.c.bf16 %v859, %v858
        %v911 = vpack.c.bf16 %v861, %v860
        %v912 = vpack.c.bf16 %v863, %v862
        %v913 = vpack.c.bf16 %v865, %v864
        %v914 = vpack.c.bf16 %v867, %v866
        %v915 = vpack.c.bf16 %v869, %v868
        %v916 = vpack.c.bf16 %v871, %v870
        %v917 = vpack.c.bf16 %v873, %v872
        %v918 = vpack.c.bf16 %v875, %v874
        %v919 = vpack.c.bf16 %v877, %v876
        %v920 = vpack.c.bf16 %v879, %v878
        %v921 = vpack.c.bf16 %v881, %v880
        %v922 = vpack.c.bf16 %v883, %v882
        %v923 = vpack.c.bf16 %v885, %v884
        %v924 = vpack.c.bf16 %v887, %v886
        %v925 = vpack.c.bf16 %v889, %v888
        %v926 = vpack.c.bf16 %v891, %v890
        %v927 = vpack.c.bf16 %v893, %v892
        %v928 = vpack.c.bf16 %v895, %v894
        %v929 = vpack.c.bf16 %v897, %v896
        %v962 = vunpack.c.l.b16 %v898
        %v963 = vunpack.c.h.b16 %v898
        %v964 = vunpack.c.l.b16 %v899
        %v965 = vunpack.c.h.b16 %v899
        %v966 = vunpack.c.l.b16 %v900
        %v967 = vunpack.c.h.b16 %v900
        %v968 = vunpack.c.l.b16 %v901
        %v969 = vunpack.c.h.b16 %v901
        %v970 = vunpack.c.l.b16 %v902
        %v971 = vunpack.c.h.b16 %v902
        %v972 = vunpack.c.l.b16 %v903
        %v973 = vunpack.c.h.b16 %v903
        %v974 = vunpack.c.l.b16 %v904
        %v975 = vunpack.c.h.b16 %v904
        %v976 = vunpack.c.l.b16 %v905
        %v977 = vunpack.c.h.b16 %v905
        %v978 = vunpack.c.l.b16 %v906
        %v979 = vunpack.c.h.b16 %v906
        %v980 = vunpack.c.l.b16 %v907
        %v981 = vunpack.c.h.b16 %v907
        %v982 = vunpack.c.l.b16 %v908
        %v983 = vunpack.c.h.b16 %v908
        %v984 = vunpack.c.l.b16 %v909
        %v985 = vunpack.c.h.b16 %v909
        %v986 = vunpack.c.l.b16 %v910
        %v987 = vunpack.c.h.b16 %v910
        %v988 = vunpack.c.l.b16 %v911
        %v989 = vunpack.c.h.b16 %v911
        %v990 = vunpack.c.l.b16 %v912
        %v991 = vunpack.c.h.b16 %v912
        %v992 = vunpack.c.l.b16 %v913
        %v993 = vunpack.c.h.b16 %v913
        %v994 = vunpack.c.l.b16 %v914
        %v995 = vunpack.c.h.b16 %v914
        %v996 = vunpack.c.l.b16 %v915
        %v997 = vunpack.c.h.b16 %v915
        %v998 = vunpack.c.l.b16 %v916
        %v999 = vunpack.c.h.b16 %v916
        %v1000 = vunpack.c.l.b16 %v917
        %v1001 = vunpack.c.h.b16 %v917
        %v1002 = vunpack.c.l.b16 %v918
        %v1003 = vunpack.c.h.b16 %v918
        %v1004 = vunpack.c.l.b16 %v919
        %v1005 = vunpack.c.h.b16 %v919
        %v1006 = vunpack.c.l.b16 %v920
        %v1007 = vunpack.c.h.b16 %v920
        %v1008 = vunpack.c.l.b16 %v921
        %v1009 = vunpack.c.h.b16 %v921
        %v1010 = vunpack.c.l.b16 %v922
        %v1011 = vunpack.c.h.b16 %v922
        %v1012 = vunpack.c.l.b16 %v923
        %v1013 = vunpack.c.h.b16 %v923
        %v1014 = vunpack.c.l.b16 %v924
        %v1015 = vunpack.c.h.b16 %v924
        %v1016 = vunpack.c.l.b16 %v925
        %v1017 = vunpack.c.h.b16 %v925
        %v1018 = vunpack.c.l.b16 %v926
        %v1019 = vunpack.c.h.b16 %v926
        %v1020 = vunpack.c.l.b16 %v927
        %v1021 = vunpack.c.h.b16 %v927
        %v1022 = vunpack.c.l.b16 %v928
        %v1023 = vunpack.c.h.b16 %v928
        %v1024 = vunpack.c.l.b16 %v929
        %v1025 = vunpack.c.h.b16 %v929
        %v1026 = vpack.c.b16 %v962, %v962
        %v1027 = vpack.c.b16 %v963, %v963
        %v1028 = vpack.c.b16 %v964, %v964
        %v1029 = vpack.c.b16 %v965, %v965
        %v1030 = vpack.c.b16 %v966, %v966
        %v1031 = vpack.c.b16 %v967, %v967
        %v1032 = vpack.c.b16 %v968, %v968
        %v1033 = vpack.c.b16 %v969, %v969
        %v1034 = vpack.c.b16 %v970, %v970
        %v1035 = vpack.c.b16 %v971, %v971
        %v1036 = vpack.c.b16 %v972, %v972
        %v1037 = vpack.c.b16 %v973, %v973
        %v1038 = vpack.c.b16 %v974, %v974
        %v1039 = vpack.c.b16 %v975, %v975
        %v1040 = vpack.c.b16 %v976, %v976
        %v1041 = vpack.c.b16 %v977, %v977
        %v1042 = vpack.c.b16 %v978, %v978
        %v1043 = vpack.c.b16 %v979, %v979
        %v1044 = vpack.c.b16 %v980, %v980
        %v1045 = vpack.c.b16 %v981, %v981
        %v1046 = vpack.c.b16 %v982, %v982
        %v1047 = vpack.c.b16 %v983, %v983
        %v1048 = vpack.c.b16 %v984, %v984
        %v1049 = vpack.c.b16 %v985, %v985
        %v1050 = vpack.c.b16 %v986, %v986
        %v1051 = vpack.c.b16 %v987, %v987
        %v1052 = vpack.c.b16 %v988, %v988
        %v1053 = vpack.c.b16 %v989, %v989
        %v1054 = vpack.c.b16 %v990, %v990
        %v1055 = vpack.c.b16 %v991, %v991
        %v1056 = vpack.c.b16 %v992, %v992
        %v1057 = vpack.c.b16 %v993, %v993
        %v1058 = vpack.c.b16 %v994, %v994
        %v1059 = vpack.c.b16 %v995, %v995
        %v1060 = vpack.c.b16 %v996, %v996
        %v1061 = vpack.c.b16 %v997, %v997
        %v1062 = vpack.c.b16 %v998, %v998
        %v1063 = vpack.c.b16 %v999, %v999
        %v1064 = vpack.c.b16 %v1000, %v1000
        %v1065 = vpack.c.b16 %v1001, %v1001
        %v1066 = vpack.c.b16 %v1002, %v1002
        %v1067 = vpack.c.b16 %v1003, %v1003
        %v1068 = vpack.c.b16 %v1004, %v1004
        %v1069 = vpack.c.b16 %v1005, %v1005
        %v1070 = vpack.c.b16 %v1006, %v1006
        %v1071 = vpack.c.b16 %v1007, %v1007
        %v1072 = vpack.c.b16 %v1008, %v1008
        %v1073 = vpack.c.b16 %v1009, %v1009
        %v1074 = vpack.c.b16 %v1010, %v1010
        %v1075 = vpack.c.b16 %v1011, %v1011
        %v1076 = vpack.c.b16 %v1012, %v1012
        %v1077 = vpack.c.b16 %v1013, %v1013
        %v1078 = vpack.c.b16 %v1014, %v1014
        %v1079 = vpack.c.b16 %v1015, %v1015
        %v1080 = vpack.c.b16 %v1016, %v1016
        %v1081 = vpack.c.b16 %v1017, %v1017
        %v1082 = vpack.c.b16 %v1018, %v1018
        %v1083 = vpack.c.b16 %v1019, %v1019
        %v1084 = vpack.c.b16 %v1020, %v1020
        %v1085 = vpack.c.b16 %v1021, %v1021
        %v1086 = vpack.c.b16 %v1022, %v1022
        %v1087 = vpack.c.b16 %v1023, %v1023
        %v1088 = vpack.c.b16 %v1024, %v1024
        %v1089 = vpack.c.b16 %v1025, %v1025
        %vm1154 = vcmask 60416
        %1155 = vst.msk [vmem:[%s172] sm:$0xf] %vm1154, %v1026
        %1156 = vst.msk [vmem:[%s172 + $0x4] sm:$0xf] %vm1154, %v1027
        %1157 = vst.msk [vmem:[%s172 + $0x8] sm:$0xf] %vm1154, %v1028
        %1158 = vst.msk [vmem:[%s172 + $0xc] sm:$0xf] %vm1154, %v1029
        %1159 = vst.msk [vmem:[%s172 + $0x10] sm:$0xf] %vm1154, %v1030
        %1160 = vst.msk [vmem:[%s172 + $0x14] sm:$0xf] %vm1154, %v1031
        %1161 = vst.msk [vmem:[%s172 + $0x18] sm:$0xf] %vm1154, %v1032
        %1162 = vst.msk [vmem:[%s172 + $0x1c] sm:$0xf] %vm1154, %v1033
        %1163 = vst.msk [vmem:[%s172 + $0x20] sm:$0xf] %vm1154, %v1034
        %1164 = vst.msk [vmem:[%s172 + $0x24] sm:$0xf] %vm1154, %v1035
        %1165 = vst.msk [vmem:[%s172 + $0x28] sm:$0xf] %vm1154, %v1036
        %1166 = vst.msk [vmem:[%s172 + $0x2c] sm:$0xf] %vm1154, %v1037
        %1167 = vst.msk [vmem:[%s172 + $0x30] sm:$0xf] %vm1154, %v1038
        %1168 = vst.msk [vmem:[%s172 + $0x34] sm:$0xf] %vm1154, %v1039
        %1169 = vst.msk [vmem:[%s172 + $0x38] sm:$0xf] %vm1154, %v1040
        %1170 = vst.msk [vmem:[%s172 + $0x3c] sm:$0xf] %vm1154, %v1041
        %1171 = vst.msk [vmem:[%s172 + $0x40] sm:$0xf] %vm1154, %v1042
        %1172 = vst.msk [vmem:[%s172 + $0x44] sm:$0xf] %vm1154, %v1043
        %1173 = vst.msk [vmem:[%s172 + $0x48] sm:$0xf] %vm1154, %v1044
        %1174 = vst.msk [vmem:[%s172 + $0x4c] sm:$0xf] %vm1154, %v1045
        %1175 = vst.msk [vmem:[%s172 + $0x50] sm:$0xf] %vm1154, %v1046
        %1176 = vst.msk [vmem:[%s172 + $0x54] sm:$0xf] %vm1154, %v1047
        %1177 = vst.msk [vmem:[%s172 + $0x58] sm:$0xf] %vm1154, %v1048
        %1178 = vst.msk [vmem:[%s172 + $0x5c] sm:$0xf] %vm1154, %v1049
        %1179 = vst.msk [vmem:[%s172 + $0x60] sm:$0xf] %vm1154, %v1050
        %1180 = vst.msk [vmem:[%s172 + $0x64] sm:$0xf] %vm1154, %v1051
        %1181 = vst.msk [vmem:[%s172 + $0x68] sm:$0xf] %vm1154, %v1052
        %1182 = vst.msk [vmem:[%s172 + $0x6c] sm:$0xf] %vm1154, %v1053
        %1183 = vst.msk [vmem:[%s172 + $0x70] sm:$0xf] %vm1154, %v1054
        %1184 = vst.msk [vmem:[%s172 + $0x74] sm:$0xf] %vm1154, %v1055
        %1185 = vst.msk [vmem:[%s172 + $0x78] sm:$0xf] %vm1154, %v1056
        %1186 = vst.msk [vmem:[%s172 + $0x7c] sm:$0xf] %vm1154, %v1057
        %1187 = vst.msk [vmem:[%s172 + $0x80] sm:$0xf] %vm1154, %v1058
        %1188 = vst.msk [vmem:[%s172 + $0x84] sm:$0xf] %vm1154, %v1059
        %1189 = vst.msk [vmem:[%s172 + $0x88] sm:$0xf] %vm1154, %v1060
        %1190 = vst.msk [vmem:[%s172 + $0x8c] sm:$0xf] %vm1154, %v1061
        %1191 = vst.msk [vmem:[%s172 + $0x90] sm:$0xf] %vm1154, %v1062
        %1192 = vst.msk [vmem:[%s172 + $0x94] sm:$0xf] %vm1154, %v1063
        %1193 = vst.msk [vmem:[%s172 + $0x98] sm:$0xf] %vm1154, %v1064
        %1194 = vst.msk [vmem:[%s172 + $0x9c] sm:$0xf] %vm1154, %v1065
        %1195 = vst.msk [vmem:[%s172 + $0xa0] sm:$0xf] %vm1154, %v1066
        %1196 = vst.msk [vmem:[%s172 + $0xa4] sm:$0xf] %vm1154, %v1067
        %1197 = vst.msk [vmem:[%s172 + $0xa8] sm:$0xf] %vm1154, %v1068
        %1198 = vst.msk [vmem:[%s172 + $0xac] sm:$0xf] %vm1154, %v1069
        %1199 = vst.msk [vmem:[%s172 + $0xb0] sm:$0xf] %vm1154, %v1070
        %1200 = vst.msk [vmem:[%s172 + $0xb4] sm:$0xf] %vm1154, %v1071
        %1201 = vst.msk [vmem:[%s172 + $0xb8] sm:$0xf] %vm1154, %v1072
        %1202 = vst.msk [vmem:[%s172 + $0xbc] sm:$0xf] %vm1154, %v1073
        %1203 = vst.msk [vmem:[%s172 + $0xc0] sm:$0xf] %vm1154, %v1074
        %1204 = vst.msk [vmem:[%s172 + $0xc4] sm:$0xf] %vm1154, %v1075
        %1205 = vst.msk [vmem:[%s172 + $0xc8] sm:$0xf] %vm1154, %v1076
        %1206 = vst.msk [vmem:[%s172 + $0xcc] sm:$0xf] %vm1154, %v1077
        %1207 = vst.msk [vmem:[%s172 + $0xd0] sm:$0xf] %vm1154, %v1078
        %1208 = vst.msk [vmem:[%s172 + $0xd4] sm:$0xf] %vm1154, %v1079
        %1209 = vst.msk [vmem:[%s172 + $0xd8] sm:$0xf] %vm1154, %v1080
        %1210 = vst.msk [vmem:[%s172 + $0xdc] sm:$0xf] %vm1154, %v1081
        %1211 = vst.msk [vmem:[%s172 + $0xe0] sm:$0xf] %vm1154, %v1082
        %1212 = vst.msk [vmem:[%s172 + $0xe4] sm:$0xf] %vm1154, %v1083
        %1213 = vst.msk [vmem:[%s172 + $0xe8] sm:$0xf] %vm1154, %v1084
        %1214 = vst.msk [vmem:[%s172 + $0xec] sm:$0xf] %vm1154, %v1085
        %1215 = vst.msk [vmem:[%s172 + $0xf0] sm:$0xf] %vm1154, %v1086
        %1216 = vst.msk [vmem:[%s172 + $0xf4] sm:$0xf] %vm1154, %v1087
        %1217 = vst.msk [vmem:[%s172 + $0xf8] sm:$0xf] %vm1154, %v1088
        %1218 = vst.msk [vmem:[%s172 + $0xfc] sm:$0xf] %vm1154, %v1089
        %s1219 = sand.u32 %s90, 1
        %s1220 = sand.u32 %s90, 1
        %s1221 = smul.addr %s1220, 256
        %s1222 = scalar_lea.vmem [#allocation2], %s1221
        // Predicated region
        $region33: #{encoder_forward.4} parent=31 // pred_check
          %p1223 = pneg %p100
        $region34: #{encoder_forward.4} parent=31 // pred_check_branch
          %1225 = sbr.rel (%p1223) target = $region36
        $region35: #{encoder_forward.4} parent=31 // pred_region
          %s1226 = smul.u32 64, %s14
          %s1227 = ssub.s32 481, %s1226
          %p1228 = scmp.lt.s32.totalorder %s1227, 64
          %s1229 = scalar_select %p1228, %s1227, 64
          %s1230 = smul.u32 64, %s1229
          %p1231 = scmp.ne.s32.totalorder 0, %s1230
          %s1232 = smul.addr %s1226, 4
          %s1233 = scalar_lea.vmem %s3, %s1232
          // Predicated region
          $region37: #{encoder_forward.4} parent=35 // pred_check
            %p1234 = pneg %p1231
          $region38: #{encoder_forward.4} parent=35 // pred_check_branch
            %1236 = sbr.rel (%p1234) target = $region40
          $region39: #{encoder_forward.4} parent=35 // pred_region
            // Predicated region
            $region41: #{encoder_forward.4} parent=39 // pred_check
              _
            $region42: #{encoder_forward.4} parent=39 // pred_check_branch
              %1238 = sbr.rel target = $region44
            $region43: #{encoder_forward.4} parent=39 // pred_region
              // Predicated region
              $region63: #{encoder_forward.4} parent=43 // pred_check
                _
              $region64: #{encoder_forward.4} parent=43 // pred_check_branch
                %1413 = sbr.rel (0) target = $region66
              $region65: #{encoder_forward.4} parent=43 // pred_region
                %s1415 = sshrl.u32 %s1229, 6
                // While loop
                $region67: #{encoder_forward.4} parent=65 // loop_pre_header
                  _
                $region68: #{encoder_forward.4} parent=65 // loop_header
                  %s1417 = sphi 0, %s1419
                  %p1418 = scmp.ge.s32.totalorder %s1417, %s1415
                  %s1422 = sphi 0, %s1555
                  %s1423 = sphi %s1222, %s1558
                  %s1424 = sphi %s1233, %s1559
                $region69: #{encoder_forward.4} parent=65 // loop_header_branch
                  %1421 = sbr.rel (%p1418) target = $region73
                $region70: #{encoder_forward.4} parent=65 // loop_body
                  %v1425 = vld [vmem:[%s1423] sm:$0xf]
                  %1426 = vst [vmem:[%s1424] sm:$0xf] %v1425
                  %v1427 = vld [vmem:[%s1423 + $0x4] sm:$0xf]
                  %1428 = vst [vmem:[%s1424 + $0x4] sm:$0xf] %v1427
                  %v1429 = vld [vmem:[%s1423 + $0x8] sm:$0xf]
                  %1430 = vst [vmem:[%s1424 + $0x8] sm:$0xf] %v1429
                  %v1431 = vld [vmem:[%s1423 + $0xc] sm:$0xf]
                  %1432 = vst [vmem:[%s1424 + $0xc] sm:$0xf] %v1431
                  %v1433 = vld [vmem:[%s1423 + $0x10] sm:$0xf]
                  %1434 = vst [vmem:[%s1424 + $0x10] sm:$0xf] %v1433
                  %v1435 = vld [vmem:[%s1423 + $0x14] sm:$0xf]
                  %1436 = vst [vmem:[%s1424 + $0x14] sm:$0xf] %v1435
                  %v1437 = vld [vmem:[%s1423 + $0x18] sm:$0xf]
                  %1438 = vst [vmem:[%s1424 + $0x18] sm:$0xf] %v1437
                  %v1439 = vld [vmem:[%s1423 + $0x1c] sm:$0xf]
                  %1440 = vst [vmem:[%s1424 + $0x1c] sm:$0xf] %v1439
                  %v1441 = vld [vmem:[%s1423 + $0x20] sm:$0xf]
                  %1442 = vst [vmem:[%s1424 + $0x20] sm:$0xf] %v1441
                  %v1443 = vld [vmem:[%s1423 + $0x24] sm:$0xf]
                  %1444 = vst [vmem:[%s1424 + $0x24] sm:$0xf] %v1443
                  %v1445 = vld [vmem:[%s1423 + $0x28] sm:$0xf]
                  %1446 = vst [vmem:[%s1424 + $0x28] sm:$0xf] %v1445
                  %v1447 = vld [vmem:[%s1423 + $0x2c] sm:$0xf]
                  %1448 = vst [vmem:[%s1424 + $0x2c] sm:$0xf] %v1447
                  %v1449 = vld [vmem:[%s1423 + $0x30] sm:$0xf]
                  %1450 = vst [vmem:[%s1424 + $0x30] sm:$0xf] %v1449
                  %v1451 = vld [vmem:[%s1423 + $0x34] sm:$0xf]
                  %1452 = vst [vmem:[%s1424 + $0x34] sm:$0xf] %v1451
                  %v1453 = vld [vmem:[%s1423 + $0x38] sm:$0xf]
                  %1454 = vst [vmem:[%s1424 + $0x38] sm:$0xf] %v1453
                  %v1455 = vld [vmem:[%s1423 + $0x3c] sm:$0xf]
                  %1456 = vst [vmem:[%s1424 + $0x3c] sm:$0xf] %v1455
                  %v1457 = vld [vmem:[%s1423 + $0x40] sm:$0xf]
                  %1458 = vst [vmem:[%s1424 + $0x40] sm:$0xf] %v1457
                  %v1459 = vld [vmem:[%s1423 + $0x44] sm:$0xf]
                  %1460 = vst [vmem:[%s1424 + $0x44] sm:$0xf] %v1459
                  %v1461 = vld [vmem:[%s1423 + $0x48] sm:$0xf]
                  %1462 = vst [vmem:[%s1424 + $0x48] sm:$0xf] %v1461
                  %v1463 = vld [vmem:[%s1423 + $0x4c] sm:$0xf]
                  %1464 = vst [vmem:[%s1424 + $0x4c] sm:$0xf] %v1463
                  %v1465 = vld [vmem:[%s1423 + $0x50] sm:$0xf]
                  %1466 = vst [vmem:[%s1424 + $0x50] sm:$0xf] %v1465
                  %v1467 = vld [vmem:[%s1423 + $0x54] sm:$0xf]
                  %1468 = vst [vmem:[%s1424 + $0x54] sm:$0xf] %v1467
                  %v1469 = vld [vmem:[%s1423 + $0x58] sm:$0xf]
                  %1470 = vst [vmem:[%s1424 + $0x58] sm:$0xf] %v1469
                  %v1471 = vld [vmem:[%s1423 + $0x5c] sm:$0xf]
                  %1472 = vst [vmem:[%s1424 + $0x5c] sm:$0xf] %v1471
                  %v1473 = vld [vmem:[%s1423 + $0x60] sm:$0xf]
                  %1474 = vst [vmem:[%s1424 + $0x60] sm:$0xf] %v1473
                  %v1475 = vld [vmem:[%s1423 + $0x64] sm:$0xf]
                  %1476 = vst [vmem:[%s1424 + $0x64] sm:$0xf] %v1475
                  %v1477 = vld [vmem:[%s1423 + $0x68] sm:$0xf]
                  %1478 = vst [vmem:[%s1424 + $0x68] sm:$0xf] %v1477
                  %v1479 = vld [vmem:[%s1423 + $0x6c] sm:$0xf]
                  %1480 = vst [vmem:[%s1424 + $0x6c] sm:$0xf] %v1479
                  %v1481 = vld [vmem:[%s1423 + $0x70] sm:$0xf]
                  %1482 = vst [vmem:[%s1424 + $0x70] sm:$0xf] %v1481
                  %v1483 = vld [vmem:[%s1423 + $0x74] sm:$0xf]
                  %1484 = vst [vmem:[%s1424 + $0x74] sm:$0xf] %v1483
                  %v1485 = vld [vmem:[%s1423 + $0x78] sm:$0xf]
                  %1486 = vst [vmem:[%s1424 + $0x78] sm:$0xf] %v1485
                  %v1487 = vld [vmem:[%s1423 + $0x7c] sm:$0xf]
                  %1488 = vst [vmem:[%s1424 + $0x7c] sm:$0xf] %v1487
                  %v1489 = vld [vmem:[%s1423 + $0x80] sm:$0xf]
                  %1490 = vst [vmem:[%s1424 + $0x80] sm:$0xf] %v1489
                  %v1491 = vld [vmem:[%s1423 + $0x84] sm:$0xf]
                  %1492 = vst [vmem:[%s1424 + $0x84] sm:$0xf] %v1491
                  %v1493 = vld [vmem:[%s1423 + $0x88] sm:$0xf]
                  %1494 = vst [vmem:[%s1424 + $0x88] sm:$0xf] %v1493
                  %v1495 = vld [vmem:[%s1423 + $0x8c] sm:$0xf]
                  %1496 = vst [vmem:[%s1424 + $0x8c] sm:$0xf] %v1495
                  %v1497 = vld [vmem:[%s1423 + $0x90] sm:$0xf]
                  %1498 = vst [vmem:[%s1424 + $0x90] sm:$0xf] %v1497
                  %v1499 = vld [vmem:[%s1423 + $0x94] sm:$0xf]
                  %1500 = vst [vmem:[%s1424 + $0x94] sm:$0xf] %v1499
                  %v1501 = vld [vmem:[%s1423 + $0x98] sm:$0xf]
                  %1502 = vst [vmem:[%s1424 + $0x98] sm:$0xf] %v1501
                  %v1503 = vld [vmem:[%s1423 + $0x9c] sm:$0xf]
                  %1504 = vst [vmem:[%s1424 + $0x9c] sm:$0xf] %v1503
                  %v1505 = vld [vmem:[%s1423 + $0xa0] sm:$0xf]
                  %1506 = vst [vmem:[%s1424 + $0xa0] sm:$0xf] %v1505
                  %v1507 = vld [vmem:[%s1423 + $0xa4] sm:$0xf]
                  %1508 = vst [vmem:[%s1424 + $0xa4] sm:$0xf] %v1507
                  %v1509 = vld [vmem:[%s1423 + $0xa8] sm:$0xf]
                  %1510 = vst [vmem:[%s1424 + $0xa8] sm:$0xf] %v1509
                  %v1511 = vld [vmem:[%s1423 + $0xac] sm:$0xf]
                  %1512 = vst [vmem:[%s1424 + $0xac] sm:$0xf] %v1511
                  %v1513 = vld [vmem:[%s1423 + $0xb0] sm:$0xf]
                  %1514 = vst [vmem:[%s1424 + $0xb0] sm:$0xf] %v1513
                  %v1515 = vld [vmem:[%s1423 + $0xb4] sm:$0xf]
                  %1516 = vst [vmem:[%s1424 + $0xb4] sm:$0xf] %v1515
                  %v1517 = vld [vmem:[%s1423 + $0xb8] sm:$0xf]
                  %1518 = vst [vmem:[%s1424 + $0xb8] sm:$0xf] %v1517
                  %v1519 = vld [vmem:[%s1423 + $0xbc] sm:$0xf]
                  %1520 = vst [vmem:[%s1424 + $0xbc] sm:$0xf] %v1519
                  %v1521 = vld [vmem:[%s1423 + $0xc0] sm:$0xf]
                  %1522 = vst [vmem:[%s1424 + $0xc0] sm:$0xf] %v1521
                  %v1523 = vld [vmem:[%s1423 + $0xc4] sm:$0xf]
                  %1524 = vst [vmem:[%s1424 + $0xc4] sm:$0xf] %v1523
                  %v1525 = vld [vmem:[%s1423 + $0xc8] sm:$0xf]
                  %1526 = vst [vmem:[%s1424 + $0xc8] sm:$0xf] %v1525
                  %v1527 = vld [vmem:[%s1423 + $0xcc] sm:$0xf]
                  %1528 = vst [vmem:[%s1424 + $0xcc] sm:$0xf] %v1527
                  %v1529 = vld [vmem:[%s1423 + $0xd0] sm:$0xf]
                  %1530 = vst [vmem:[%s1424 + $0xd0] sm:$0xf] %v1529
                  %v1531 = vld [vmem:[%s1423 + $0xd4] sm:$0xf]
                  %1532 = vst [vmem:[%s1424 + $0xd4] sm:$0xf] %v1531
                  %v1533 = vld [vmem:[%s1423 + $0xd8] sm:$0xf]
                  %1534 = vst [vmem:[%s1424 + $0xd8] sm:$0xf] %v1533
                  %v1535 = vld [vmem:[%s1423 + $0xdc] sm:$0xf]
                  %1536 = vst [vmem:[%s1424 + $0xdc] sm:$0xf] %v1535
                  %v1537 = vld [vmem:[%s1423 + $0xe0] sm:$0xf]
                  %1538 = vst [vmem:[%s1424 + $0xe0] sm:$0xf] %v1537
                  %v1539 = vld [vmem:[%s1423 + $0xe4] sm:$0xf]
                  %1540 = vst [vmem:[%s1424 + $0xe4] sm:$0xf] %v1539
                  %v1541 = vld [vmem:[%s1423 + $0xe8] sm:$0xf]
                  %1542 = vst [vmem:[%s1424 + $0xe8] sm:$0xf] %v1541
                  %v1543 = vld [vmem:[%s1423 + $0xec] sm:$0xf]
                  %1544 = vst [vmem:[%s1424 + $0xec] sm:$0xf] %v1543
                  %v1545 = vld [vmem:[%s1423 + $0xf0] sm:$0xf]
                  %1546 = vst [vmem:[%s1424 + $0xf0] sm:$0xf] %v1545
                  %v1547 = vld [vmem:[%s1423 + $0xf4] sm:$0xf]
                  %1548 = vst [vmem:[%s1424 + $0xf4] sm:$0xf] %v1547
                  %v1549 = vld [vmem:[%s1423 + $0xf8] sm:$0xf]
                  %1550 = vst [vmem:[%s1424 + $0xf8] sm:$0xf] %v1549
                  %v1551 = vld [vmem:[%s1423 + $0xfc] sm:$0xf]
                  %1552 = vst [vmem:[%s1424 + $0xfc] sm:$0xf] %v1551
                  %s1553 = sadd.s32 1, %s1422
                  %p1554 = scmp.ge.s32.totalorder %s1553, %s1415
                  %s1555 = scalar_select %p1554, 0, %s1553
                  %s1556 = smul.u32 %s1555, 256
                  %s1557 = smul.u32 %s1555, 256
                  %s1558 = scalar_lea.vmem %s1222, %s1556 [#allocation2]
                  %s1559 = scalar_lea.vmem %s1233, %s1557
                $region71: #{encoder_forward.4} parent=65 // loop_footer
                  %s1419 = sadd.s32 %s1417, 1
                $region72: #{encoder_forward.4} parent=65 // loop_footer_branch
                  %1416 = sbr.rel target = $region68
                $region73: #{encoder_forward.4} parent=65 // loop_exit
                  _
                %s1560 = sshrl.u32 %s1229, 6
                %s1561 = sand.u32 %s1229, 63
                %s1562 = smul.u32 %s1560, 64
                %s1563 = smul.u32 4, %s1562
                %s1564 = scalar_lea.vmem %s1222, %s1563 [#allocation2]
                %s1565 = smul.u32 4, %s1562
                %s1566 = scalar_lea.vmem %s1233, %s1565
                // While loop
                $region74: #{encoder_forward.4} parent=65 // loop_pre_header
                  _
                $region75: #{encoder_forward.4} parent=65 // loop_header
                  %s1568 = sphi 0, %s1570
                  %p1569 = scmp.ge.s32.totalorder %s1568, %s1561
                  %s1573 = sphi 0, %s1580
                  %s1574 = sphi %s1564, %s1583
                  %s1575 = sphi %s1566, %s1584
                $region76: #{encoder_forward.4} parent=65 // loop_header_branch
                  %1572 = sbr.rel (%p1569) target = $region80
                $region77: #{encoder_forward.4} parent=65 // loop_body
                  %v1576 = vld [vmem:[%s1574] sm:$0xf]
                  %1577 = vst [vmem:[%s1575] sm:$0xf] %v1576
                  %s1578 = sadd.s32 1, %s1573
                  %p1579 = scmp.ge.s32.totalorder %s1578, %s1561
                  %s1580 = scalar_select %p1579, 0, %s1578
                  %s1581 = smul.u32 %s1580, 4
                  %s1582 = smul.u32 %s1580, 4
                  %s1583 = scalar_lea.vmem %s1564, %s1581 [#allocation2]
                  %s1584 = scalar_lea.vmem %s1566, %s1582
                $region78: #{encoder_forward.4} parent=65 // loop_footer
                  %s1570 = sadd.s32 %s1568, 1
                $region79: #{encoder_forward.4} parent=65 // loop_footer_branch
                  %1567 = sbr.rel target = $region75
                $region80: #{encoder_forward.4} parent=65 // loop_exit
                  _
              $region66: #{encoder_forward.4} parent=43 // pred_fallthru
                _
            $region44: #{encoder_forward.4} parent=39 // pred_fallthru
              _
            // Predicated region
            $region45: #{encoder_forward.4} parent=39 // pred_check
              _
            $region46: #{encoder_forward.4} parent=39 // pred_check_branch
              %1240 = sbr.rel (0) target = $region48
            $region47: #{encoder_forward.4} parent=39 // pred_region
              %s1242 = sshrl.u32 %s1229, 6
              // While loop
              $region49: #{encoder_forward.4} parent=47 // loop_pre_header
                _
              $region50: #{encoder_forward.4} parent=47 // loop_header
                %s1244 = sphi 0, %s1246
                %p1245 = scmp.ge.s32.totalorder %s1244, %s1242
                %s1249 = sphi 0, %s1382
                %s1250 = sphi %s1222, %s1385
                %s1251 = sphi %s1233, %s1386
              $region51: #{encoder_forward.4} parent=47 // loop_header_branch
                %1248 = sbr.rel (%p1245) target = $region55
              $region52: #{encoder_forward.4} parent=47 // loop_body
                %v1252 = vld [vmem:[%s1250] sm:$0xf]
                %1253 = vst [vmem:[%s1251] sm:$0xf] %v1252
                %v1254 = vld [vmem:[%s1250 + $0x4] sm:$0xf]
                %1255 = vst [vmem:[%s1251 + $0x4] sm:$0xf] %v1254
                %v1256 = vld [vmem:[%s1250 + $0x8] sm:$0xf]
                %1257 = vst [vmem:[%s1251 + $0x8] sm:$0xf] %v1256
                %v1258 = vld [vmem:[%s1250 + $0xc] sm:$0xf]
                %1259 = vst [vmem:[%s1251 + $0xc] sm:$0xf] %v1258
                %v1260 = vld [vmem:[%s1250 + $0x10] sm:$0xf]
                %1261 = vst [vmem:[%s1251 + $0x10] sm:$0xf] %v1260
                %v1262 = vld [vmem:[%s1250 + $0x14] sm:$0xf]
                %1263 = vst [vmem:[%s1251 + $0x14] sm:$0xf] %v1262
                %v1264 = vld [vmem:[%s1250 + $0x18] sm:$0xf]
                %1265 = vst [vmem:[%s1251 + $0x18] sm:$0xf] %v1264
                %v1266 = vld [vmem:[%s1250 + $0x1c] sm:$0xf]
                %1267 = vst [vmem:[%s1251 + $0x1c] sm:$0xf] %v1266
                %v1268 = vld [vmem:[%s1250 + $0x20] sm:$0xf]
                %1269 = vst [vmem:[%s1251 + $0x20] sm:$0xf] %v1268
                %v1270 = vld [vmem:[%s1250 + $0x24] sm:$0xf]
                %1271 = vst [vmem:[%s1251 + $0x24] sm:$0xf] %v1270
                %v1272 = vld [vmem:[%s1250 + $0x28] sm:$0xf]
                %1273 = vst [vmem:[%s1251 + $0x28] sm:$0xf] %v1272
                %v1274 = vld [vmem:[%s1250 + $0x2c] sm:$0xf]
                %1275 = vst [vmem:[%s1251 + $0x2c] sm:$0xf] %v1274
                %v1276 = vld [vmem:[%s1250 + $0x30] sm:$0xf]
                %1277 = vst [vmem:[%s1251 + $0x30] sm:$0xf] %v1276
                %v1278 = vld [vmem:[%s1250 + $0x34] sm:$0xf]
                %1279 = vst [vmem:[%s1251 + $0x34] sm:$0xf] %v1278
                %v1280 = vld [vmem:[%s1250 + $0x38] sm:$0xf]
                %1281 = vst [vmem:[%s1251 + $0x38] sm:$0xf] %v1280
                %v1282 = vld [vmem:[%s1250 + $0x3c] sm:$0xf]
                %1283 = vst [vmem:[%s1251 + $0x3c] sm:$0xf] %v1282
                %v1284 = vld [vmem:[%s1250 + $0x40] sm:$0xf]
                %1285 = vst [vmem:[%s1251 + $0x40] sm:$0xf] %v1284
                %v1286 = vld [vmem:[%s1250 + $0x44] sm:$0xf]
                %1287 = vst [vmem:[%s1251 + $0x44] sm:$0xf] %v1286
                %v1288 = vld [vmem:[%s1250 + $0x48] sm:$0xf]
                %1289 = vst [vmem:[%s1251 + $0x48] sm:$0xf] %v1288
                %v1290 = vld [vmem:[%s1250 + $0x4c] sm:$0xf]
                %1291 = vst [vmem:[%s1251 + $0x4c] sm:$0xf] %v1290
                %v1292 = vld [vmem:[%s1250 + $0x50] sm:$0xf]
                %1293 = vst [vmem:[%s1251 + $0x50] sm:$0xf] %v1292
                %v1294 = vld [vmem:[%s1250 + $0x54] sm:$0xf]
                %1295 = vst [vmem:[%s1251 + $0x54] sm:$0xf] %v1294
                %v1296 = vld [vmem:[%s1250 + $0x58] sm:$0xf]
                %1297 = vst [vmem:[%s1251 + $0x58] sm:$0xf] %v1296
                %v1298 = vld [vmem:[%s1250 + $0x5c] sm:$0xf]
                %1299 = vst [vmem:[%s1251 + $0x5c] sm:$0xf] %v1298
                %v1300 = vld [vmem:[%s1250 + $0x60] sm:$0xf]
                %1301 = vst [vmem:[%s1251 + $0x60] sm:$0xf] %v1300
                %v1302 = vld [vmem:[%s1250 + $0x64] sm:$0xf]
                %1303 = vst [vmem:[%s1251 + $0x64] sm:$0xf] %v1302
                %v1304 = vld [vmem:[%s1250 + $0x68] sm:$0xf]
                %1305 = vst [vmem:[%s1251 + $0x68] sm:$0xf] %v1304
                %v1306 = vld [vmem:[%s1250 + $0x6c] sm:$0xf]
                %1307 = vst [vmem:[%s1251 + $0x6c] sm:$0xf] %v1306
                %v1308 = vld [vmem:[%s1250 + $0x70] sm:$0xf]
                %1309 = vst [vmem:[%s1251 + $0x70] sm:$0xf] %v1308
                %v1310 = vld [vmem:[%s1250 + $0x74] sm:$0xf]
                %1311 = vst [vmem:[%s1251 + $0x74] sm:$0xf] %v1310
                %v1312 = vld [vmem:[%s1250 + $0x78] sm:$0xf]
                %1313 = vst [vmem:[%s1251 + $0x78] sm:$0xf] %v1312
                %v1314 = vld [vmem:[%s1250 + $0x7c] sm:$0xf]
                %1315 = vst [vmem:[%s1251 + $0x7c] sm:$0xf] %v1314
                %v1316 = vld [vmem:[%s1250 + $0x80] sm:$0xf]
                %1317 = vst [vmem:[%s1251 + $0x80] sm:$0xf] %v1316
                %v1318 = vld [vmem:[%s1250 + $0x84] sm:$0xf]
                %1319 = vst [vmem:[%s1251 + $0x84] sm:$0xf] %v1318
                %v1320 = vld [vmem:[%s1250 + $0x88] sm:$0xf]
                %1321 = vst [vmem:[%s1251 + $0x88] sm:$0xf] %v1320
                %v1322 = vld [vmem:[%s1250 + $0x8c] sm:$0xf]
                %1323 = vst [vmem:[%s1251 + $0x8c] sm:$0xf] %v1322
                %v1324 = vld [vmem:[%s1250 + $0x90] sm:$0xf]
                %1325 = vst [vmem:[%s1251 + $0x90] sm:$0xf] %v1324
                %v1326 = vld [vmem:[%s1250 + $0x94] sm:$0xf]
                %1327 = vst [vmem:[%s1251 + $0x94] sm:$0xf] %v1326
                %v1328 = vld [vmem:[%s1250 + $0x98] sm:$0xf]
                %1329 = vst [vmem:[%s1251 + $0x98] sm:$0xf] %v1328
                %v1330 = vld [vmem:[%s1250 + $0x9c] sm:$0xf]
                %1331 = vst [vmem:[%s1251 + $0x9c] sm:$0xf] %v1330
                %v1332 = vld [vmem:[%s1250 + $0xa0] sm:$0xf]
                %1333 = vst [vmem:[%s1251 + $0xa0] sm:$0xf] %v1332
                %v1334 = vld [vmem:[%s1250 + $0xa4] sm:$0xf]
                %1335 = vst [vmem:[%s1251 + $0xa4] sm:$0xf] %v1334
                %v1336 = vld [vmem:[%s1250 + $0xa8] sm:$0xf]
                %1337 = vst [vmem:[%s1251 + $0xa8] sm:$0xf] %v1336
                %v1338 = vld [vmem:[%s1250 + $0xac] sm:$0xf]
                %1339 = vst [vmem:[%s1251 + $0xac] sm:$0xf] %v1338
                %v1340 = vld [vmem:[%s1250 + $0xb0] sm:$0xf]
                %1341 = vst [vmem:[%s1251 + $0xb0] sm:$0xf] %v1340
                %v1342 = vld [vmem:[%s1250 + $0xb4] sm:$0xf]
                %1343 = vst [vmem:[%s1251 + $0xb4] sm:$0xf] %v1342
                %v1344 = vld [vmem:[%s1250 + $0xb8] sm:$0xf]
                %1345 = vst [vmem:[%s1251 + $0xb8] sm:$0xf] %v1344
                %v1346 = vld [vmem:[%s1250 + $0xbc] sm:$0xf]
                %1347 = vst [vmem:[%s1251 + $0xbc] sm:$0xf] %v1346
                %v1348 = vld [vmem:[%s1250 + $0xc0] sm:$0xf]
                %1349 = vst [vmem:[%s1251 + $0xc0] sm:$0xf] %v1348
                %v1350 = vld [vmem:[%s1250 + $0xc4] sm:$0xf]
                %1351 = vst [vmem:[%s1251 + $0xc4] sm:$0xf] %v1350
                %v1352 = vld [vmem:[%s1250 + $0xc8] sm:$0xf]
                %1353 = vst [vmem:[%s1251 + $0xc8] sm:$0xf] %v1352
                %v1354 = vld [vmem:[%s1250 + $0xcc] sm:$0xf]
                %1355 = vst [vmem:[%s1251 + $0xcc] sm:$0xf] %v1354
                %v1356 = vld [vmem:[%s1250 + $0xd0] sm:$0xf]
                %1357 = vst [vmem:[%s1251 + $0xd0] sm:$0xf] %v1356
                %v1358 = vld [vmem:[%s1250 + $0xd4] sm:$0xf]
                %1359 = vst [vmem:[%s1251 + $0xd4] sm:$0xf] %v1358
                %v1360 = vld [vmem:[%s1250 + $0xd8] sm:$0xf]
                %1361 = vst [vmem:[%s1251 + $0xd8] sm:$0xf] %v1360
                %v1362 = vld [vmem:[%s1250 + $0xdc] sm:$0xf]
                %1363 = vst [vmem:[%s1251 + $0xdc] sm:$0xf] %v1362
                %v1364 = vld [vmem:[%s1250 + $0xe0] sm:$0xf]
                %1365 = vst [vmem:[%s1251 + $0xe0] sm:$0xf] %v1364
                %v1366 = vld [vmem:[%s1250 + $0xe4] sm:$0xf]
                %1367 = vst [vmem:[%s1251 + $0xe4] sm:$0xf] %v1366
                %v1368 = vld [vmem:[%s1250 + $0xe8] sm:$0xf]
                %1369 = vst [vmem:[%s1251 + $0xe8] sm:$0xf] %v1368
                %v1370 = vld [vmem:[%s1250 + $0xec] sm:$0xf]
                %1371 = vst [vmem:[%s1251 + $0xec] sm:$0xf] %v1370
                %v1372 = vld [vmem:[%s1250 + $0xf0] sm:$0xf]
                %1373 = vst [vmem:[%s1251 + $0xf0] sm:$0xf] %v1372
                %v1374 = vld [vmem:[%s1250 + $0xf4] sm:$0xf]
                %1375 = vst [vmem:[%s1251 + $0xf4] sm:$0xf] %v1374
                %v1376 = vld [vmem:[%s1250 + $0xf8] sm:$0xf]
                %1377 = vst [vmem:[%s1251 + $0xf8] sm:$0xf] %v1376
                %v1378 = vld [vmem:[%s1250 + $0xfc] sm:$0xf]
                %1379 = vst [vmem:[%s1251 + $0xfc] sm:$0xf] %v1378
                %s1380 = sadd.s32 1, %s1249
                %p1381 = scmp.ge.s32.totalorder %s1380, %s1242
                %s1382 = scalar_select %p1381, 0, %s1380
                %s1383 = smul.u32 %s1382, 256
                %s1384 = smul.u32 %s1382, 256
                %s1385 = scalar_lea.vmem %s1222, %s1383 [#allocation2]
                %s1386 = scalar_lea.vmem %s1233, %s1384
              $region53: #{encoder_forward.4} parent=47 // loop_footer
                %s1246 = sadd.s32 %s1244, 1
              $region54: #{encoder_forward.4} parent=47 // loop_footer_branch
                %1243 = sbr.rel target = $region50
              $region55: #{encoder_forward.4} parent=47 // loop_exit
                _
              %s1387 = sshrl.u32 %s1229, 6
              %s1388 = sand.u32 %s1229, 63
              %s1389 = smul.u32 %s1387, 64
              %s1390 = smul.u32 4, %s1389
              %s1391 = scalar_lea.vmem %s1222, %s1390 [#allocation2]
              %s1392 = smul.u32 4, %s1389
              %s1393 = scalar_lea.vmem %s1233, %s1392
              // While loop
              $region56: #{encoder_forward.4} parent=47 // loop_pre_header
                _
              $region57: #{encoder_forward.4} parent=47 // loop_header
                %s1395 = sphi 0, %s1397
                %p1396 = scmp.ge.s32.totalorder %s1395, %s1388
                %s1400 = sphi 0, %s1407
                %s1401 = sphi %s1391, %s1410
                %s1402 = sphi %s1393, %s1411
              $region58: #{encoder_forward.4} parent=47 // loop_header_branch
                %1399 = sbr.rel (%p1396) target = $region62
              $region59: #{encoder_forward.4} parent=47 // loop_body
                %v1403 = vld [vmem:[%s1401] sm:$0xf]
                %1404 = vst [vmem:[%s1402] sm:$0xf] %v1403
                %s1405 = sadd.s32 1, %s1400
                %p1406 = scmp.ge.s32.totalorder %s1405, %s1388
                %s1407 = scalar_select %p1406, 0, %s1405
                %s1408 = smul.u32 %s1407, 4
                %s1409 = smul.u32 %s1407, 4
                %s1410 = scalar_lea.vmem %s1391, %s1408 [#allocation2]
                %s1411 = scalar_lea.vmem %s1393, %s1409
              $region60: #{encoder_forward.4} parent=47 // loop_footer
                %s1397 = sadd.s32 %s1395, 1
              $region61: #{encoder_forward.4} parent=47 // loop_footer_branch
                %1394 = sbr.rel target = $region57
              $region62: #{encoder_forward.4} parent=47 // loop_exit
                _
            $region48: #{encoder_forward.4} parent=39 // pred_fallthru
              _
          $region40: #{encoder_forward.4} parent=35 // pred_fallthru
            _
          %1585 = vnop
        $region36: #{encoder_forward.4} parent=31 // pred_fallthru
          _
      $region32: #{encoder_forward.4} parent=5 // pred_fallthru
        _
      %p1586 = scmp.le.s32.totalorder 2, %s9
      // Predicated region
      $region81: #{encoder_forward.4} parent=5 // pred_check
        %p1587 = pneg %p1586
      $region82: #{encoder_forward.4} parent=5 // pred_check_branch
        %1589 = sbr.rel (%p1587) target = $region84
      $region83: #{encoder_forward.4} parent=5 // pred_region
        %s1590 = ssub.s32 %s9, 2
        // Predicated region
        $region85: #{encoder_forward.4} parent=83 // pred_check
          %p1591 = pneg %p106
        $region86: #{encoder_forward.4} parent=83 // pred_check_branch
          %1593 = sbr.rel (%p1591) target = $region88
        $region87: #{encoder_forward.4} parent=83 // pred_region
          %s1594 = sand.u32 %s91, 1
          %s1595 = sand.u32 %s91, 1
          %s1596 = smul.addr %s1595, 256
          %s1597 = scalar_lea.vmem [#allocation2], %s1596
        $region88: #{encoder_forward.4} parent=83 // pred_fallthru
          _
      $region84: #{encoder_forward.4} parent=5 // pred_fallthru
        _
    $region6: #{encoder_forward.4} parent=1 // loop_footer
      %s13 = sadd.s32 1, %s9
    $region7: #{encoder_forward.4} parent=1 // loop_footer_branch
      %8 = sbr.rel target = $region3
    $region8: #{encoder_forward.4} parent=1 // loop_exit
      _

// kernel: encoder_forward.5
$region0: #{encoder_forward.5}
  #allocation0 [shape = 'u32[]', space=smem, size = 0x4, offset = 0x4, fixed_abs, tag = 'smem constant byte address 0x4 - core index']
  #allocation1 [shape = 'u32[144,128]{1,0:T(1,128)}', space=vmem, size = 0x12000, scoped, tag = 'internal scratch']
  %s0 = inlined_call_operand.vmem [shape: bf16[784,128], index: 0, kind: input, shape index: {}]
  %s1 = inlined_call_operand.vmem [shape: bf16[128,16], index: 1, kind: input, shape index: {}]
  %s2 = inlined_call_operand.vmem [shape: f32[1,16], index: 2, kind: input, shape index: {}]
  %s3 = inlined_call_operand.vmem [shape: bf16[784,16], index: 3, kind: output, shape index: {}]
  %s4 = sld [smem:[#allocation0]]
  $region89: #{encoder_forward.5} parent=0
    _
  %s6 = ssub.s32 1, %s4
  %s7 = scalar_select 0, %s6, %s4
  $region1: #{encoder_forward.5} parent=0
    #allocation2 [shape = 'u8[262144]{0}', space=vmem, size = 0x40000, scoped, tag = 'output window, operand 0']
    loop: start=0, step=1, limit=4
    $region2: #{encoder_forward.5} parent=1 // loop_pre_header
      _
    $region3: #{encoder_forward.5} parent=1 // loop_header
      %s9 = sphi 0, %s13
      %p10 = scmp.ge.s32.totalorder %s9, 4
      %s19 = sphi 0, %s21
      %s22 = sphi 0, %s19
      %s23 = sphi 0, %s22
      %s39 = sphi 0, %s23
      %s43 = sphi 0, %s43
      %s45 = sphi 0, %s43
      %s46 = sphi 0, %s45
      %s60 = sphi 0, %s46
      %s64 = sphi 0, %s64
      %s66 = sphi 0, %s64
      %s67 = sphi 0, %s66
      %s81 = sphi 0, %s67
      %s87 = sphi 0, %s89
      %s90 = sphi 0, %s87
      %s91 = sphi 0, %s90
      %s107 = sphi 0, %s91
    $region4: #{encoder_forward.5} parent=1 // loop_header_branch
      %12 = sbr.rel (%p10) target = $region8
    $region5: #{encoder_forward.5} parent=1 // loop_body
      %s14 = ssub.s32 %s9, 1
      %s15 = ssub.s32 %s9, 2
      %s16 = sadd.s32 %s9, 1
      %s17 = ssub.s32 %s9, %s16
      %p18 = scmp.eq.s32.totalorder %s17, 0
      %s20 = sadd.s32 %s19, 1
      %s21 = scalar_select %p18, %s19, %s20
      %p24 = pneg %p18
      %p25 = scmp.eq.s32.totalorder %s9, 1
      %p26 = por %p24, %p25
      %p27 = scmp.ne.s32.totalorder %s19, %s22
      %p28 = scmp.eq.s32.totalorder %s9, 0
      %p29 = por %p27, %p28
      %p30 = scmp.ne.s32.totalorder %s19, %s22
      %p31 = scmp.eq.s32.totalorder %s14, 1
      %p32 = por %p30, %p31
      %p33 = scmp.ne.s32.totalorder %s22, %s23
      %p34 = scmp.eq.s32.totalorder %s14, 0
      %p35 = por %p33, %p34
      %p36 = scmp.ne.s32.totalorder %s22, %s23
      %p37 = scmp.eq.s32.totalorder %s15, 1
      %p38 = por %p36, %p37
      %p40 = scmp.ne.s32.totalorder %s23, %s39
      %p41 = scmp.eq.s32.totalorder %s15, 0
      %p42 = por %p40, %p41
      %s44 = sadd.s32 %s43, 1
      %p47 = scmp.eq.s32.totalorder %s9, 1
      %p48 = scmp.ne.s32.totalorder %s43, %s45
      %p49 = scmp.eq.s32.totalorder %s9, 0
      %p50 = por %p48, %p49
      %p51 = scmp.ne.s32.totalorder %s43, %s45
      %p52 = scmp.eq.s32.totalorder %s14, 1
      %p53 = por %p51, %p52
      %p54 = scmp.ne.s32.totalorder %s45, %s46
      %p55 = scmp.eq.s32.totalorder %s14, 0
      %p56 = por %p54, %p55
      %p57 = scmp.ne.s32.totalorder %s45, %s46
      %p58 = scmp.eq.s32.totalorder %s15, 1
      %p59 = por %p57, %p58
      %p61 = scmp.ne.s32.totalorder %s46, %s60
      %p62 = scmp.eq.s32.totalorder %s15, 0
      %p63 = por %p61, %p62
      %s65 = sadd.s32 %s64, 1
      %p68 = scmp.eq.s32.totalorder %s9, 1
      %p69 = scmp.ne.s32.totalorder %s64, %s66
      %p70 = scmp.eq.s32.totalorder %s9, 0
      %p71 = por %p69, %p70
      %p72 = scmp.ne.s32.totalorder %s64, %s66
      %p73 = scmp.eq.s32.totalorder %s14, 1
      %p74 = por %p72, %p73
      %p75 = scmp.ne.s32.totalorder %s66, %s67
      %p76 = scmp.eq.s32.totalorder %s14, 0
      %p77 = por %p75, %p76
      %p78 = scmp.ne.s32.totalorder %s66, %s67
      %p79 = scmp.eq.s32.totalorder %s15, 1
      %p80 = por %p78, %p79
      %p82 = scmp.ne.s32.totalorder %s67, %s81
      %p83 = scmp.eq.s32.totalorder %s15, 0
      %p84 = por %p82, %p83
      %s85 = ssub.s32 %s9, %s16
      %p86 = scmp.eq.s32.totalorder %s85, 0
      %s88 = sadd.s32 %s87, 1
      %s89 = scalar_select %p86, %s87, %s88
      %p92 = pneg %p86
      %p93 = scmp.eq.s32.totalorder %s9, 1
      %p94 = por %p92, %p93
      %p95 = scmp.ne.s32.totalorder %s87, %s90
      %p96 = scmp.eq.s32.totalorder %s9, 0
      %p97 = por %p95, %p96
      %p98 = scmp.ne.s32.totalorder %s87, %s90
      %p99 = scmp.eq.s32.totalorder %s14, 1
      %p100 = por %p98, %p99
      %p101 = scmp.ne.s32.totalorder %s90, %s91
      %p102 = scmp.eq.s32.totalorder %s14, 0
      %p103 = por %p101, %p102
      %p104 = scmp.ne.s32.totalorder %s90, %s91
      %p105 = scmp.eq.s32.totalorder %s15, 1
      %p106 = por %p104, %p105
      %p108 = scmp.ne.s32.totalorder %s91, %s107
      %p109 = scmp.eq.s32.totalorder %s15, 0
      %p110 = por %p108, %p109
      %p111 = scmp.le.s32.totalorder 1, %s9
      %p112 = scmp.lt.s32.totalorder %s9, 3
      %p113 = pnand %p111, %p112
      %p114 = pneg %p113
      // Predicated region
      $region9: #{encoder_forward.5} parent=5 // pred_check
        _
      $region10: #{encoder_forward.5} parent=5 // pred_check_branch
        %116 = sbr.rel (%p113) target = $region12
      $region11: #{encoder_forward.5} parent=5 // pred_region
        %s117 = ssub.s32 %s9, 1
        // Predicated region
        $region13: #{encoder_forward.5} parent=11 // pred_check
          %p118 = pneg %p56
        $region14: #{encoder_forward.5} parent=11 // pred_check_branch
          %120 = sbr.rel (%p118) target = $region16
        $region15: #{encoder_forward.5} parent=11 // pred_region
          _
        $region16: #{encoder_forward.5} parent=11 // pred_fallthru
          _
        // Predicated region
        $region17: #{encoder_forward.5} parent=11 // pred_check
          %p121 = pneg %p77
        $region18: #{encoder_forward.5} parent=11 // pred_check_branch
          %123 = sbr.rel (%p121) target = $region20
        $region19: #{encoder_forward.5} parent=11 // pred_region
          _
        $region20: #{encoder_forward.5} parent=11 // pred_fallthru
          _
      $region12: #{encoder_forward.5} parent=5 // pred_fallthru
        _
      %p124 = scmp.lt.s32.totalorder %s9, 2
      // Predicated region
      $region21: #{encoder_forward.5} parent=5 // pred_check
        %p125 = pneg %p124
      $region22: #{encoder_forward.5} parent=5 // pred_check_branch
        %127 = sbr.rel (%p125) target = $region24
      $region23: #{encoder_forward.5} parent=5 // pred_region
        // Predicated region
        $region25: #{encoder_forward.5} parent=23 // pred_check
          %p128 = pneg %p29
        $region26: #{encoder_forward.5} parent=23 // pred_check_branch
          %130 = sbr.rel (%p128) target = $region28
        $region27: #{encoder_forward.5} parent=23 // pred_region
          %s131 = smul.u32 64, %s9
          %s132 = ssub.s32 98, %s131
          %p133 = scmp.lt.s32.totalorder %s132, 64
          %s134 = scalar_select %p133, %s132, 64
          %s135 = smul.u32 64, %s134
          %p136 = scmp.lt.s32.totalorder %s131, 97
          %s137 = scalar_select %p136, %s131, 97
          %s138 = smul.addr %s137, 4
          %s139 = scalar_lea.vmem %s0, %s138
          %s140 = smul.u32 64, %s9
          %s141 = ssub.s32 98, %s140
          %p142 = scmp.lt.s32.totalorder %s141, 64
          %s143 = scalar_select %p142, %s141, 64
          %s144 = smul.u32 64, %s143
        $region28: #{encoder_forward.5} parent=23 // pred_fallthru
          _
      $region24: #{encoder_forward.5} parent=5 // pred_fallthru
        _
      %p145 = scmp.le.s32.totalorder 1, %s9
      %p146 = scmp.lt.s32.totalorder %s9, 3
      %p147 = pnand %p145, %p146
      %p148 = pneg %p147
      // Predicated region
      $region29: #{encoder_forward.5} parent=5 // pred_check
        _
      $region30: #{encoder_forward.5} parent=5 // pred_check_branch
        %150 = sbr.rel (%p147) target = $region32
      $region31: #{encoder_forward.5} parent=5 // pred_region
        %s151 = ssub.s32 %s9, 1
        %s152 = smul.u32 64, %s14
        %s153 = ssub.s32 98, %s152
        %p154 = scmp.lt.s32.totalorder %s153, 64
        %s155 = scalar_select %p154, %s153, 64
        %s156 = smul.u32 64, %s155
        %p157 = scmp.lt.s32.totalorder %s152, 97
        %s158 = scalar_select %p157, %s152, 97
        %s159 = smul.addr %s158, 4
        %s160 = scalar_lea.vmem %s0, %s159
        %p161 = pneg %p35
        %p162 = pneg %p32
        %p163 = pneg %p56
        %p164 = pneg %p53
        %p165 = pneg %p77
        %p166 = pneg %p74
        %p167 = pneg %p103
        %p168 = pneg %p100
        %s169 = sand.u32 %s90, 1
        %s170 = sand.u32 %s90, 1
        %s171 = smul.addr %s170, 256
        %s172 = scalar_lea.vmem [#allocation2], %s171
        %s173 = smul.u32 64, %s14
        %s174 = ssub.s32 98, %s173
        %p175 = scmp.lt.s32.totalorder %s174, 64
        %s176 = scalar_select %p175, %s174, 64
        %s177 = smul.u32 64, %s176
        %p178 = scmp.lt.s32.totalorder %s173, 97
        %s179 = scalar_select %p178, %s173, 97
        %s180 = smul.addr %s179, 4
        %s181 = scalar_lea.vmem %s0, %s180
        %s182 = smul.u32 64, %s14
        %s183 = ssub.s32 98, %s182
        %p184 = scmp.lt.s32.totalorder %s183, 64
        %s185 = scalar_select %p184, %s183, 64
        %s186 = smul.u32 64, %s185
        %s187 = smul.u32 64, %s14
        %s188 = ssub.s32 98, %s187
        %p189 = scmp.lt.s32.totalorder %s188, 64
        %s190 = scalar_select %p189, %s188, 64
        %s191 = smul.u32 64, %s190
        %v193 = vld [vmem:[%s181] sm:$0xf]
        %v194 = vld [vmem:[%s181 + $0x4] sm:$0xf]
        %v195 = vld [vmem:[%s181 + $0x8] sm:$0xf]
        %v196 = vld [vmem:[%s181 + $0xc] sm:$0xf]
        %v197 = vld [vmem:[%s181 + $0x10] sm:$0xf]
        %v198 = vld [vmem:[%s181 + $0x14] sm:$0xf]
        %v199 = vld [vmem:[%s181 + $0x18] sm:$0xf]
        %v200 = vld [vmem:[%s181 + $0x1c] sm:$0xf]
        %v201 = vld [vmem:[%s181 + $0x20] sm:$0xf]
        %v202 = vld [vmem:[%s181 + $0x24] sm:$0xf]
        %v203 = vld [vmem:[%s181 + $0x28] sm:$0xf]
        %v204 = vld [vmem:[%s181 + $0x2c] sm:$0xf]
        %v205 = vld [vmem:[%s181 + $0x30] sm:$0xf]
        %v206 = vld [vmem:[%s181 + $0x34] sm:$0xf]
        %v207 = vld [vmem:[%s181 + $0x38] sm:$0xf]
        %v208 = vld [vmem:[%s181 + $0x3c] sm:$0xf]
        %v209 = vld [vmem:[%s181 + $0x40] sm:$0xf]
        %v210 = vld [vmem:[%s181 + $0x44] sm:$0xf]
        %v211 = vld [vmem:[%s181 + $0x48] sm:$0xf]
        %v212 = vld [vmem:[%s181 + $0x4c] sm:$0xf]
        %v213 = vld [vmem:[%s181 + $0x50] sm:$0xf]
        %v214 = vld [vmem:[%s181 + $0x54] sm:$0xf]
        %v215 = vld [vmem:[%s181 + $0x58] sm:$0xf]
        %v216 = vld [vmem:[%s181 + $0x5c] sm:$0xf]
        %v217 = vld [vmem:[%s181 + $0x60] sm:$0xf]
        %v218 = vld [vmem:[%s181 + $0x64] sm:$0xf]
        %v219 = vld [vmem:[%s181 + $0x68] sm:$0xf]
        %v220 = vld [vmem:[%s181 + $0x6c] sm:$0xf]
        %v221 = vld [vmem:[%s181 + $0x70] sm:$0xf]
        %v222 = vld [vmem:[%s181 + $0x74] sm:$0xf]
        %v223 = vld [vmem:[%s181 + $0x78] sm:$0xf]
        %v224 = vld [vmem:[%s181 + $0x7c] sm:$0xf]
        %v225 = vld [vmem:[%s181 + $0x80] sm:$0xf]
        %v226 = vld [vmem:[%s181 + $0x84] sm:$0xf]
        %v227 = vld [vmem:[%s181 + $0x88] sm:$0xf]
        %v228 = vld [vmem:[%s181 + $0x8c] sm:$0xf]
        %v229 = vld [vmem:[%s181 + $0x90] sm:$0xf]
        %v230 = vld [vmem:[%s181 + $0x94] sm:$0xf]
        %v231 = vld [vmem:[%s181 + $0x98] sm:$0xf]
        %v232 = vld [vmem:[%s181 + $0x9c] sm:$0xf]
        %v233 = vld [vmem:[%s181 + $0xa0] sm:$0xf]
        %v234 = vld [vmem:[%s181 + $0xa4] sm:$0xf]
        %v235 = vld [vmem:[%s181 + $0xa8] sm:$0xf]
        %v236 = vld [vmem:[%s181 + $0xac] sm:$0xf]
        %v237 = vld [vmem:[%s181 + $0xb0] sm:$0xf]
        %v238 = vld [vmem:[%s181 + $0xb4] sm:$0xf]
        %v239 = vld [vmem:[%s181 + $0xb8] sm:$0xf]
        %v240 = vld [vmem:[%s181 + $0xbc] sm:$0xf]
        %v241 = vld [vmem:[%s181 + $0xc0] sm:$0xf]
        %v242 = vld [vmem:[%s181 + $0xc4] sm:$0xf]
        %v243 = vld [vmem:[%s181 + $0xc8] sm:$0xf]
        %v244 = vld [vmem:[%s181 + $0xcc] sm:$0xf]
        %v245 = vld [vmem:[%s181 + $0xd0] sm:$0xf]
        %v246 = vld [vmem:[%s181 + $0xd4] sm:$0xf]
        %v247 = vld [vmem:[%s181 + $0xd8] sm:$0xf]
        %v248 = vld [vmem:[%s181 + $0xdc] sm:$0xf]
        %v249 = vld [vmem:[%s181 + $0xe0] sm:$0xf]
        %v250 = vld [vmem:[%s181 + $0xe4] sm:$0xf]
        %v251 = vld [vmem:[%s181 + $0xe8] sm:$0xf]
        %v252 = vld [vmem:[%s181 + $0xec] sm:$0xf]
        %v253 = vld [vmem:[%s181 + $0xf0] sm:$0xf]
        %v254 = vld [vmem:[%s181 + $0xf4] sm:$0xf]
        %v255 = vld [vmem:[%s181 + $0xf8] sm:$0xf]
        %v256 = vld [vmem:[%s181 + $0xfc] sm:$0xf]
        %v257 = vld [vmem:[%s1] sm:$0xf]
        %v258 = vld [vmem:[%s1 + $0x4] sm:$0xf]
        %v259 = vld [vmem:[%s1 + $0x8] sm:$0xf]
        %v260 = vld [vmem:[%s1 + $0xc] sm:$0xf]
        %v261 = vld [vmem:[%s1 + $0x10] sm:$0xf]
        %v262 = vld [vmem:[%s1 + $0x14] sm:$0xf]
        %v263 = vld [vmem:[%s1 + $0x18] sm:$0xf]
        %v264 = vld [vmem:[%s1 + $0x1c] sm:$0xf]
        %v265 = vld [vmem:[%s1 + $0x20] sm:$0xf]
        %v266 = vld [vmem:[%s1 + $0x24] sm:$0xf]
        %v267 = vld [vmem:[%s1 + $0x28] sm:$0xf]
        %v268 = vld [vmem:[%s1 + $0x2c] sm:$0xf]
        %v269 = vld [vmem:[%s1 + $0x30] sm:$0xf]
        %v270 = vld [vmem:[%s1 + $0x34] sm:$0xf]
        %v271 = vld [vmem:[%s1 + $0x38] sm:$0xf]
        %v272 = vld [vmem:[%s1 + $0x3c] sm:$0xf]
        %v273 = vld [vmem:[%s2] sm:$0x1]
        %v275 = vlaneseq
        %v276 = vshrl.u32 %v275, 7
        %v277 = vsub.s32 0, %v276
        %v278 = vrot.slane %v273, %v277
        %v344 = vunpack.c.l.b16 %v193
        %v345 = vunpack.c.l.b16 %v194
        %v346 = vunpack.c.l.b16 %v195
        %v347 = vunpack.c.l.b16 %v196
        %v348 = vunpack.c.l.b16 %v197
        %v349 = vunpack.c.l.b16 %v198
        %v350 = vunpack.c.l.b16 %v199
        %v351 = vunpack.c.l.b16 %v200
        %v352 = vunpack.c.l.b16 %v201
        %v353 = vunpack.c.l.b16 %v202
        %v354 = vunpack.c.l.b16 %v203
        %v355 = vunpack.c.l.b16 %v204
        %v356 = vunpack.c.l.b16 %v205
        %v357 = vunpack.c.l.b16 %v206
        %v358 = vunpack.c.l.b16 %v207
        %v359 = vunpack.c.l.b16 %v208
        %v360 = vunpack.c.l.b16 %v209
        %v361 = vunpack.c.l.b16 %v210
        %v362 = vunpack.c.l.b16 %v211
        %v363 = vunpack.c.l.b16 %v212
        %v364 = vunpack.c.l.b16 %v213
        %v365 = vunpack.c.l.b16 %v214
        %v366 = vunpack.c.l.b16 %v215
        %v367 = vunpack.c.l.b16 %v216
        %v368 = vunpack.c.l.b16 %v217
        %v369 = vunpack.c.l.b16 %v218
        %v370 = vunpack.c.l.b16 %v219
        %v371 = vunpack.c.l.b16 %v220
        %v372 = vunpack.c.l.b16 %v221
        %v373 = vunpack.c.l.b16 %v222
        %v374 = vunpack.c.l.b16 %v223
        %v375 = vunpack.c.l.b16 %v224
        %v376 = vunpack.c.l.b16 %v225
        %v377 = vunpack.c.l.b16 %v226
        %v378 = vunpack.c.l.b16 %v227
        %v379 = vunpack.c.l.b16 %v228
        %v380 = vunpack.c.l.b16 %v229
        %v381 = vunpack.c.l.b16 %v230
        %v382 = vunpack.c.l.b16 %v231
        %v383 = vunpack.c.l.b16 %v232
        %v384 = vunpack.c.l.b16 %v233
        %v385 = vunpack.c.l.b16 %v234
        %v386 = vunpack.c.l.b16 %v235
        %v387 = vunpack.c.l.b16 %v236
        %v388 = vunpack.c.l.b16 %v237
        %v389 = vunpack.c.l.b16 %v238
        %v390 = vunpack.c.l.b16 %v239
        %v391 = vunpack.c.l.b16 %v240
        %v392 = vunpack.c.l.b16 %v241
        %v393 = vunpack.c.l.b16 %v242
        %v394 = vunpack.c.l.b16 %v243
        %v395 = vunpack.c.l.b16 %v244
        %v396 = vunpack.c.l.b16 %v245
        %v397 = vunpack.c.l.b16 %v246
        %v398 = vunpack.c.l.b16 %v247
        %v399 = vunpack.c.l.b16 %v248
        %v400 = vunpack.c.l.b16 %v249
        %v401 = vunpack.c.l.b16 %v250
        %v402 = vunpack.c.l.b16 %v251
        %v403 = vunpack.c.l.b16 %v252
        %v404 = vunpack.c.l.b16 %v253
        %v405 = vunpack.c.l.b16 %v254
        %v406 = vunpack.c.l.b16 %v255
        %v407 = vunpack.c.l.b16 %v256
        %v408 = vpack.c.b16 %v345, %v344
        %v409 = vpack.c.b16 %v347, %v346
        %v410 = vpack.c.b16 %v349, %v348
        %v411 = vpack.c.b16 %v351, %v350
        %v412 = vpack.c.b16 %v353, %v352
        %v413 = vpack.c.b16 %v355, %v354
        %v414 = vpack.c.b16 %v357, %v356
        %v415 = vpack.c.b16 %v359, %v358
        %v416 = vpack.c.b16 %v361, %v360
        %v417 = vpack.c.b16 %v363, %v362
        %v418 = vpack.c.b16 %v365, %v364
        %v419 = vpack.c.b16 %v367, %v366
        %v420 = vpack.c.b16 %v369, %v368
        %v421 = vpack.c.b16 %v371, %v370
        %v422 = vpack.c.b16 %v373, %v372
        %v423 = vpack.c.b16 %v375, %v374
        %v424 = vpack.c.b16 %v377, %v376
        %v425 = vpack.c.b16 %v379, %v378
        %v426 = vpack.c.b16 %v381, %v380
        %v427 = vpack.c.b16 %v383, %v382
        %v428 = vpack.c.b16 %v385, %v384
        %v429 = vpack.c.b16 %v387, %v386
        %v430 = vpack.c.b16 %v389, %v388
        %v431 = vpack.c.b16 %v391, %v390
        %v432 = vpack.c.b16 %v393, %v392
        %v433 = vpack.c.b16 %v395, %v394
        %v434 = vpack.c.b16 %v397, %v396
        %v435 = vpack.c.b16 %v399, %v398
        %v436 = vpack.c.b16 %v401, %v400
        %v437 = vpack.c.b16 %v403, %v402
        %v438 = vpack.c.b16 %v405, %v404
        %v439 = vpack.c.b16 %v407, %v406
        %v488 = vunpack.c.l.b16 %v257
        %v489 = vunpack.c.l.b16 %v258
        %v490 = vunpack.c.l.b16 %v259
        %v491 = vunpack.c.l.b16 %v260
        %v492 = vunpack.c.l.b16 %v261
        %v493 = vunpack.c.l.b16 %v262
        %v494 = vunpack.c.l.b16 %v263
        %v495 = vunpack.c.l.b16 %v264
        %v496 = vunpack.c.l.b16 %v265
        %v497 = vunpack.c.l.b16 %v266
        %v498 = vunpack.c.l.b16 %v267
        %v499 = vunpack.c.l.b16 %v268
        %v500 = vunpack.c.l.b16 %v269
        %v501 = vunpack.c.l.b16 %v270
        %v502 = vunpack.c.l.b16 %v271
        %v503 = vunpack.c.l.b16 %v272
        %v504 = vpack.c.b16 %v489, %v488
        %v505 = vpack.c.b16 %v491, %v490
        %v506 = vpack.c.b16 %v493, %v492
        %v507 = vpack.c.b16 %v495, %v494
        %v508 = vpack.c.b16 %v497, %v496
        %v509 = vpack.c.b16 %v499, %v498
        %v510 = vpack.c.b16 %v501, %v500
        %v511 = vpack.c.b16 %v503, %v502
        %520 = vmatprep.subr.bf16.mxu0 0
        %521 = vmatpush1.bf16.msra.mxu0 %v504
        %522 = vmatprep.subr.bf16.mxu0 0
        %523 = vmatpush1.bf16.msra.mxu0 %v505
        %524 = vmatprep.subr.bf16.mxu0 0
        %525 = vmatpush1.bf16.msra.mxu0 %v506
        %526 = vmatprep.subr.bf16.mxu0 0
        %527 = vmatpush1.bf16.msra.mxu0 %v507
        %528 = vmatprep.subr.bf16.mxu0 0
        %529 = vmatpush1.bf16.msra.mxu0 %v508
        %530 = vmatprep.subr.bf16.mxu0 0
        %531 = vmatpush1.bf16.msra.mxu0 %v509
        %532 = vmatprep.subr.bf16.mxu0 0
        %533 = vmatpush1.bf16.msra.mxu0 %v510
        %534 = vmatprep.subr.bf16.mxu0 0
        %535 = vmatpush1.bf16.msra.mxu0 %v511
        %536 = vmatprep.subr.bf16.mxu0 0
        %537 = vmatpush1.bf16.msra.mxu0 0
        %538 = vmatprep.subr.bf16.mxu0 0
        %539 = vmatpush1.bf16.msra.mxu0 0
        %540 = vmatprep.subr.bf16.mxu0 0
        %541 = vmatpush1.bf16.msra.mxu0 0
        %542 = vmatprep.subr.bf16.mxu0 0
        %543 = vmatpush1.bf16.msra.mxu0 0
        %544 = vmatprep.subr.bf16.mxu0 0
        %545 = vmatpush1.bf16.msra.mxu0 0
        %546 = vmatprep.subr.bf16.mxu0 0
        %547 = vmatpush1.bf16.msra.mxu0 0
        %548 = vmatprep.subr.bf16.mxu0 0
        %549 = vmatpush1.bf16.msra.mxu0 0
        %550 = vmatprep.subr.bf16.mxu0 0
        %551 = vmatpush1.bf16.msra.mxu0 0
        %552 = vmatprep.mubr.bf16.mxu0 0
        %553 = vmatmul.mubr.bf16.gmra.mrb[0].mxu0 %v408
        %v554 = vpop.f32.mrb[0].mxu0
        %v555 = vadd.f32 %v278, %v554
        %v556 = vpop.f32.mrb[0].mxu0
        %v557 = vpop.f32.mrb[0].mxu0
        %v558 = vadd.f32 %v278, %v557
        %v559 = vpop.f32.mrb[0].mxu0
        %560 = vmatprep.mubr.bf16.mxu0 0
        %561 = vmatmul.mubr.bf16.gmra.mrb[0].mxu0 %v409
        %v562 = vpop.f32.mrb[0].mxu0
        %v563 = vadd.f32 %v278, %v562
        %v564 = vpop.f32.mrb[0].mxu0
        %v565 = vpop.f32.mrb[0].mxu0
        %v566 = vadd.f32 %v278, %v565
        %v567 = vpop.f32.mrb[0].mxu0
        %568 = vmatprep.mubr.bf16.mxu0 0
        %569 = vmatmul.mubr.bf16.gmra.mrb[0].mxu0 %v410
        %v570 = vpop.f32.mrb[0].mxu0
        %v571 = vadd.f32 %v278, %v570
        %v572 = vpop.f32.mrb[0].mxu0
        %v573 = vpop.f32.mrb[0].mxu0
        %v574 = vadd.f32 %v278, %v573
        %v575 = vpop.f32.mrb[0].mxu0
        %576 = vmatprep.mubr.bf16.mxu0 0
        %577 = vmatmul.mubr.bf16.gmra.mrb[0].mxu0 %v411
        %v578 = vpop.f32.mrb[0].mxu0
        %v579 = vadd.f32 %v278, %v578
        %v580 = vpop.f32.mrb[0].mxu0
        %v581 = vpop.f32.mrb[0].mxu0
        %v582 = vadd.f32 %v278, %v581
        %v583 = vpop.f32.mrb[0].mxu0
        %584 = vmatprep.mubr.bf16.mxu0 0
        %585 = vmatmul.mubr.bf16.gmra.mrb[0].mxu0 %v412
        %v586 = vpop.f32.mrb[0].mxu0
        %v587 = vadd.f32 %v278, %v586
        %v588 = vpop.f32.mrb[0].mxu0
        %v589 = vpop.f32.mrb[0].mxu0
        %v590 = vadd.f32 %v278, %v589
        %v591 = vpop.f32.mrb[0].mxu0
        %592 = vmatprep.mubr.bf16.mxu0 0
        %593 = vmatmul.mubr.bf16.gmra.mrb[0].mxu0 %v413
        %v594 = vpop.f32.mrb[0].mxu0
        %v595 = vadd.f32 %v278, %v594
        %v596 = vpop.f32.mrb[0].mxu0
        %v597 = vpop.f32.mrb[0].mxu0
        %v598 = vadd.f32 %v278, %v597
        %v599 = vpop.f32.mrb[0].mxu0
        %600 = vmatprep.mubr.bf16.mxu0 0
        %601 = vmatmul.mubr.bf16.gmra.mrb[0].mxu0 %v414
        %v602 = vpop.f32.mrb[0].mxu0
        %v603 = vadd.f32 %v278, %v602
        %v604 = vpop.f32.mrb[0].mxu0
        %v605 = vpop.f32.mrb[0].mxu0
        %v606 = vadd.f32 %v278, %v605
        %v607 = vpop.f32.mrb[0].mxu0
        %608 = vmatprep.mubr.bf16.mxu0 0
        %609 = vmatmul.mubr.bf16.gmra.mrb[0].mxu0 %v415
        %v610 = vpop.f32.mrb[0].mxu0
        %v611 = vadd.f32 %v278, %v610
        %v612 = vpop.f32.mrb[0].mxu0
        %v613 = vpop.f32.mrb[0].mxu0
        %v614 = vadd.f32 %v278, %v613
        %v615 = vpop.f32.mrb[0].mxu0
        %616 = vmatprep.mubr.bf16.mxu0 0
        %617 = vmatmul.mubr.bf16.gmra.mrb[0].mxu0 %v416
        %v618 = vpop.f32.mrb[0].mxu0
        %v619 = vadd.f32 %v278, %v618
        %v620 = vpop.f32.mrb[0].mxu0
        %v621 = vpop.f32.mrb[0].mxu0
        %v622 = vadd.f32 %v278, %v621
        %v623 = vpop.f32.mrb[0].mxu0
        %624 = vmatprep.mubr.bf16.mxu0 0
        %625 = vmatmul.mubr.bf16.gmra.mrb[0].mxu0 %v417
        %v626 = vpop.f32.mrb[0].mxu0
        %v627 = vadd.f32 %v278, %v626
        %v628 = vpop.f32.mrb[0].mxu0
        %v629 = vpop.f32.mrb[0].mxu0
        %v630 = vadd.f32 %v278, %v629
        %v631 = vpop.f32.mrb[0].mxu0
        %632 = vmatprep.mubr.bf16.mxu0 0
        %633 = vmatmul.mubr.bf16.gmra.mrb[0].mxu0 %v418
        %v634 = vpop.f32.mrb[0].mxu0
        %v635 = vadd.f32 %v278, %v634
        %v636 = vpop.f32.mrb[0].mxu0
        %v637 = vpop.f32.mrb[0].mxu0
        %v638 = vadd.f32 %v278, %v637
        %v639 = vpop.f32.mrb[0].mxu0
        %640 = vmatprep.mubr.bf16.mxu0 0
        %641 = vmatmul.mubr.bf16.gmra.mrb[0].mxu0 %v419
        %v642 = vpop.f32.mrb[0].mxu0
        %v643 = vadd.f32 %v278, %v642
        %v644 = vpop.f32.mrb[0].mxu0
        %v645 = vpop.f32.mrb[0].mxu0
        %v646 = vadd.f32 %v278, %v645
        %v647 = vpop.f32.mrb[0].mxu0
        %648 = vmatprep.mubr.bf16.mxu0 0
        %649 = vmatmul.mubr.bf16.gmra.mrb[0].mxu0 %v420
        %v650 = vpop.f32.mrb[0].mxu0
        %v651 = vadd.f32 %v278, %v650
        %v652 = vpop.f32.mrb[0].mxu0
        %v653 = vpop.f32.mrb[0].mxu0
        %v654 = vadd.f32 %v278, %v653
        %v655 = vpop.f32.mrb[0].mxu0
        %656 = vmatprep.mubr.bf16.mxu0 0
        %657 = vmatmul.mubr.bf16.gmra.mrb[0].mxu0 %v421
        %v658 = vpop.f32.mrb[0].mxu0
        %v659 = vadd.f32 %v278, %v658
        %v660 = vpop.f32.mrb[0].mxu0
        %v661 = vpop.f32.mrb[0].mxu0
        %v662 = vadd.f32 %v278, %v661
        %v663 = vpop.f32.mrb[0].mxu0
        %664 = vmatprep.mubr.bf16.mxu0 0
        %665 = vmatmul.mubr.bf16.gmra.mrb[0].mxu0 %v422
        %v666 = vpop.f32.mrb[0].mxu0
        %v667 = vadd.f32 %v278, %v666
        %v668 = vpop.f32.mrb[0].mxu0
        %v669 = vpop.f32.mrb[0].mxu0
        %v670 = vadd.f32 %v278, %v669
        %v671 = vpop.f32.mrb[0].mxu0
        %672 = vmatprep.mubr.bf16.mxu0 0
        %673 = vmatmul.mubr.bf16.gmra.mrb[0].mxu0 %v423
        %v674 = vpop.f32.mrb[0].mxu0
        %v675 = vadd.f32 %v278, %v674
        %v676 = vpop.f32.mrb[0].mxu0
        %v677 = vpop.f32.mrb[0].mxu0
        %v678 = vadd.f32 %v278, %v677
        %v679 = vpop.f32.mrb[0].mxu0
        %680 = vmatprep.mubr.bf16.mxu0 0
        %681 = vmatmul.mubr.bf16.gmra.mrb[0].mxu0 %v424
        %v682 = vpop.f32.mrb[0].mxu0
        %v683 = vadd.f32 %v278, %v682
        %v684 = vpop.f32.mrb[0].mxu0
        %v685 = vpop.f32.mrb[0].mxu0
        %v686 = vadd.f32 %v278, %v685
        %v687 = vpop.f32.mrb[0].mxu0
        %688 = vmatprep.mubr.bf16.mxu0 0
        %689 = vmatmul.mubr.bf16.gmra.mrb[0].mxu0 %v425
        %v690 = vpop.f32.mrb[0].mxu0
        %v691 = vadd.f32 %v278, %v690
        %v692 = vpop.f32.mrb[0].mxu0
        %v693 = vpop.f32.mrb[0].mxu0
        %v694 = vadd.f32 %v278, %v693
        %v695 = vpop.f32.mrb[0].mxu0
        %696 = vmatprep.mubr.bf16.mxu0 0
        %697 = vmatmul.mubr.bf16.gmra.mrb[0].mxu0 %v426
        %v698 = vpop.f32.mrb[0].mxu0
        %v699 = vadd.f32 %v278, %v698
        %v700 = vpop.f32.mrb[0].mxu0
        %v701 = vpop.f32.mrb[0].mxu0
        %v702 = vadd.f32 %v278, %v701
        %v703 = vpop.f32.mrb[0].mxu0
        %704 = vmatprep.mubr.bf16.mxu0 0
        %705 = vmatmul.mubr.bf16.gmra.mrb[0].mxu0 %v427
        %v706 = vpop.f32.mrb[0].mxu0
        %v707 = vadd.f32 %v278, %v706
        %v708 = vpop.f32.mrb[0].mxu0
        %v709 = vpop.f32.mrb[0].mxu0
        %v710 = vadd.f32 %v278, %v709
        %v711 = vpop.f32.mrb[0].mxu0
        %712 = vmatprep.mubr.bf16.mxu0 0
        %713 = vmatmul.mubr.bf16.gmra.mrb[0].mxu0 %v428
        %v714 = vpop.f32.mrb[0].mxu0
        %v715 = vadd.f32 %v278, %v714
        %v716 = vpop.f32.mrb[0].mxu0
        %v717 = vpop.f32.mrb[0].mxu0
        %v718 = vadd.f32 %v278, %v717
        %v719 = vpop.f32.mrb[0].mxu0
        %720 = vmatprep.mubr.bf16.mxu0 0
        %721 = vmatmul.mubr.bf16.gmra.mrb[0].mxu0 %v429
        %v722 = vpop.f32.mrb[0].mxu0
        %v723 = vadd.f32 %v278, %v722
        %v724 = vpop.f32.mrb[0].mxu0
        %v725 = vpop.f32.mrb[0].mxu0
        %v726 = vadd.f32 %v278, %v725
        %v727 = vpop.f32.mrb[0].mxu0
        %728 = vmatprep.mubr.bf16.mxu0 0
        %729 = vmatmul.mubr.bf16.gmra.mrb[0].mxu0 %v430
        %v730 = vpop.f32.mrb[0].mxu0
        %v731 = vadd.f32 %v278, %v730
        %v732 = vpop.f32.mrb[0].mxu0
        %v733 = vpop.f32.mrb[0].mxu0
        %v734 = vadd.f32 %v278, %v733
        %v735 = vpop.f32.mrb[0].mxu0
        %736 = vmatprep.mubr.bf16.mxu0 0
        %737 = vmatmul.mubr.bf16.gmra.mrb[0].mxu0 %v431
        %v738 = vpop.f32.mrb[0].mxu0
        %v739 = vadd.f32 %v278, %v738
        %v740 = vpop.f32.mrb[0].mxu0
        %v741 = vpop.f32.mrb[0].mxu0
        %v742 = vadd.f32 %v278, %v741
        %v743 = vpop.f32.mrb[0].mxu0
        %744 = vmatprep.mubr.bf16.mxu0 0
        %745 = vmatmul.mubr.bf16.gmra.mrb[0].mxu0 %v432
        %v746 = vpop.f32.mrb[0].mxu0
        %v747 = vadd.f32 %v278, %v746
        %v748 = vpop.f32.mrb[0].mxu0
        %v749 = vpop.f32.mrb[0].mxu0
        %v750 = vadd.f32 %v278, %v749
        %v751 = vpop.f32.mrb[0].mxu0
        %752 = vmatprep.mubr.bf16.mxu0 0
        %753 = vmatmul.mubr.bf16.gmra.mrb[0].mxu0 %v433
        %v754 = vpop.f32.mrb[0].mxu0
        %v755 = vadd.f32 %v278, %v754
        %v756 = vpop.f32.mrb[0].mxu0
        %v757 = vpop.f32.mrb[0].mxu0
        %v758 = vadd.f32 %v278, %v757
        %v759 = vpop.f32.mrb[0].mxu0
        %760 = vmatprep.mubr.bf16.mxu0 0
        %761 = vmatmul.mubr.bf16.gmra.mrb[0].mxu0 %v434
        %v762 = vpop.f32.mrb[0].mxu0
        %v763 = vadd.f32 %v278, %v762
        %v764 = vpop.f32.mrb[0].mxu0
        %v765 = vpop.f32.mrb[0].mxu0
        %v766 = vadd.f32 %v278, %v765
        %v767 = vpop.f32.mrb[0].mxu0
        %768 = vmatprep.mubr.bf16.mxu0 0
        %769 = vmatmul.mubr.bf16.gmra.mrb[0].mxu0 %v435
        %v770 = vpop.f32.mrb[0].mxu0
        %v771 = vadd.f32 %v278, %v770
        %v772 = vpop.f32.mrb[0].mxu0
        %v773 = vpop.f32.mrb[0].mxu0
        %v774 = vadd.f32 %v278, %v773
        %v775 = vpop.f32.mrb[0].mxu0
        %776 = vmatprep.mubr.bf16.mxu0 0
        %777 = vmatmul.mubr.bf16.gmra.mrb[0].mxu0 %v436
        %v778 = vpop.f32.mrb[0].mxu0
        %v779 = vadd.f32 %v278, %v778
        %v780 = vpop.f32.mrb[0].mxu0
        %v781 = vpop.f32.mrb[0].mxu0
        %v782 = vadd.f32 %v278, %v781
        %v783 = vpop.f32.mrb[0].mxu0
        %784 = vmatprep.mubr.bf16.mxu0 0
        %785 = vmatmul.mubr.bf16.gmra.mrb[0].mxu0 %v437
        %v786 = vpop.f32.mrb[0].mxu0
        %v787 = vadd.f32 %v278, %v786
        %v788 = vpop.f32.mrb[0].mxu0
        %v789 = vpop.f32.mrb[0].mxu0
        %v790 = vadd.f32 %v278, %v789
        %v791 = vpop.f32.mrb[0].mxu0
        %792 = vmatprep.mubr.bf16.mxu0 0
        %793 = vmatmul.mubr.bf16.gmra.mrb[0].mxu0 %v438
        %v794 = vpop.f32.mrb[0].mxu0
        %v795 = vadd.f32 %v278, %v794
        %v796 = vpop.f32.mrb[0].mxu0
        %v797 = vpop.f32.mrb[0].mxu0
        %v798 = vadd.f32 %v278, %v797
        %v799 = vpop.f32.mrb[0].mxu0
        %800 = vmatprep.mubr.bf16.mxu0 0
        %801 = vmatmul.mubr.bf16.gmra.mrb[0].mxu0 %v439
        %v802 = vpop.f32.mrb[0].mxu0
        %v803 = vadd.f32 %v278, %v802
        %v804 = vpop.f32.mrb[0].mxu0
        %v805 = vpop.f32.mrb[0].mxu0
        %v806 = vadd.f32 %v278, %v805
        %v807 = vpop.f32.mrb[0].mxu0
        %808 = vdwg.mxu0
        %v809 = vmax.f32 %v555, 0.0
        %v810 = vmax.f32 %v558, 0.0
        %v811 = vmax.f32 %v563, 0.0
        %v812 = vmax.f32 %v566, 0.0
        %v813 = vmax.f32 %v571, 0.0
        %v814 = vmax.f32 %v574, 0.0
        %v815 = vmax.f32 %v579, 0.0
        %v816 = vmax.f32 %v582, 0.0
        %v817 = vmax.f32 %v587, 0.0
        %v818 = vmax.f32 %v590, 0.0
        %v819 = vmax.f32 %v595, 0.0
        %v820 = vmax.f32 %v598, 0.0
        %v821 = vmax.f32 %v603, 0.0
        %v822 = vmax.f32 %v606, 0.0
        %v823 = vmax.f32 %v611, 0.0
        %v824 = vmax.f32 %v614, 0.0
        %v825 = vmax.f32 %v619, 0.0
        %v826 = vmax.f32 %v622, 0.0
        %v827 = vmax.f32 %v627, 0.0
        %v828 = vmax.f32 %v630, 0.0
        %v829 = vmax.f32 %v635, 0.0
        %v830 = vmax.f32 %v638, 0.0
        %v831 = vmax.f32 %v643, 0.0
        %v832 = vmax.f32 %v646, 0.0
        %v833 = vmax.f32 %v651, 0.0
        %v834 = vmax.f32 %v654, 0.0
        %v835 = vmax.f32 %v659, 0.0
        %v836 = vmax.f32 %v662, 0.0
        %v837 = vmax.f32 %v667, 0.0
        %v838 = vmax.f32 %v670, 0.0
        %v839 = vmax.f32 %v675, 0.0
        %v840 = vmax.f32 %v678, 0.0
        %v841 = vmax.f32 %v683, 0.0
        %v842 = vmax.f32 %v686, 0.0
        %v843 = vmax.f32 %v691, 0.0
        %v844 = vmax.f32 %v694, 0.0
        %v845 = vmax.f32 %v699, 0.0
        %v846 = vmax.f32 %v702, 0.0
        %v847 = vmax.f32 %v707, 0.0
        %v848 = vmax.f32 %v710, 0.0
        %v849 = vmax.f32 %v715, 0.0
        %v850 = vmax.f32 %v718, 0.0
        %v851 = vmax.f32 %v723, 0.0
        %v852 = vmax.f32 %v726, 0.0
        %v853 = vmax.f32 %v731, 0.0
        %v854 = vmax.f32 %v734, 0.0
        %v855 = vmax.f32 %v739, 0.0
        %v856 = vmax.f32 %v742, 0.0
        %v857 = vmax.f32 %v747, 0.0
        %v858 = vmax.f32 %v750, 0.0
        %v859 = vmax.f32 %v755, 0.0
        %v860 = vmax.f32 %v758, 0.0
        %v861 = vmax.f32 %v763, 0.0
        %v862 = vmax.f32 %v766, 0.0
        %v863 = vmax.f32 %v771, 0.0
        %v864 = vmax.f32 %v774, 0.0
        %v865 = vmax.f32 %v779, 0.0
        %v866 = vmax.f32 %v782, 0.0
        %v867 = vmax.f32 %v787, 0.0
        %v868 = vmax.f32 %v790, 0.0
        %v869 = vmax.f32 %v795, 0.0
        %v870 = vmax.f32 %v798, 0.0
        %v871 = vmax.f32 %v803, 0.0
        %v872 = vmax.f32 %v806, 0.0
        %v873 = vpack.c.bf16 %v810, %v809
        %v874 = vpack.c.bf16 %v812, %v811
        %v875 = vpack.c.bf16 %v814, %v813
        %v876 = vpack.c.bf16 %v816, %v815
        %v877 = vpack.c.bf16 %v818, %v817
        %v878 = vpack.c.bf16 %v820, %v819
        %v879 = vpack.c.bf16 %v822, %v821
        %v880 = vpack.c.bf16 %v824, %v823
        %v881 = vpack.c.bf16 %v826, %v825
        %v882 = vpack.c.bf16 %v828, %v827
        %v883 = vpack.c.bf16 %v830, %v829
        %v884 = vpack.c.bf16 %v832, %v831
        %v885 = vpack.c.bf16 %v834, %v833
        %v886 = vpack.c.bf16 %v836, %v835
        %v887 = vpack.c.bf16 %v838, %v837
        %v888 = vpack.c.bf16 %v840, %v839
        %v889 = vpack.c.bf16 %v842, %v841
        %v890 = vpack.c.bf16 %v844, %v843
        %v891 = vpack.c.bf16 %v846, %v845
        %v892 = vpack.c.bf16 %v848, %v847
        %v893 = vpack.c.bf16 %v850, %v849
        %v894 = vpack.c.bf16 %v852, %v851
        %v895 = vpack.c.bf16 %v854, %v853
        %v896 = vpack.c.bf16 %v856, %v855
        %v897 = vpack.c.bf16 %v858, %v857
        %v898 = vpack.c.bf16 %v860, %v859
        %v899 = vpack.c.bf16 %v862, %v861
        %v900 = vpack.c.bf16 %v864, %v863
        %v901 = vpack.c.bf16 %v866, %v865
        %v902 = vpack.c.bf16 %v868, %v867
        %v903 = vpack.c.bf16 %v870, %v869
        %v904 = vpack.c.bf16 %v872, %v871
        %v937 = vunpack.c.l.b16 %v873
        %v938 = vunpack.c.h.b16 %v873
        %v939 = vunpack.c.l.b16 %v874
        %v940 = vunpack.c.h.b16 %v874
        %v941 = vunpack.c.l.b16 %v875
        %v942 = vunpack.c.h.b16 %v875
        %v943 = vunpack.c.l.b16 %v876
        %v944 = vunpack.c.h.b16 %v876
        %v945 = vunpack.c.l.b16 %v877
        %v946 = vunpack.c.h.b16 %v877
        %v947 = vunpack.c.l.b16 %v878
        %v948 = vunpack.c.h.b16 %v878
        %v949 = vunpack.c.l.b16 %v879
        %v950 = vunpack.c.h.b16 %v879
        %v951 = vunpack.c.l.b16 %v880
        %v952 = vunpack.c.h.b16 %v880
        %v953 = vunpack.c.l.b16 %v881
        %v954 = vunpack.c.h.b16 %v881
        %v955 = vunpack.c.l.b16 %v882
        %v956 = vunpack.c.h.b16 %v882
        %v957 = vunpack.c.l.b16 %v883
        %v958 = vunpack.c.h.b16 %v883
        %v959 = vunpack.c.l.b16 %v884
        %v960 = vunpack.c.h.b16 %v884
        %v961 = vunpack.c.l.b16 %v885
        %v962 = vunpack.c.h.b16 %v885
        %v963 = vunpack.c.l.b16 %v886
        %v964 = vunpack.c.h.b16 %v886
        %v965 = vunpack.c.l.b16 %v887
        %v966 = vunpack.c.h.b16 %v887
        %v967 = vunpack.c.l.b16 %v888
        %v968 = vunpack.c.h.b16 %v888
        %v969 = vunpack.c.l.b16 %v889
        %v970 = vunpack.c.h.b16 %v889
        %v971 = vunpack.c.l.b16 %v890
        %v972 = vunpack.c.h.b16 %v890
        %v973 = vunpack.c.l.b16 %v891
        %v974 = vunpack.c.h.b16 %v891
        %v975 = vunpack.c.l.b16 %v892
        %v976 = vunpack.c.h.b16 %v892
        %v977 = vunpack.c.l.b16 %v893
        %v978 = vunpack.c.h.b16 %v893
        %v979 = vunpack.c.l.b16 %v894
        %v980 = vunpack.c.h.b16 %v894
        %v981 = vunpack.c.l.b16 %v895
        %v982 = vunpack.c.h.b16 %v895
        %v983 = vunpack.c.l.b16 %v896
        %v984 = vunpack.c.h.b16 %v896
        %v985 = vunpack.c.l.b16 %v897
        %v986 = vunpack.c.h.b16 %v897
        %v987 = vunpack.c.l.b16 %v898
        %v988 = vunpack.c.h.b16 %v898
        %v989 = vunpack.c.l.b16 %v899
        %v990 = vunpack.c.h.b16 %v899
        %v991 = vunpack.c.l.b16 %v900
        %v992 = vunpack.c.h.b16 %v900
        %v993 = vunpack.c.l.b16 %v901
        %v994 = vunpack.c.h.b16 %v901
        %v995 = vunpack.c.l.b16 %v902
        %v996 = vunpack.c.h.b16 %v902
        %v997 = vunpack.c.l.b16 %v903
        %v998 = vunpack.c.h.b16 %v903
        %v999 = vunpack.c.l.b16 %v904
        %v1000 = vunpack.c.h.b16 %v904
        %v1001 = vpack.c.b16 %v937, %v937
        %v1002 = vpack.c.b16 %v938, %v938
        %v1003 = vpack.c.b16 %v939, %v939
        %v1004 = vpack.c.b16 %v940, %v940
        %v1005 = vpack.c.b16 %v941, %v941
        %v1006 = vpack.c.b16 %v942, %v942
        %v1007 = vpack.c.b16 %v943, %v943
        %v1008 = vpack.c.b16 %v944, %v944
        %v1009 = vpack.c.b16 %v945, %v945
        %v1010 = vpack.c.b16 %v946, %v946
        %v1011 = vpack.c.b16 %v947, %v947
        %v1012 = vpack.c.b16 %v948, %v948
        %v1013 = vpack.c.b16 %v949, %v949
        %v1014 = vpack.c.b16 %v950, %v950
        %v1015 = vpack.c.b16 %v951, %v951
        %v1016 = vpack.c.b16 %v952, %v952
        %v1017 = vpack.c.b16 %v953, %v953
        %v1018 = vpack.c.b16 %v954, %v954
        %v1019 = vpack.c.b16 %v955, %v955
        %v1020 = vpack.c.b16 %v956, %v956
        %v1021 = vpack.c.b16 %v957, %v957
        %v1022 = vpack.c.b16 %v958, %v958
        %v1023 = vpack.c.b16 %v959, %v959
        %v1024 = vpack.c.b16 %v960, %v960
        %v1025 = vpack.c.b16 %v961, %v961
        %v1026 = vpack.c.b16 %v962, %v962
        %v1027 = vpack.c.b16 %v963, %v963
        %v1028 = vpack.c.b16 %v964, %v964
        %v1029 = vpack.c.b16 %v965, %v965
        %v1030 = vpack.c.b16 %v966, %v966
        %v1031 = vpack.c.b16 %v967, %v967
        %v1032 = vpack.c.b16 %v968, %v968
        %v1033 = vpack.c.b16 %v969, %v969
        %v1034 = vpack.c.b16 %v970, %v970
        %v1035 = vpack.c.b16 %v971, %v971
        %v1036 = vpack.c.b16 %v972, %v972
        %v1037 = vpack.c.b16 %v973, %v973
        %v1038 = vpack.c.b16 %v974, %v974
        %v1039 = vpack.c.b16 %v975, %v975
        %v1040 = vpack.c.b16 %v976, %v976
        %v1041 = vpack.c.b16 %v977, %v977
        %v1042 = vpack.c.b16 %v978, %v978
        %v1043 = vpack.c.b16 %v979, %v979
        %v1044 = vpack.c.b16 %v980, %v980
        %v1045 = vpack.c.b16 %v981, %v981
        %v1046 = vpack.c.b16 %v982, %v982
        %v1047 = vpack.c.b16 %v983, %v983
        %v1048 = vpack.c.b16 %v984, %v984
        %v1049 = vpack.c.b16 %v985, %v985
        %v1050 = vpack.c.b16 %v986, %v986
        %v1051 = vpack.c.b16 %v987, %v987
        %v1052 = vpack.c.b16 %v988, %v988
        %v1053 = vpack.c.b16 %v989, %v989
        %v1054 = vpack.c.b16 %v990, %v990
        %v1055 = vpack.c.b16 %v991, %v991
        %v1056 = vpack.c.b16 %v992, %v992
        %v1057 = vpack.c.b16 %v993, %v993
        %v1058 = vpack.c.b16 %v994, %v994
        %v1059 = vpack.c.b16 %v995, %v995
        %v1060 = vpack.c.b16 %v996, %v996
        %v1061 = vpack.c.b16 %v997, %v997
        %v1062 = vpack.c.b16 %v998, %v998
        %v1063 = vpack.c.b16 %v999, %v999
        %v1064 = vpack.c.b16 %v1000, %v1000
        %vm1129 = vcmask 125952
        %1130 = vst.msk [vmem:[%s172] sm:$0xf] %vm1129, %v1001
        %1131 = vst.msk [vmem:[%s172 + $0x4] sm:$0xf] %vm1129, %v1002
        %1132 = vst.msk [vmem:[%s172 + $0x8] sm:$0xf] %vm1129, %v1003
        %1133 = vst.msk [vmem:[%s172 + $0xc] sm:$0xf] %vm1129, %v1004
        %1134 = vst.msk [vmem:[%s172 + $0x10] sm:$0xf] %vm1129, %v1005
        %1135 = vst.msk [vmem:[%s172 + $0x14] sm:$0xf] %vm1129, %v1006
        %1136 = vst.msk [vmem:[%s172 + $0x18] sm:$0xf] %vm1129, %v1007
        %1137 = vst.msk [vmem:[%s172 + $0x1c] sm:$0xf] %vm1129, %v1008
        %1138 = vst.msk [vmem:[%s172 + $0x20] sm:$0xf] %vm1129, %v1009
        %1139 = vst.msk [vmem:[%s172 + $0x24] sm:$0xf] %vm1129, %v1010
        %1140 = vst.msk [vmem:[%s172 + $0x28] sm:$0xf] %vm1129, %v1011
        %1141 = vst.msk [vmem:[%s172 + $0x2c] sm:$0xf] %vm1129, %v1012
        %1142 = vst.msk [vmem:[%s172 + $0x30] sm:$0xf] %vm1129, %v1013
        %1143 = vst.msk [vmem:[%s172 + $0x34] sm:$0xf] %vm1129, %v1014
        %1144 = vst.msk [vmem:[%s172 + $0x38] sm:$0xf] %vm1129, %v1015
        %1145 = vst.msk [vmem:[%s172 + $0x3c] sm:$0xf] %vm1129, %v1016
        %1146 = vst.msk [vmem:[%s172 + $0x40] sm:$0xf] %vm1129, %v1017
        %1147 = vst.msk [vmem:[%s172 + $0x44] sm:$0xf] %vm1129, %v1018
        %1148 = vst.msk [vmem:[%s172 + $0x48] sm:$0xf] %vm1129, %v1019
        %1149 = vst.msk [vmem:[%s172 + $0x4c] sm:$0xf] %vm1129, %v1020
        %1150 = vst.msk [vmem:[%s172 + $0x50] sm:$0xf] %vm1129, %v1021
        %1151 = vst.msk [vmem:[%s172 + $0x54] sm:$0xf] %vm1129, %v1022
        %1152 = vst.msk [vmem:[%s172 + $0x58] sm:$0xf] %vm1129, %v1023
        %1153 = vst.msk [vmem:[%s172 + $0x5c] sm:$0xf] %vm1129, %v1024
        %1154 = vst.msk [vmem:[%s172 + $0x60] sm:$0xf] %vm1129, %v1025
        %1155 = vst.msk [vmem:[%s172 + $0x64] sm:$0xf] %vm1129, %v1026
        %1156 = vst.msk [vmem:[%s172 + $0x68] sm:$0xf] %vm1129, %v1027
        %1157 = vst.msk [vmem:[%s172 + $0x6c] sm:$0xf] %vm1129, %v1028
        %1158 = vst.msk [vmem:[%s172 + $0x70] sm:$0xf] %vm1129, %v1029
        %1159 = vst.msk [vmem:[%s172 + $0x74] sm:$0xf] %vm1129, %v1030
        %1160 = vst.msk [vmem:[%s172 + $0x78] sm:$0xf] %vm1129, %v1031
        %1161 = vst.msk [vmem:[%s172 + $0x7c] sm:$0xf] %vm1129, %v1032
        %1162 = vst.msk [vmem:[%s172 + $0x80] sm:$0xf] %vm1129, %v1033
        %1163 = vst.msk [vmem:[%s172 + $0x84] sm:$0xf] %vm1129, %v1034
        %1164 = vst.msk [vmem:[%s172 + $0x88] sm:$0xf] %vm1129, %v1035
        %1165 = vst.msk [vmem:[%s172 + $0x8c] sm:$0xf] %vm1129, %v1036
        %1166 = vst.msk [vmem:[%s172 + $0x90] sm:$0xf] %vm1129, %v1037
        %1167 = vst.msk [vmem:[%s172 + $0x94] sm:$0xf] %vm1129, %v1038
        %1168 = vst.msk [vmem:[%s172 + $0x98] sm:$0xf] %vm1129, %v1039
        %1169 = vst.msk [vmem:[%s172 + $0x9c] sm:$0xf] %vm1129, %v1040
        %1170 = vst.msk [vmem:[%s172 + $0xa0] sm:$0xf] %vm1129, %v1041
        %1171 = vst.msk [vmem:[%s172 + $0xa4] sm:$0xf] %vm1129, %v1042
        %1172 = vst.msk [vmem:[%s172 + $0xa8] sm:$0xf] %vm1129, %v1043
        %1173 = vst.msk [vmem:[%s172 + $0xac] sm:$0xf] %vm1129, %v1044
        %1174 = vst.msk [vmem:[%s172 + $0xb0] sm:$0xf] %vm1129, %v1045
        %1175 = vst.msk [vmem:[%s172 + $0xb4] sm:$0xf] %vm1129, %v1046
        %1176 = vst.msk [vmem:[%s172 + $0xb8] sm:$0xf] %vm1129, %v1047
        %1177 = vst.msk [vmem:[%s172 + $0xbc] sm:$0xf] %vm1129, %v1048
        %1178 = vst.msk [vmem:[%s172 + $0xc0] sm:$0xf] %vm1129, %v1049
        %1179 = vst.msk [vmem:[%s172 + $0xc4] sm:$0xf] %vm1129, %v1050
        %1180 = vst.msk [vmem:[%s172 + $0xc8] sm:$0xf] %vm1129, %v1051
        %1181 = vst.msk [vmem:[%s172 + $0xcc] sm:$0xf] %vm1129, %v1052
        %1182 = vst.msk [vmem:[%s172 + $0xd0] sm:$0xf] %vm1129, %v1053
        %1183 = vst.msk [vmem:[%s172 + $0xd4] sm:$0xf] %vm1129, %v1054
        %1184 = vst.msk [vmem:[%s172 + $0xd8] sm:$0xf] %vm1129, %v1055
        %1185 = vst.msk [vmem:[%s172 + $0xdc] sm:$0xf] %vm1129, %v1056
        %1186 = vst.msk [vmem:[%s172 + $0xe0] sm:$0xf] %vm1129, %v1057
        %1187 = vst.msk [vmem:[%s172 + $0xe4] sm:$0xf] %vm1129, %v1058
        %1188 = vst.msk [vmem:[%s172 + $0xe8] sm:$0xf] %vm1129, %v1059
        %1189 = vst.msk [vmem:[%s172 + $0xec] sm:$0xf] %vm1129, %v1060
        %1190 = vst.msk [vmem:[%s172 + $0xf0] sm:$0xf] %vm1129, %v1061
        %1191 = vst.msk [vmem:[%s172 + $0xf4] sm:$0xf] %vm1129, %v1062
        %1192 = vst.msk [vmem:[%s172 + $0xf8] sm:$0xf] %vm1129, %v1063
        %1193 = vst.msk [vmem:[%s172 + $0xfc] sm:$0xf] %vm1129, %v1064
        %s1194 = sand.u32 %s90, 1
        %s1195 = sand.u32 %s90, 1
        %s1196 = smul.addr %s1195, 256
        %s1197 = scalar_lea.vmem [#allocation2], %s1196
        // Predicated region
        $region33: #{encoder_forward.5} parent=31 // pred_check
          %p1198 = pneg %p100
        $region34: #{encoder_forward.5} parent=31 // pred_check_branch
          %1200 = sbr.rel (%p1198) target = $region36
        $region35: #{encoder_forward.5} parent=31 // pred_region
          %s1201 = smul.u32 64, %s14
          %s1202 = ssub.s32 98, %s1201
          %p1203 = scmp.lt.s32.totalorder %s1202, 64
          %s1204 = scalar_select %p1203, %s1202, 64
          %s1205 = smul.u32 64, %s1204
          %p1206 = scmp.ne.s32.totalorder 0, %s1205
          %s1207 = smul.addr %s1201, 4
          %s1208 = scalar_lea.vmem %s3, %s1207
          // Predicated region
          $region37: #{encoder_forward.5} parent=35 // pred_check
            %p1209 = pneg %p1206
          $region38: #{encoder_forward.5} parent=35 // pred_check_branch
            %1211 = sbr.rel (%p1209) target = $region40
          $region39: #{encoder_forward.5} parent=35 // pred_region
            // Predicated region
            $region41: #{encoder_forward.5} parent=39 // pred_check
              _
            $region42: #{encoder_forward.5} parent=39 // pred_check_branch
              %1213 = sbr.rel target = $region44
            $region43: #{encoder_forward.5} parent=39 // pred_region
              // Predicated region
              $region63: #{encoder_forward.5} parent=43 // pred_check
                _
              $region64: #{encoder_forward.5} parent=43 // pred_check_branch
                %1388 = sbr.rel (0) target = $region66
              $region65: #{encoder_forward.5} parent=43 // pred_region
                %s1390 = sshrl.u32 %s1204, 6
                // While loop
                $region67: #{encoder_forward.5} parent=65 // loop_pre_header
                  _
                $region68: #{encoder_forward.5} parent=65 // loop_header
                  %s1392 = sphi 0, %s1394
                  %p1393 = scmp.ge.s32.totalorder %s1392, %s1390
                  %s1397 = sphi 0, %s1530
                  %s1398 = sphi %s1197, %s1533
                  %s1399 = sphi %s1208, %s1534
                $region69: #{encoder_forward.5} parent=65 // loop_header_branch
                  %1396 = sbr.rel (%p1393) target = $region73
                $region70: #{encoder_forward.5} parent=65 // loop_body
                  %v1400 = vld [vmem:[%s1398] sm:$0xf]
                  %1401 = vst [vmem:[%s1399] sm:$0xf] %v1400
                  %v1402 = vld [vmem:[%s1398 + $0x4] sm:$0xf]
                  %1403 = vst [vmem:[%s1399 + $0x4] sm:$0xf] %v1402
                  %v1404 = vld [vmem:[%s1398 + $0x8] sm:$0xf]
                  %1405 = vst [vmem:[%s1399 + $0x8] sm:$0xf] %v1404
                  %v1406 = vld [vmem:[%s1398 + $0xc] sm:$0xf]
                  %1407 = vst [vmem:[%s1399 + $0xc] sm:$0xf] %v1406
                  %v1408 = vld [vmem:[%s1398 + $0x10] sm:$0xf]
                  %1409 = vst [vmem:[%s1399 + $0x10] sm:$0xf] %v1408
                  %v1410 = vld [vmem:[%s1398 + $0x14] sm:$0xf]
                  %1411 = vst [vmem:[%s1399 + $0x14] sm:$0xf] %v1410
                  %v1412 = vld [vmem:[%s1398 + $0x18] sm:$0xf]
                  %1413 = vst [vmem:[%s1399 + $0x18] sm:$0xf] %v1412
                  %v1414 = vld [vmem:[%s1398 + $0x1c] sm:$0xf]
                  %1415 = vst [vmem:[%s1399 + $0x1c] sm:$0xf] %v1414
                  %v1416 = vld [vmem:[%s1398 + $0x20] sm:$0xf]
                  %1417 = vst [vmem:[%s1399 + $0x20] sm:$0xf] %v1416
                  %v1418 = vld [vmem:[%s1398 + $0x24] sm:$0xf]
                  %1419 = vst [vmem:[%s1399 + $0x24] sm:$0xf] %v1418
                  %v1420 = vld [vmem:[%s1398 + $0x28] sm:$0xf]
                  %1421 = vst [vmem:[%s1399 + $0x28] sm:$0xf] %v1420
                  %v1422 = vld [vmem:[%s1398 + $0x2c] sm:$0xf]
                  %1423 = vst [vmem:[%s1399 + $0x2c] sm:$0xf] %v1422
                  %v1424 = vld [vmem:[%s1398 + $0x30] sm:$0xf]
                  %1425 = vst [vmem:[%s1399 + $0x30] sm:$0xf] %v1424
                  %v1426 = vld [vmem:[%s1398 + $0x34] sm:$0xf]
                  %1427 = vst [vmem:[%s1399 + $0x34] sm:$0xf] %v1426
                  %v1428 = vld [vmem:[%s1398 + $0x38] sm:$0xf]
                  %1429 = vst [vmem:[%s1399 + $0x38] sm:$0xf] %v1428
                  %v1430 = vld [vmem:[%s1398 + $0x3c] sm:$0xf]
                  %1431 = vst [vmem:[%s1399 + $0x3c] sm:$0xf] %v1430
                  %v1432 = vld [vmem:[%s1398 + $0x40] sm:$0xf]
                  %1433 = vst [vmem:[%s1399 + $0x40] sm:$0xf] %v1432
                  %v1434 = vld [vmem:[%s1398 + $0x44] sm:$0xf]
                  %1435 = vst [vmem:[%s1399 + $0x44] sm:$0xf] %v1434
                  %v1436 = vld [vmem:[%s1398 + $0x48] sm:$0xf]
                  %1437 = vst [vmem:[%s1399 + $0x48] sm:$0xf] %v1436
                  %v1438 = vld [vmem:[%s1398 + $0x4c] sm:$0xf]
                  %1439 = vst [vmem:[%s1399 + $0x4c] sm:$0xf] %v1438
                  %v1440 = vld [vmem:[%s1398 + $0x50] sm:$0xf]
                  %1441 = vst [vmem:[%s1399 + $0x50] sm:$0xf] %v1440
                  %v1442 = vld [vmem:[%s1398 + $0x54] sm:$0xf]
                  %1443 = vst [vmem:[%s1399 + $0x54] sm:$0xf] %v1442
                  %v1444 = vld [vmem:[%s1398 + $0x58] sm:$0xf]
                  %1445 = vst [vmem:[%s1399 + $0x58] sm:$0xf] %v1444
                  %v1446 = vld [vmem:[%s1398 + $0x5c] sm:$0xf]
                  %1447 = vst [vmem:[%s1399 + $0x5c] sm:$0xf] %v1446
                  %v1448 = vld [vmem:[%s1398 + $0x60] sm:$0xf]
                  %1449 = vst [vmem:[%s1399 + $0x60] sm:$0xf] %v1448
                  %v1450 = vld [vmem:[%s1398 + $0x64] sm:$0xf]
                  %1451 = vst [vmem:[%s1399 + $0x64] sm:$0xf] %v1450
                  %v1452 = vld [vmem:[%s1398 + $0x68] sm:$0xf]
                  %1453 = vst [vmem:[%s1399 + $0x68] sm:$0xf] %v1452
                  %v1454 = vld [vmem:[%s1398 + $0x6c] sm:$0xf]
                  %1455 = vst [vmem:[%s1399 + $0x6c] sm:$0xf] %v1454
                  %v1456 = vld [vmem:[%s1398 + $0x70] sm:$0xf]
                  %1457 = vst [vmem:[%s1399 + $0x70] sm:$0xf] %v1456
                  %v1458 = vld [vmem:[%s1398 + $0x74] sm:$0xf]
                  %1459 = vst [vmem:[%s1399 + $0x74] sm:$0xf] %v1458
                  %v1460 = vld [vmem:[%s1398 + $0x78] sm:$0xf]
                  %1461 = vst [vmem:[%s1399 + $0x78] sm:$0xf] %v1460
                  %v1462 = vld [vmem:[%s1398 + $0x7c] sm:$0xf]
                  %1463 = vst [vmem:[%s1399 + $0x7c] sm:$0xf] %v1462
                  %v1464 = vld [vmem:[%s1398 + $0x80] sm:$0xf]
                  %1465 = vst [vmem:[%s1399 + $0x80] sm:$0xf] %v1464
                  %v1466 = vld [vmem:[%s1398 + $0x84] sm:$0xf]
                  %1467 = vst [vmem:[%s1399 + $0x84] sm:$0xf] %v1466
                  %v1468 = vld [vmem:[%s1398 + $0x88] sm:$0xf]
                  %1469 = vst [vmem:[%s1399 + $0x88] sm:$0xf] %v1468
                  %v1470 = vld [vmem:[%s1398 + $0x8c] sm:$0xf]
                  %1471 = vst [vmem:[%s1399 + $0x8c] sm:$0xf] %v1470
                  %v1472 = vld [vmem:[%s1398 + $0x90] sm:$0xf]
                  %1473 = vst [vmem:[%s1399 + $0x90] sm:$0xf] %v1472
                  %v1474 = vld [vmem:[%s1398 + $0x94] sm:$0xf]
                  %1475 = vst [vmem:[%s1399 + $0x94] sm:$0xf] %v1474
                  %v1476 = vld [vmem:[%s1398 + $0x98] sm:$0xf]
                  %1477 = vst [vmem:[%s1399 + $0x98] sm:$0xf] %v1476
                  %v1478 = vld [vmem:[%s1398 + $0x9c] sm:$0xf]
                  %1479 = vst [vmem:[%s1399 + $0x9c] sm:$0xf] %v1478
                  %v1480 = vld [vmem:[%s1398 + $0xa0] sm:$0xf]
                  %1481 = vst [vmem:[%s1399 + $0xa0] sm:$0xf] %v1480
                  %v1482 = vld [vmem:[%s1398 + $0xa4] sm:$0xf]
                  %1483 = vst [vmem:[%s1399 + $0xa4] sm:$0xf] %v1482
                  %v1484 = vld [vmem:[%s1398 + $0xa8] sm:$0xf]
                  %1485 = vst [vmem:[%s1399 + $0xa8] sm:$0xf] %v1484
                  %v1486 = vld [vmem:[%s1398 + $0xac] sm:$0xf]
                  %1487 = vst [vmem:[%s1399 + $0xac] sm:$0xf] %v1486
                  %v1488 = vld [vmem:[%s1398 + $0xb0] sm:$0xf]
                  %1489 = vst [vmem:[%s1399 + $0xb0] sm:$0xf] %v1488
                  %v1490 = vld [vmem:[%s1398 + $0xb4] sm:$0xf]
                  %1491 = vst [vmem:[%s1399 + $0xb4] sm:$0xf] %v1490
                  %v1492 = vld [vmem:[%s1398 + $0xb8] sm:$0xf]
                  %1493 = vst [vmem:[%s1399 + $0xb8] sm:$0xf] %v1492
                  %v1494 = vld [vmem:[%s1398 + $0xbc] sm:$0xf]
                  %1495 = vst [vmem:[%s1399 + $0xbc] sm:$0xf] %v1494
                  %v1496 = vld [vmem:[%s1398 + $0xc0] sm:$0xf]
                  %1497 = vst [vmem:[%s1399 + $0xc0] sm:$0xf] %v1496
                  %v1498 = vld [vmem:[%s1398 + $0xc4] sm:$0xf]
                  %1499 = vst [vmem:[%s1399 + $0xc4] sm:$0xf] %v1498
                  %v1500 = vld [vmem:[%s1398 + $0xc8] sm:$0xf]
                  %1501 = vst [vmem:[%s1399 + $0xc8] sm:$0xf] %v1500
                  %v1502 = vld [vmem:[%s1398 + $0xcc] sm:$0xf]
                  %1503 = vst [vmem:[%s1399 + $0xcc] sm:$0xf] %v1502
                  %v1504 = vld [vmem:[%s1398 + $0xd0] sm:$0xf]
                  %1505 = vst [vmem:[%s1399 + $0xd0] sm:$0xf] %v1504
                  %v1506 = vld [vmem:[%s1398 + $0xd4] sm:$0xf]
                  %1507 = vst [vmem:[%s1399 + $0xd4] sm:$0xf] %v1506
                  %v1508 = vld [vmem:[%s1398 + $0xd8] sm:$0xf]
                  %1509 = vst [vmem:[%s1399 + $0xd8] sm:$0xf] %v1508
                  %v1510 = vld [vmem:[%s1398 + $0xdc] sm:$0xf]
                  %1511 = vst [vmem:[%s1399 + $0xdc] sm:$0xf] %v1510
                  %v1512 = vld [vmem:[%s1398 + $0xe0] sm:$0xf]
                  %1513 = vst [vmem:[%s1399 + $0xe0] sm:$0xf] %v1512
                  %v1514 = vld [vmem:[%s1398 + $0xe4] sm:$0xf]
                  %1515 = vst [vmem:[%s1399 + $0xe4] sm:$0xf] %v1514
                  %v1516 = vld [vmem:[%s1398 + $0xe8] sm:$0xf]
                  %1517 = vst [vmem:[%s1399 + $0xe8] sm:$0xf] %v1516
                  %v1518 = vld [vmem:[%s1398 + $0xec] sm:$0xf]
                  %1519 = vst [vmem:[%s1399 + $0xec] sm:$0xf] %v1518
                  %v1520 = vld [vmem:[%s1398 + $0xf0] sm:$0xf]
                  %1521 = vst [vmem:[%s1399 + $0xf0] sm:$0xf] %v1520
                  %v1522 = vld [vmem:[%s1398 + $0xf4] sm:$0xf]
                  %1523 = vst [vmem:[%s1399 + $0xf4] sm:$0xf] %v1522
                  %v1524 = vld [vmem:[%s1398 + $0xf8] sm:$0xf]
                  %1525 = vst [vmem:[%s1399 + $0xf8] sm:$0xf] %v1524
                  %v1526 = vld [vmem:[%s1398 + $0xfc] sm:$0xf]
                  %1527 = vst [vmem:[%s1399 + $0xfc] sm:$0xf] %v1526
                  %s1528 = sadd.s32 1, %s1397
                  %p1529 = scmp.ge.s32.totalorder %s1528, %s1390
                  %s1530 = scalar_select %p1529, 0, %s1528
                  %s1531 = smul.u32 %s1530, 256
                  %s1532 = smul.u32 %s1530, 256
                  %s1533 = scalar_lea.vmem %s1197, %s1531 [#allocation2]
                  %s1534 = scalar_lea.vmem %s1208, %s1532
                $region71: #{encoder_forward.5} parent=65 // loop_footer
                  %s1394 = sadd.s32 %s1392, 1
                $region72: #{encoder_forward.5} parent=65 // loop_footer_branch
                  %1391 = sbr.rel target = $region68
                $region73: #{encoder_forward.5} parent=65 // loop_exit
                  _
                %s1535 = sshrl.u32 %s1204, 6
                %s1536 = sand.u32 %s1204, 63
                %s1537 = smul.u32 %s1535, 64
                %s1538 = smul.u32 4, %s1537
                %s1539 = scalar_lea.vmem %s1197, %s1538 [#allocation2]
                %s1540 = smul.u32 4, %s1537
                %s1541 = scalar_lea.vmem %s1208, %s1540
                // While loop
                $region74: #{encoder_forward.5} parent=65 // loop_pre_header
                  _
                $region75: #{encoder_forward.5} parent=65 // loop_header
                  %s1543 = sphi 0, %s1545
                  %p1544 = scmp.ge.s32.totalorder %s1543, %s1536
                  %s1548 = sphi 0, %s1555
                  %s1549 = sphi %s1539, %s1558
                  %s1550 = sphi %s1541, %s1559
                $region76: #{encoder_forward.5} parent=65 // loop_header_branch
                  %1547 = sbr.rel (%p1544) target = $region80
                $region77: #{encoder_forward.5} parent=65 // loop_body
                  %v1551 = vld [vmem:[%s1549] sm:$0xf]
                  %1552 = vst [vmem:[%s1550] sm:$0xf] %v1551
                  %s1553 = sadd.s32 1, %s1548
                  %p1554 = scmp.ge.s32.totalorder %s1553, %s1536
                  %s1555 = scalar_select %p1554, 0, %s1553
                  %s1556 = smul.u32 %s1555, 4
                  %s1557 = smul.u32 %s1555, 4
                  %s1558 = scalar_lea.vmem %s1539, %s1556 [#allocation2]
                  %s1559 = scalar_lea.vmem %s1541, %s1557
                $region78: #{encoder_forward.5} parent=65 // loop_footer
                  %s1545 = sadd.s32 %s1543, 1
                $region79: #{encoder_forward.5} parent=65 // loop_footer_branch
                  %1542 = sbr.rel target = $region75
                $region80: #{encoder_forward.5} parent=65 // loop_exit
                  _
              $region66: #{encoder_forward.5} parent=43 // pred_fallthru
                _
            $region44: #{encoder_forward.5} parent=39 // pred_fallthru
              _
            // Predicated region
            $region45: #{encoder_forward.5} parent=39 // pred_check
              _
            $region46: #{encoder_forward.5} parent=39 // pred_check_branch
              %1215 = sbr.rel (0) target = $region48
            $region47: #{encoder_forward.5} parent=39 // pred_region
              %s1217 = sshrl.u32 %s1204, 6
              // While loop
              $region49: #{encoder_forward.5} parent=47 // loop_pre_header
                _
              $region50: #{encoder_forward.5} parent=47 // loop_header
                %s1219 = sphi 0, %s1221
                %p1220 = scmp.ge.s32.totalorder %s1219, %s1217
                %s1224 = sphi 0, %s1357
                %s1225 = sphi %s1197, %s1360
                %s1226 = sphi %s1208, %s1361
              $region51: #{encoder_forward.5} parent=47 // loop_header_branch
                %1223 = sbr.rel (%p1220) target = $region55
              $region52: #{encoder_forward.5} parent=47 // loop_body
                %v1227 = vld [vmem:[%s1225] sm:$0xf]
                %1228 = vst [vmem:[%s1226] sm:$0xf] %v1227
                %v1229 = vld [vmem:[%s1225 + $0x4] sm:$0xf]
                %1230 = vst [vmem:[%s1226 + $0x4] sm:$0xf] %v1229
                %v1231 = vld [vmem:[%s1225 + $0x8] sm:$0xf]
                %1232 = vst [vmem:[%s1226 + $0x8] sm:$0xf] %v1231
                %v1233 = vld [vmem:[%s1225 + $0xc] sm:$0xf]
                %1234 = vst [vmem:[%s1226 + $0xc] sm:$0xf] %v1233
                %v1235 = vld [vmem:[%s1225 + $0x10] sm:$0xf]
                %1236 = vst [vmem:[%s1226 + $0x10] sm:$0xf] %v1235
                %v1237 = vld [vmem:[%s1225 + $0x14] sm:$0xf]
                %1238 = vst [vmem:[%s1226 + $0x14] sm:$0xf] %v1237
                %v1239 = vld [vmem:[%s1225 + $0x18] sm:$0xf]
                %1240 = vst [vmem:[%s1226 + $0x18] sm:$0xf] %v1239
                %v1241 = vld [vmem:[%s1225 + $0x1c] sm:$0xf]
                %1242 = vst [vmem:[%s1226 + $0x1c] sm:$0xf] %v1241
                %v1243 = vld [vmem:[%s1225 + $0x20] sm:$0xf]
                %1244 = vst [vmem:[%s1226 + $0x20] sm:$0xf] %v1243
                %v1245 = vld [vmem:[%s1225 + $0x24] sm:$0xf]
                %1246 = vst [vmem:[%s1226 + $0x24] sm:$0xf] %v1245
                %v1247 = vld [vmem:[%s1225 + $0x28] sm:$0xf]
                %1248 = vst [vmem:[%s1226 + $0x28] sm:$0xf] %v1247
                %v1249 = vld [vmem:[%s1225 + $0x2c] sm:$0xf]
                %1250 = vst [vmem:[%s1226 + $0x2c] sm:$0xf] %v1249
                %v1251 = vld [vmem:[%s1225 + $0x30] sm:$0xf]
                %1252 = vst [vmem:[%s1226 + $0x30] sm:$0xf] %v1251
                %v1253 = vld [vmem:[%s1225 + $0x34] sm:$0xf]
                %1254 = vst [vmem:[%s1226 + $0x34] sm:$0xf] %v1253
                %v1255 = vld [vmem:[%s1225 + $0x38] sm:$0xf]
                %1256 = vst [vmem:[%s1226 + $0x38] sm:$0xf] %v1255
                %v1257 = vld [vmem:[%s1225 + $0x3c] sm:$0xf]
                %1258 = vst [vmem:[%s1226 + $0x3c] sm:$0xf] %v1257
                %v1259 = vld [vmem:[%s1225 + $0x40] sm:$0xf]
                %1260 = vst [vmem:[%s1226 + $0x40] sm:$0xf] %v1259
                %v1261 = vld [vmem:[%s1225 + $0x44] sm:$0xf]
                %1262 = vst [vmem:[%s1226 + $0x44] sm:$0xf] %v1261
                %v1263 = vld [vmem:[%s1225 + $0x48] sm:$0xf]
                %1264 = vst [vmem:[%s1226 + $0x48] sm:$0xf] %v1263
                %v1265 = vld [vmem:[%s1225 + $0x4c] sm:$0xf]
                %1266 = vst [vmem:[%s1226 + $0x4c] sm:$0xf] %v1265
                %v1267 = vld [vmem:[%s1225 + $0x50] sm:$0xf]
                %1268 = vst [vmem:[%s1226 + $0x50] sm:$0xf] %v1267
                %v1269 = vld [vmem:[%s1225 + $0x54] sm:$0xf]
                %1270 = vst [vmem:[%s1226 + $0x54] sm:$0xf] %v1269
                %v1271 = vld [vmem:[%s1225 + $0x58] sm:$0xf]
                %1272 = vst [vmem:[%s1226 + $0x58] sm:$0xf] %v1271
                %v1273 = vld [vmem:[%s1225 + $0x5c] sm:$0xf]
                %1274 = vst [vmem:[%s1226 + $0x5c] sm:$0xf] %v1273
                %v1275 = vld [vmem:[%s1225 + $0x60] sm:$0xf]
                %1276 = vst [vmem:[%s1226 + $0x60] sm:$0xf] %v1275
                %v1277 = vld [vmem:[%s1225 + $0x64] sm:$0xf]
                %1278 = vst [vmem:[%s1226 + $0x64] sm:$0xf] %v1277
                %v1279 = vld [vmem:[%s1225 + $0x68] sm:$0xf]
                %1280 = vst [vmem:[%s1226 + $0x68] sm:$0xf] %v1279
                %v1281 = vld [vmem:[%s1225 + $0x6c] sm:$0xf]
                %1282 = vst [vmem:[%s1226 + $0x6c] sm:$0xf] %v1281
                %v1283 = vld [vmem:[%s1225 + $0x70] sm:$0xf]
                %1284 = vst [vmem:[%s1226 + $0x70] sm:$0xf] %v1283
                %v1285 = vld [vmem:[%s1225 + $0x74] sm:$0xf]
                %1286 = vst [vmem:[%s1226 + $0x74] sm:$0xf] %v1285
                %v1287 = vld [vmem:[%s1225 + $0x78] sm:$0xf]
                %1288 = vst [vmem:[%s1226 + $0x78] sm:$0xf] %v1287
                %v1289 = vld [vmem:[%s1225 + $0x7c] sm:$0xf]
                %1290 = vst [vmem:[%s1226 + $0x7c] sm:$0xf] %v1289
                %v1291 = vld [vmem:[%s1225 + $0x80] sm:$0xf]
                %1292 = vst [vmem:[%s1226 + $0x80] sm:$0xf] %v1291
                %v1293 = vld [vmem:[%s1225 + $0x84] sm:$0xf]
                %1294 = vst [vmem:[%s1226 + $0x84] sm:$0xf] %v1293
                %v1295 = vld [vmem:[%s1225 + $0x88] sm:$0xf]
                %1296 = vst [vmem:[%s1226 + $0x88] sm:$0xf] %v1295
                %v1297 = vld [vmem:[%s1225 + $0x8c] sm:$0xf]
                %1298 = vst [vmem:[%s1226 + $0x8c] sm:$0xf] %v1297
                %v1299 = vld [vmem:[%s1225 + $0x90] sm:$0xf]
                %1300 = vst [vmem:[%s1226 + $0x90] sm:$0xf] %v1299
                %v1301 = vld [vmem:[%s1225 + $0x94] sm:$0xf]
                %1302 = vst [vmem:[%s1226 + $0x94] sm:$0xf] %v1301
                %v1303 = vld [vmem:[%s1225 + $0x98] sm:$0xf]
                %1304 = vst [vmem:[%s1226 + $0x98] sm:$0xf] %v1303
                %v1305 = vld [vmem:[%s1225 + $0x9c] sm:$0xf]
                %1306 = vst [vmem:[%s1226 + $0x9c] sm:$0xf] %v1305
                %v1307 = vld [vmem:[%s1225 + $0xa0] sm:$0xf]
                %1308 = vst [vmem:[%s1226 + $0xa0] sm:$0xf] %v1307
                %v1309 = vld [vmem:[%s1225 + $0xa4] sm:$0xf]
                %1310 = vst [vmem:[%s1226 + $0xa4] sm:$0xf] %v1309
                %v1311 = vld [vmem:[%s1225 + $0xa8] sm:$0xf]
                %1312 = vst [vmem:[%s1226 + $0xa8] sm:$0xf] %v1311
                %v1313 = vld [vmem:[%s1225 + $0xac] sm:$0xf]
                %1314 = vst [vmem:[%s1226 + $0xac] sm:$0xf] %v1313
                %v1315 = vld [vmem:[%s1225 + $0xb0] sm:$0xf]
                %1316 = vst [vmem:[%s1226 + $0xb0] sm:$0xf] %v1315
                %v1317 = vld [vmem:[%s1225 + $0xb4] sm:$0xf]
                %1318 = vst [vmem:[%s1226 + $0xb4] sm:$0xf] %v1317
                %v1319 = vld [vmem:[%s1225 + $0xb8] sm:$0xf]
                %1320 = vst [vmem:[%s1226 + $0xb8] sm:$0xf] %v1319
                %v1321 = vld [vmem:[%s1225 + $0xbc] sm:$0xf]
                %1322 = vst [vmem:[%s1226 + $0xbc] sm:$0xf] %v1321
                %v1323 = vld [vmem:[%s1225 + $0xc0] sm:$0xf]
                %1324 = vst [vmem:[%s1226 + $0xc0] sm:$0xf] %v1323
                %v1325 = vld [vmem:[%s1225 + $0xc4] sm:$0xf]
                %1326 = vst [vmem:[%s1226 + $0xc4] sm:$0xf] %v1325
                %v1327 = vld [vmem:[%s1225 + $0xc8] sm:$0xf]
                %1328 = vst [vmem:[%s1226 + $0xc8] sm:$0xf] %v1327
                %v1329 = vld [vmem:[%s1225 + $0xcc] sm:$0xf]
                %1330 = vst [vmem:[%s1226 + $0xcc] sm:$0xf] %v1329
                %v1331 = vld [vmem:[%s1225 + $0xd0] sm:$0xf]
                %1332 = vst [vmem:[%s1226 + $0xd0] sm:$0xf] %v1331
                %v1333 = vld [vmem:[%s1225 + $0xd4] sm:$0xf]
                %1334 = vst [vmem:[%s1226 + $0xd4] sm:$0xf] %v1333
                %v1335 = vld [vmem:[%s1225 + $0xd8] sm:$0xf]
                %1336 = vst [vmem:[%s1226 + $0xd8] sm:$0xf] %v1335
                %v1337 = vld [vmem:[%s1225 + $0xdc] sm:$0xf]
                %1338 = vst [vmem:[%s1226 + $0xdc] sm:$0xf] %v1337
                %v1339 = vld [vmem:[%s1225 + $0xe0] sm:$0xf]
                %1340 = vst [vmem:[%s1226 + $0xe0] sm:$0xf] %v1339
                %v1341 = vld [vmem:[%s1225 + $0xe4] sm:$0xf]
                %1342 = vst [vmem:[%s1226 + $0xe4] sm:$0xf] %v1341
                %v1343 = vld [vmem:[%s1225 + $0xe8] sm:$0xf]
                %1344 = vst [vmem:[%s1226 + $0xe8] sm:$0xf] %v1343
                %v1345 = vld [vmem:[%s1225 + $0xec] sm:$0xf]
                %1346 = vst [vmem:[%s1226 + $0xec] sm:$0xf] %v1345
                %v1347 = vld [vmem:[%s1225 + $0xf0] sm:$0xf]
                %1348 = vst [vmem:[%s1226 + $0xf0] sm:$0xf] %v1347
                %v1349 = vld [vmem:[%s1225 + $0xf4] sm:$0xf]
                %1350 = vst [vmem:[%s1226 + $0xf4] sm:$0xf] %v1349
                %v1351 = vld [vmem:[%s1225 + $0xf8] sm:$0xf]
                %1352 = vst [vmem:[%s1226 + $0xf8] sm:$0xf] %v1351
                %v1353 = vld [vmem:[%s1225 + $0xfc] sm:$0xf]
                %1354 = vst [vmem:[%s1226 + $0xfc] sm:$0xf] %v1353
                %s1355 = sadd.s32 1, %s1224
                %p1356 = scmp.ge.s32.totalorder %s1355, %s1217
                %s1357 = scalar_select %p1356, 0, %s1355
                %s1358 = smul.u32 %s1357, 256
                %s1359 = smul.u32 %s1357, 256
                %s1360 = scalar_lea.vmem %s1197, %s1358 [#allocation2]
                %s1361 = scalar_lea.vmem %s1208, %s1359
              $region53: #{encoder_forward.5} parent=47 // loop_footer
                %s1221 = sadd.s32 %s1219, 1
              $region54: #{encoder_forward.5} parent=47 // loop_footer_branch
                %1218 = sbr.rel target = $region50
              $region55: #{encoder_forward.5} parent=47 // loop_exit
                _
              %s1362 = sshrl.u32 %s1204, 6
              %s1363 = sand.u32 %s1204, 63
              %s1364 = smul.u32 %s1362, 64
              %s1365 = smul.u32 4, %s1364
              %s1366 = scalar_lea.vmem %s1197, %s1365 [#allocation2]
              %s1367 = smul.u32 4, %s1364
              %s1368 = scalar_lea.vmem %s1208, %s1367
              // While loop
              $region56: #{encoder_forward.5} parent=47 // loop_pre_header
                _
              $region57: #{encoder_forward.5} parent=47 // loop_header
                %s1370 = sphi 0, %s1372
                %p1371 = scmp.ge.s32.totalorder %s1370, %s1363
                %s1375 = sphi 0, %s1382
                %s1376 = sphi %s1366, %s1385
                %s1377 = sphi %s1368, %s1386
              $region58: #{encoder_forward.5} parent=47 // loop_header_branch
                %1374 = sbr.rel (%p1371) target = $region62
              $region59: #{encoder_forward.5} parent=47 // loop_body
                %v1378 = vld [vmem:[%s1376] sm:$0xf]
                %1379 = vst [vmem:[%s1377] sm:$0xf] %v1378
                %s1380 = sadd.s32 1, %s1375
                %p1381 = scmp.ge.s32.totalorder %s1380, %s1363
                %s1382 = scalar_select %p1381, 0, %s1380
                %s1383 = smul.u32 %s1382, 4
                %s1384 = smul.u32 %s1382, 4
                %s1385 = scalar_lea.vmem %s1366, %s1383 [#allocation2]
                %s1386 = scalar_lea.vmem %s1368, %s1384
              $region60: #{encoder_forward.5} parent=47 // loop_footer
                %s1372 = sadd.s32 %s1370, 1
              $region61: #{encoder_forward.5} parent=47 // loop_footer_branch
                %1369 = sbr.rel target = $region57
              $region62: #{encoder_forward.5} parent=47 // loop_exit
                _
            $region48: #{encoder_forward.5} parent=39 // pred_fallthru
              _
          $region40: #{encoder_forward.5} parent=35 // pred_fallthru
            _
          %1560 = vnop
        $region36: #{encoder_forward.5} parent=31 // pred_fallthru
          _
      $region32: #{encoder_forward.5} parent=5 // pred_fallthru
        _
      %p1561 = scmp.le.s32.totalorder 2, %s9
      // Predicated region
      $region81: #{encoder_forward.5} parent=5 // pred_check
        %p1562 = pneg %p1561
      $region82: #{encoder_forward.5} parent=5 // pred_check_branch
        %1564 = sbr.rel (%p1562) target = $region84
      $region83: #{encoder_forward.5} parent=5 // pred_region
        %s1565 = ssub.s32 %s9, 2
        // Predicated region
        $region85: #{encoder_forward.5} parent=83 // pred_check
          %p1566 = pneg %p106
        $region86: #{encoder_forward.5} parent=83 // pred_check_branch
          %1568 = sbr.rel (%p1566) target = $region88
        $region87: #{encoder_forward.5} parent=83 // pred_region
          %s1569 = sand.u32 %s91, 1
          %s1570 = sand.u32 %s91, 1
          %s1571 = smul.addr %s1570, 256
          %s1572 = scalar_lea.vmem [#allocation2], %s1571
        $region88: #{encoder_forward.5} parent=83 // pred_fallthru
          _
      $region84: #{encoder_forward.5} parent=5 // pred_fallthru
        _
    $region6: #{encoder_forward.5} parent=1 // loop_footer
      %s13 = sadd.s32 1, %s9
    $region7: #{encoder_forward.5} parent=1 // loop_footer_branch
      %8 = sbr.rel target = $region3
    $region8: #{encoder_forward.5} parent=1 // loop_exit
      _

// kernel: encoder_forward.6
$region0: #{encoder_forward.6}
  #allocation0 [shape = 'u32[]', space=smem, size = 0x4, offset = 0x4, fixed_abs, tag = 'smem constant byte address 0x4 - core index']
  #allocation1 [shape = 'u32[144,128]{1,0:T(1,128)}', space=vmem, size = 0x12000, scoped, tag = 'internal scratch']
  %s0 = inlined_call_operand.vmem [shape: bf16[144,256], index: 0, kind: input, shape index: {}]
  %s1 = inlined_call_operand.vmem [shape: bf16[256,32], index: 1, kind: input, shape index: {}]
  %s2 = inlined_call_operand.vmem [shape: f32[1,32], index: 2, kind: input, shape index: {}]
  %s3 = inlined_call_operand.vmem [shape: bf16[144,32], index: 3, kind: output, shape index: {}]
  %s4 = sld [smem:[#allocation0]]
  $region45: #{encoder_forward.6} parent=0
    _
  %s6 = ssub.s32 1, %s4
  %s7 = scalar_select 0, %s6, %s4
  loop: start=0, step=1, limit=4
  $region2: #{encoder_forward.6} parent=0 // loop_pre_header
    _
  $region3: #{encoder_forward.6} parent=0 // loop_header
    %s9 = sphi 0, %s13
    %p10 = scmp.ge.s32.totalorder %s9, 4
    %s19 = sphi 0, %s21
    %s22 = sphi 0, %s19
    %s23 = sphi 0, %s22
    %s39 = sphi 0, %s23
    %s43 = sphi 0, %s43
    %s45 = sphi 0, %s43
    %s46 = sphi 0, %s45
    %s60 = sphi 0, %s46
    %s64 = sphi 0, %s64
    %s66 = sphi 0, %s64
    %s67 = sphi 0, %s66
    %s81 = sphi 0, %s67
    %s87 = sphi 0, %s89
    %s90 = sphi 0, %s87
    %s91 = sphi 0, %s90
    %s107 = sphi 0, %s91
  $region4: #{encoder_forward.6} parent=0 // loop_header_branch
    %12 = sbr.rel (%p10) target = $region8
  $region5: #{encoder_forward.6} parent=0 // loop_body
    %s14 = ssub.s32 %s9, 1
    %s15 = ssub.s32 %s9, 2
    %s16 = sadd.s32 %s9, 1
    %s17 = ssub.s32 %s9, %s16
    %p18 = scmp.eq.s32.totalorder %s17, 0
    %s20 = sadd.s32 %s19, 1
    %s21 = scalar_select %p18, %s19, %s20
    %p24 = pneg %p18
    %p25 = scmp.eq.s32.totalorder %s9, 1
    %p26 = por %p24, %p25
    %p27 = scmp.ne.s32.totalorder %s19, %s22
    %p28 = scmp.eq.s32.totalorder %s9, 0
    %p29 = por %p27, %p28
    %p30 = scmp.ne.s32.totalorder %s19, %s22
    %p31 = scmp.eq.s32.totalorder %s14, 1
    %p32 = por %p30, %p31
    %p33 = scmp.ne.s32.totalorder %s22, %s23
    %p34 = scmp.eq.s32.totalorder %s14, 0
    %p35 = por %p33, %p34
    %p36 = scmp.ne.s32.totalorder %s22, %s23
    %p37 = scmp.eq.s32.totalorder %s15, 1
    %p38 = por %p36, %p37
    %p40 = scmp.ne.s32.totalorder %s23, %s39
    %p41 = scmp.eq.s32.totalorder %s15, 0
    %p42 = por %p40, %p41
    %s44 = sadd.s32 %s43, 1
    %p47 = scmp.eq.s32.totalorder %s9, 1
    %p48 = scmp.ne.s32.totalorder %s43, %s45
    %p49 = scmp.eq.s32.totalorder %s9, 0
    %p50 = por %p48, %p49
    %p51 = scmp.ne.s32.totalorder %s43, %s45
    %p52 = scmp.eq.s32.totalorder %s14, 1
    %p53 = por %p51, %p52
    %p54 = scmp.ne.s32.totalorder %s45, %s46
    %p55 = scmp.eq.s32.totalorder %s14, 0
    %p56 = por %p54, %p55
    %p57 = scmp.ne.s32.totalorder %s45, %s46
    %p58 = scmp.eq.s32.totalorder %s15, 1
    %p59 = por %p57, %p58
    %p61 = scmp.ne.s32.totalorder %s46, %s60
    %p62 = scmp.eq.s32.totalorder %s15, 0
    %p63 = por %p61, %p62
    %s65 = sadd.s32 %s64, 1
    %p68 = scmp.eq.s32.totalorder %s9, 1
    %p69 = scmp.ne.s32.totalorder %s64, %s66
    %p70 = scmp.eq.s32.totalorder %s9, 0
    %p71 = por %p69, %p70
    %p72 = scmp.ne.s32.totalorder %s64, %s66
    %p73 = scmp.eq.s32.totalorder %s14, 1
    %p74 = por %p72, %p73
    %p75 = scmp.ne.s32.totalorder %s66, %s67
    %p76 = scmp.eq.s32.totalorder %s14, 0
    %p77 = por %p75, %p76
    %p78 = scmp.ne.s32.totalorder %s66, %s67
    %p79 = scmp.eq.s32.totalorder %s15, 1
    %p80 = por %p78, %p79
    %p82 = scmp.ne.s32.totalorder %s67, %s81
    %p83 = scmp.eq.s32.totalorder %s15, 0
    %p84 = por %p82, %p83
    %s85 = ssub.s32 %s9, %s16
    %p86 = scmp.eq.s32.totalorder %s85, 0
    %s88 = sadd.s32 %s87, 1
    %s89 = scalar_select %p86, %s87, %s88
    %p92 = pneg %p86
    %p93 = scmp.eq.s32.totalorder %s9, 1
    %p94 = por %p92, %p93
    %p95 = scmp.ne.s32.totalorder %s87, %s90
    %p96 = scmp.eq.s32.totalorder %s9, 0
    %p97 = por %p95, %p96
    %p98 = scmp.ne.s32.totalorder %s87, %s90
    %p99 = scmp.eq.s32.totalorder %s14, 1
    %p100 = por %p98, %p99
    %p101 = scmp.ne.s32.totalorder %s90, %s91
    %p102 = scmp.eq.s32.totalorder %s14, 0
    %p103 = por %p101, %p102
    %p104 = scmp.ne.s32.totalorder %s90, %s91
    %p105 = scmp.eq.s32.totalorder %s15, 1
    %p106 = por %p104, %p105
    %p108 = scmp.ne.s32.totalorder %s91, %s107
    %p109 = scmp.eq.s32.totalorder %s15, 0
    %p110 = por %p108, %p109
    %p111 = scmp.le.s32.totalorder 1, %s9
    %p112 = scmp.lt.s32.totalorder %s9, 3
    %p113 = pnand %p111, %p112
    %p114 = pneg %p113
    // Predicated region
    $region9: #{encoder_forward.6} parent=5 // pred_check
      _
    $region10: #{encoder_forward.6} parent=5 // pred_check_branch
      %116 = sbr.rel (%p113) target = $region12
    $region11: #{encoder_forward.6} parent=5 // pred_region
      %s117 = ssub.s32 %s9, 1
      // Predicated region
      $region13: #{encoder_forward.6} parent=11 // pred_check
        %p118 = pneg %p56
      $region14: #{encoder_forward.6} parent=11 // pred_check_branch
        %120 = sbr.rel (%p118) target = $region16
      $region15: #{encoder_forward.6} parent=11 // pred_region
        _
      $region16: #{encoder_forward.6} parent=11 // pred_fallthru
        _
      // Predicated region
      $region17: #{encoder_forward.6} parent=11 // pred_check
        %p121 = pneg %p77
      $region18: #{encoder_forward.6} parent=11 // pred_check_branch
        %123 = sbr.rel (%p121) target = $region20
      $region19: #{encoder_forward.6} parent=11 // pred_region
        _
      $region20: #{encoder_forward.6} parent=11 // pred_fallthru
        _
    $region12: #{encoder_forward.6} parent=5 // pred_fallthru
      _
    %p124 = scmp.lt.s32.totalorder %s9, 2
    // Predicated region
    $region21: #{encoder_forward.6} parent=5 // pred_check
      %p125 = pneg %p124
    $region22: #{encoder_forward.6} parent=5 // pred_check_branch
      %127 = sbr.rel (%p125) target = $region24
    $region23: #{encoder_forward.6} parent=5 // pred_region
      // Predicated region
      $region25: #{encoder_forward.6} parent=23 // pred_check
        %p128 = pneg %p29
      $region26: #{encoder_forward.6} parent=23 // pred_check_branch
        %130 = sbr.rel (%p128) target = $region28
      $region27: #{encoder_forward.6} parent=23 // pred_region
        %s131 = smul.u32 9, %s9
        %p132 = scmp.lt.s32.totalorder %s131, 17
        %s133 = scalar_select %p132, %s131, 17
        %s134 = smul.addr %s133, 2
        %s135 = smul.addr %s134, 4
        %s136 = scalar_lea.vmem %s0, %s135
        %s137 = smul.u32 9, %s9
      $region28: #{encoder_forward.6} parent=23 // pred_fallthru
        _
    $region24: #{encoder_forward.6} parent=5 // pred_fallthru
      _
    %p138 = scmp.le.s32.totalorder 1, %s9
    %p139 = scmp.lt.s32.totalorder %s9, 3
    %p140 = pnand %p138, %p139
    %p141 = pneg %p140
    // Predicated region
    $region29: #{encoder_forward.6} parent=5 // pred_check
      _
    $region30: #{encoder_forward.6} parent=5 // pred_check_branch
      %143 = sbr.rel (%p140) target = $region32
    $region31: #{encoder_forward.6} parent=5 // pred_region
      %s144 = ssub.s32 %s9, 1
      %s145 = smul.u32 9, %s14
      %p146 = scmp.lt.s32.totalorder %s145, 17
      %s147 = scalar_select %p146, %s145, 17
      %s148 = smul.addr %s147, 2
      %s149 = smul.addr %s148, 4
      %s150 = scalar_lea.vmem %s0, %s149
      %p151 = pneg %p35
      %p152 = pneg %p32
      %p153 = pneg %p56
      %p154 = pneg %p53
      %p155 = pneg %p77
      %p156 = pneg %p74
      %p157 = pneg %p103
      %p158 = pneg %p100
      %s159 = smul.u32 9, %s14
      %p160 = scmp.lt.s32.totalorder %s159, 17
      %s161 = scalar_select %p160, %s159, 17
      %s162 = smul.addr %s161, 4
      %s163 = scalar_lea.vmem %s3, %s162
      %s164 = smul.u32 9, %s14
      %p165 = scmp.lt.s32.totalorder %s164, 17
      %s166 = scalar_select %p165, %s164, 17
      %s167 = smul.addr %s166, 2
      %s168 = smul.addr %s167, 4
      %s169 = scalar_lea.vmem %s0, %s168
      %s170 = smul.u32 9, %s14
      %s171 = smul.u32 9, %s14
      %p172 = scmp.lt.s32.totalorder %s171, 17
      %s173 = scalar_select %p172, %s171, 17
      %s174 = smul.addr %s173, 4
      %s175 = scalar_lea.vmem %s3, %s174
      %s176 = smul.u32 9, %s14
      %v178 = vld [vmem:[%s169] sm:$0xff]
      %v179 = vld [vmem:[%s169 + $0x8] sm:$0xff]
      %v180 = vld [vmem:[%s169 + $0x10] sm:$0xff]
      %v181 = vld [vmem:[%s169 + $0x18] sm:$0xff]
      %v182 = vld [vmem:[%s169 + $0x20] sm:$0xff]
      %v183 = vld [vmem:[%s169 + $0x28] sm:$0xff]
      %v184 = vld [vmem:[%s169 + $0x30] sm:$0xff]
      %v185 = vld [vmem:[%s169 + $0x38] sm:$0xff]
      %v186 = vld [vmem:[%s169 + $0x40] sm:$0xff]
      %v187 = vld [vmem:[%s1] sm:$0xf]
      %v188 = vld [vmem:[%s1 + $0x4] sm:$0xf]
      %v189 = vld [vmem:[%s1 + $0x8] sm:$0xf]
      %v190 = vld [vmem:[%s1 + $0xc] sm:$0xf]
      %v191 = vld [vmem:[%s1 + $0x10] sm:$0xf]
      %v192 = vld [vmem:[%s1 + $0x14] sm:$0xf]
      %v193 = vld [vmem:[%s1 + $0x18] sm:$0xf]
      %v194 = vld [vmem:[%s1 + $0x1c] sm:$0xf]
      %v195 = vld [vmem:[%s1 + $0x20] sm:$0xf]
      %v196 = vld [vmem:[%s1 + $0x24] sm:$0xf]
      %v197 = vld [vmem:[%s1 + $0x28] sm:$0xf]
      %v198 = vld [vmem:[%s1 + $0x2c] sm:$0xf]
      %v199 = vld [vmem:[%s1 + $0x30] sm:$0xf]
      %v200 = vld [vmem:[%s1 + $0x34] sm:$0xf]
      %v201 = vld [vmem:[%s1 + $0x38] sm:$0xf]
      %v202 = vld [vmem:[%s1 + $0x3c] sm:$0xf]
      %v203 = vld [vmem:[%s1 + $0x40] sm:$0xf]
      %v204 = vld [vmem:[%s1 + $0x44] sm:$0xf]
      %v205 = vld [vmem:[%s1 + $0x48] sm:$0xf]
      %v206 = vld [vmem:[%s1 + $0x4c] sm:$0xf]
      %v207 = vld [vmem:[%s1 + $0x50] sm:$0xf]
      %v208 = vld [vmem:[%s1 + $0x54] sm:$0xf]
      %v209 = vld [vmem:[%s1 + $0x58] sm:$0xf]
      %v210 = vld [vmem:[%s1 + $0x5c] sm:$0xf]
      %v211 = vld [vmem:[%s1 + $0x60] sm:$0xf]
      %v212 = vld [vmem:[%s1 + $0x64] sm:$0xf]
      %v213 = vld [vmem:[%s1 + $0x68] sm:$0xf]
      %v214 = vld [vmem:[%s1 + $0x6c] sm:$0xf]
      %v215 = vld [vmem:[%s1 + $0x70] sm:$0xf]
      %v216 = vld [vmem:[%s1 + $0x74] sm:$0xf]
      %v217 = vld [vmem:[%s1 + $0x78] sm:$0xf]
      %v218 = vld [vmem:[%s1 + $0x7c] sm:$0xf]
      %v219 = vld [vmem:[%s2] sm:$0x1]
      %v221 = vlaneseq
      %v222 = vshrl.u32 %v221, 7
      %v223 = vsub.s32 0, %v222
      %v224 = vrot.slane %v219, %v223
      %v235 = vunpack.c.l.b16 %v178
      %v236 = vunpack.c.h.b16 %v178
      %v237 = vunpack.c.l.b16 %v179
      %v238 = vunpack.c.h.b16 %v179
      %v239 = vunpack.c.l.b16 %v180
      %v240 = vunpack.c.h.b16 %v180
      %v241 = vunpack.c.l.b16 %v181
      %v242 = vunpack.c.h.b16 %v181
      %v243 = vunpack.c.l.b16 %v182
      %v244 = vunpack.c.h.b16 %v182
      %v245 = vunpack.c.l.b16 %v183
      %v246 = vunpack.c.h.b16 %v183
      %v247 = vunpack.c.l.b16 %v184
      %v248 = vunpack.c.h.b16 %v184
      %v249 = vunpack.c.l.b16 %v185
      %v250 = vunpack.c.h.b16 %v185
      %v251 = vunpack.c.l.b16 %v186
      %v252 = vunpack.c.h.b16 %v186
      %v253 = vpack.c.b16 %v237, %v235
      %v254 = vpack.c.b16 %v238, %v236
      %v255 = vpack.c.b16 %v241, %v239
      %v256 = vpack.c.b16 %v242, %v240
      %v257 = vpack.c.b16 %v245, %v243
      %v258 = vpack.c.b16 %v246, %v244
      %v259 = vpack.c.b16 %v249, %v247
      %v260 = vpack.c.b16 %v250, %v248
      %v261 = vpack.c.b16 %v251, %v251
      %v262 = vpack.c.b16 %v252, %v252
      %v305 = vunpack.c.l.b16 %v187
      %v306 = vunpack.c.l.b16 %v188
      %v307 = vunpack.c.l.b16 %v189
      %v308 = vunpack.c.l.b16 %v190
      %v309 = vunpack.c.l.b16 %v191
      %v310 = vunpack.c.l.b16 %v192
      %v311 = vunpack.c.l.b16 %v193
      %v312 = vunpack.c.l.b16 %v194
      %v313 = vunpack.c.l.b16 %v195
      %v314 = vunpack.c.l.b16 %v196
      %v315 = vunpack.c.l.b16 %v197
      %v316 = vunpack.c.l.b16 %v198
      %v317 = vunpack.c.l.b16 %v199
      %v318 = vunpack.c.l.b16 %v200
      %v319 = vunpack.c.l.b16 %v201
      %v320 = vunpack.c.l.b16 %v202
      %v321 = vunpack.c.l.b16 %v203
      %v322 = vunpack.c.l.b16 %v204
      %v323 = vunpack.c.l.b16 %v205
      %v324 = vunpack.c.l.b16 %v206
      %v325 = vunpack.c.l.b16 %v207
      %v326 = vunpack.c.l.b16 %v208
      %v327 = vunpack.c.l.b16 %v209
      %v328 = vunpack.c.l.b16 %v210
      %v329 = vunpack.c.l.b16 %v211
      %v330 = vunpack.c.l.b16 %v212
      %v331 = vunpack.c.l.b16 %v213
      %v332 = vunpack.c.l.b16 %v214
      %v333 = vunpack.c.l.b16 %v215
      %v334 = vunpack.c.l.b16 %v216
      %v335 = vunpack.c.l.b16 %v217
      %v336 = vunpack.c.l.b16 %v218
      %v337 = vpack.c.b16 %v306, %v305
      %v338 = vpack.c.b16 %v308, %v307
      %v339 = vpack.c.b16 %v310, %v309
      %v340 = vpack.c.b16 %v312, %v311
      %v341 = vpack.c.b16 %v314, %v313
      %v342 = vpack.c.b16 %v316, %v315
      %v343 = vpack.c.b16 %v318, %v317
      %v344 = vpack.c.b16 %v320, %v319
      %v345 = vpack.c.b16 %v322, %v321
      %v346 = vpack.c.b16 %v324, %v323
      %v347 = vpack.c.b16 %v326, %v325
      %v348 = vpack.c.b16 %v328, %v327
      %v349 = vpack.c.b16 %v330, %v329
      %v350 = vpack.c.b16 %v332, %v331
      %v351 = vpack.c.b16 %v334, %v333
      %v352 = vpack.c.b16 %v336, %v335
      %369 = vmatprep.subr.bf16.mxu0 0
      %370 = vmatpush1.bf16.msra.mxu0 %v337
      %371 = vmatprep.subr.bf16.mxu0 0
      %372 = vmatpush1.bf16.msra.mxu0 %v338
      %373 = vmatprep.subr.bf16.mxu0 0
      %374 = vmatpush1.bf16.msra.mxu0 %v339
      %375 = vmatprep.subr.bf16.mxu0 0
      %376 = vmatpush1.bf16.msra.mxu0 %v340
      %377 = vmatprep.subr.bf16.mxu0 0
      %378 = vmatpush1.bf16.msra.mxu0 %v341
      %379 = vmatprep.subr.bf16.mxu0 0
      %380 = vmatpush1.bf16.msra.mxu0 %v342
      %381 = vmatprep.subr.bf16.mxu0 0
      %382 = vmatpush1.bf16.msra.mxu0 %v343
      %383 = vmatprep.subr.bf16.mxu0 0
      %384 = vmatpush1.bf16.msra.mxu0 %v344
      %385 = vmatprep.subr.bf16.mxu0 0
      %386 = vmatpush1.bf16.msra.mxu0 %v345
      %387 = vmatprep.subr.bf16.mxu0 0
      %388 = vmatpush1.bf16.msra.mxu0 %v346
      %389 = vmatprep.subr.bf16.mxu0 0
      %390 = vmatpush1.bf16.msra.mxu0 %v347
      %391 = vmatprep.subr.bf16.mxu0 0
      %392 = vmatpush1.bf16.msra.mxu0 %v348
      %393 = vmatprep.subr.bf16.mxu0 0
      %394 = vmatpush1.bf16.msra.mxu0 %v349
      %395 = vmatprep.subr.bf16.mxu0 0
      %396 = vmatpush1.bf16.msra.mxu0 %v350
      %397 = vmatprep.subr.bf16.mxu0 0
      %398 = vmatpush1.bf16.msra.mxu0 %v351
      %399 = vmatprep.subr.bf16.mxu0 0
      %400 = vmatpush1.bf16.msra.mxu0 %v352
      %401 = vmatprep.mubr.bf16.mxu0 %v254
      %402 = vmatmul.mubr.bf16.gmra.mrb[0].mxu0 %v253
      %v403 = vpop.f32.mrb[0].mxu0
      %v404 = vadd.f32 %v224, %v403
      %v405 = vpop.f32.mrb[0].mxu0
      %v406 = vpop.f32.mrb[0].mxu0
      %v407 = vadd.f32 %v224, %v406
      %v408 = vpop.f32.mrb[0].mxu0
      %409 = vmatprep.mubr.bf16.mxu0 %v256
      %410 = vmatmul.mubr.bf16.gmra.mrb[0].mxu0 %v255
      %v411 = vpop.f32.mrb[0].mxu0
      %v412 = vadd.f32 %v224, %v411
      %v413 = vpop.f32.mrb[0].mxu0
      %v414 = vpop.f32.mrb[0].mxu0
      %v415 = vadd.f32 %v224, %v414
      %v416 = vpop.f32.mrb[0].mxu0
      %417 = vmatprep.mubr.bf16.mxu0 %v258
      %418 = vmatmul.mubr.bf16.gmra.mrb[0].mxu0 %v257
      %v419 = vpop.f32.mrb[0].mxu0
      %v420 = vadd.f32 %v224, %v419
      %v421 = vpop.f32.mrb[0].mxu0
      %v422 = vpop.f32.mrb[0].mxu0
      %v423 = vadd.f32 %v224, %v422
      %v424 = vpop.f32.mrb[0].mxu0
      %425 = vmatprep.mubr.bf16.mxu0 %v260
      %426 = vmatmul.mubr.bf16.gmra.mrb[0].mxu0 %v259
      %v427 = vpop.f32.mrb[0].mxu0
      %v428 = vadd.f32 %v224, %v427
      %v429 = vpop.f32.mrb[0].mxu0
      %v430 = vpop.f32.mrb[0].mxu0
      %v431 = vadd.f32 %v224, %v430
      %v432 = vpop.f32.mrb[0].mxu0
      %433 = vmatprep.mubr.bf16.mxu0 %v262
      %434 = vmatmul.mubr.bf16.gmra.mrb[0].mxu0 %v261
      %v435 = vpop.f32.mrb[0].mxu0
      %v436 = vadd.f32 %v224, %v435
      %v437 = vpop.f32.mrb[0].mxu0
      %v438 = vpop.f32.mrb[0].mxu0
      %v439 = vpop.f32.mrb[0].mxu0
      %440 = vdwg.mxu0
      %v441 = vmax.f32 %v404, 0.0
      %v442 = vmax.f32 %v407, 0.0
      %v443 = vmax.f32 %v412, 0.0
      %v444 = vmax.f32 %v415, 0.0
      %v445 = vmax.f32 %v420, 0.0
      %v446 = vmax.f32 %v423, 0.0
      %v447 = vmax.f32 %v428, 0.0
      %v448 = vmax.f32 %v431, 0.0
      %v449 = vmax.f32 %v436, 0.0
      %v450 = vpack.c.bf16 %v442, %v441
      %v451 = vpack.c.bf16 %v444, %v443
      %v452 = vpack.c.bf16 %v446, %v445
      %v453 = vpack.c.bf16 %v448, %v447
      %v454 = vpack.c.bf16 %v449, %v449
      %v460 = vunpack.c.l.b16 %v450
      %v461 = vunpack.c.h.b16 %v450
      %v462 = vunpack.c.l.b16 %v451
      %v463 = vunpack.c.h.b16 %v451
      %v464 = vunpack.c.l.b16 %v452
      %v465 = vunpack.c.h.b16 %v452
      %v466 = vunpack.c.l.b16 %v453
      %v467 = vunpack.c.h.b16 %v453
      %v468 = vunpack.c.l.b16 %v454
      %v469 = vpack.c.b16 %v460, %v460
      %v470 = vpack.c.b16 %v461, %v461
      %v471 = vpack.c.b16 %v462, %v462
      %v472 = vpack.c.b16 %v463, %v463
      %v473 = vpack.c.b16 %v464, %v464
      %v474 = vpack.c.b16 %v465, %v465
      %v475 = vpack.c.b16 %v466, %v466
      %v476 = vpack.c.b16 %v467, %v467
      %v477 = vpack.c.b16 %v468, %v468
      %vm487 = vcmask 257024
      %488 = vst.msk [vmem:[%s175] sm:$0xf] %vm487, %v469
      %489 = vst.msk [vmem:[%s175 + $0x4] sm:$0xf] %vm487, %v470
      %490 = vst.msk [vmem:[%s175 + $0x8] sm:$0xf] %vm487, %v471
      %491 = vst.msk [vmem:[%s175 + $0xc] sm:$0xf] %vm487, %v472
      %492 = vst.msk [vmem:[%s175 + $0x10] sm:$0xf] %vm487, %v473
      %493 = vst.msk [vmem:[%s175 + $0x14] sm:$0xf] %vm487, %v474
      %494 = vst.msk [vmem:[%s175 + $0x18] sm:$0xf] %vm487, %v475
      %495 = vst.msk [vmem:[%s175 + $0x1c] sm:$0xf] %vm487, %v476
      %496 = vst.msk [vmem:[%s175 + $0x20] sm:$0xf] %vm487, %v477
      %s497 = smul.u32 9, %s14
      %p498 = scmp.lt.s32.totalorder %s497, 17
      %s499 = scalar_select %p498, %s497, 17
      %s500 = smul.addr %s499, 4
      %s501 = scalar_lea.vmem %s3, %s500
      // Predicated region
      $region33: #{encoder_forward.6} parent=31 // pred_check
        %p502 = pneg %p100
      $region34: #{encoder_forward.6} parent=31 // pred_check_branch
        %504 = sbr.rel (%p502) target = $region36
      $region35: #{encoder_forward.6} parent=31 // pred_region
        %s505 = smul.u32 9, %s14
      $region36: #{encoder_forward.6} parent=31 // pred_fallthru
        _
    $region32: #{encoder_forward.6} parent=5 // pred_fallthru
      _
    %p506 = scmp.le.s32.totalorder 2, %s9
    // Predicated region
    $region37: #{encoder_forward.6} parent=5 // pred_check
      %p507 = pneg %p506
    $region38: #{encoder_forward.6} parent=5 // pred_check_branch
      %509 = sbr.rel (%p507) target = $region40
    $region39: #{encoder_forward.6} parent=5 // pred_region
      %s510 = ssub.s32 %s9, 2
      // Predicated region
      $region41: #{encoder_forward.6} parent=39 // pred_check
        %p511 = pneg %p106
      $region42: #{encoder_forward.6} parent=39 // pred_check_branch
        %513 = sbr.rel (%p511) target = $region44
      $region43: #{encoder_forward.6} parent=39 // pred_region
        %s514 = smul.u32 9, %s15
        %p515 = scmp.lt.s32.totalorder %s514, 17
        %s516 = scalar_select %p515, %s514, 17
        %s517 = smul.addr %s516, 4
        %s518 = scalar_lea.vmem %s3, %s517
      $region44: #{encoder_forward.6} parent=39 // pred_fallthru
        _
    $region40: #{encoder_forward.6} parent=5 // pred_fallthru
      _
  $region6: #{encoder_forward.6} parent=0 // loop_footer
    %s13 = sadd.s32 1, %s9
  $region7: #{encoder_forward.6} parent=0 // loop_footer_branch
    %8 = sbr.rel target = $region3
  $region8: #{encoder_forward.6} parent=0 // loop_exit
    _

// kernel: encoder_forward.7
$region0: #{encoder_forward.7}
  #allocation0 [shape = 'u32[]', space=smem, size = 0x4, offset = 0x4, fixed_abs, tag = 'smem constant byte address 0x4 - core index']
  #allocation1 [shape = 'u32[144,128]{1,0:T(1,128)}', space=vmem, size = 0x12000, scoped, tag = 'internal scratch']
  %s0 = inlined_call_operand.vmem [shape: bf16[16,512], index: 0, kind: input, shape index: {}]
  %s1 = inlined_call_operand.vmem [shape: bf16[512,64], index: 1, kind: input, shape index: {}]
  %s2 = inlined_call_operand.vmem [shape: f32[1,64], index: 2, kind: input, shape index: {}]
  %s3 = inlined_call_operand.vmem [shape: bf16[16,64], index: 3, kind: output, shape index: {}]
  %s4 = sld [smem:[#allocation0]]
  $region45: #{encoder_forward.7} parent=0
    _
  %s6 = ssub.s32 1, %s4
  %s7 = scalar_select 0, %s6, %s4
  loop: start=0, step=1, limit=4
  $region2: #{encoder_forward.7} parent=0 // loop_pre_header
    _
  $region3: #{encoder_forward.7} parent=0 // loop_header
    %s9 = sphi 0, %s13
    %p10 = scmp.ge.s32.totalorder %s9, 4
    %s19 = sphi 0, %s21
    %s22 = sphi 0, %s19
    %s23 = sphi 0, %s22
    %s39 = sphi 0, %s23
    %s43 = sphi 0, %s43
    %s45 = sphi 0, %s43
    %s46 = sphi 0, %s45
    %s60 = sphi 0, %s46
    %s64 = sphi 0, %s64
    %s66 = sphi 0, %s64
    %s67 = sphi 0, %s66
    %s81 = sphi 0, %s67
    %s87 = sphi 0, %s89
    %s90 = sphi 0, %s87
    %s91 = sphi 0, %s90
    %s107 = sphi 0, %s91
  $region4: #{encoder_forward.7} parent=0 // loop_header_branch
    %12 = sbr.rel (%p10) target = $region8
  $region5: #{encoder_forward.7} parent=0 // loop_body
    %s14 = ssub.s32 %s9, 1
    %s15 = ssub.s32 %s9, 2
    %s16 = sadd.s32 %s9, 1
    %s17 = ssub.s32 %s9, %s16
    %p18 = scmp.eq.s32.totalorder %s17, 0
    %s20 = sadd.s32 %s19, 1
    %s21 = scalar_select %p18, %s19, %s20
    %p24 = pneg %p18
    %p25 = scmp.eq.s32.totalorder %s9, 1
    %p26 = por %p24, %p25
    %p27 = scmp.ne.s32.totalorder %s19, %s22
    %p28 = scmp.eq.s32.totalorder %s9, 0
    %p29 = por %p27, %p28
    %p30 = scmp.ne.s32.totalorder %s19, %s22
    %p31 = scmp.eq.s32.totalorder %s14, 1
    %p32 = por %p30, %p31
    %p33 = scmp.ne.s32.totalorder %s22, %s23
    %p34 = scmp.eq.s32.totalorder %s14, 0
    %p35 = por %p33, %p34
    %p36 = scmp.ne.s32.totalorder %s22, %s23
    %p37 = scmp.eq.s32.totalorder %s15, 1
    %p38 = por %p36, %p37
    %p40 = scmp.ne.s32.totalorder %s23, %s39
    %p41 = scmp.eq.s32.totalorder %s15, 0
    %p42 = por %p40, %p41
    %s44 = sadd.s32 %s43, 1
    %p47 = scmp.eq.s32.totalorder %s9, 1
    %p48 = scmp.ne.s32.totalorder %s43, %s45
    %p49 = scmp.eq.s32.totalorder %s9, 0
    %p50 = por %p48, %p49
    %p51 = scmp.ne.s32.totalorder %s43, %s45
    %p52 = scmp.eq.s32.totalorder %s14, 1
    %p53 = por %p51, %p52
    %p54 = scmp.ne.s32.totalorder %s45, %s46
    %p55 = scmp.eq.s32.totalorder %s14, 0
    %p56 = por %p54, %p55
    %p57 = scmp.ne.s32.totalorder %s45, %s46
    %p58 = scmp.eq.s32.totalorder %s15, 1
    %p59 = por %p57, %p58
    %p61 = scmp.ne.s32.totalorder %s46, %s60
    %p62 = scmp.eq.s32.totalorder %s15, 0
    %p63 = por %p61, %p62
    %s65 = sadd.s32 %s64, 1
    %p68 = scmp.eq.s32.totalorder %s9, 1
    %p69 = scmp.ne.s32.totalorder %s64, %s66
    %p70 = scmp.eq.s32.totalorder %s9, 0
    %p71 = por %p69, %p70
    %p72 = scmp.ne.s32.totalorder %s64, %s66
    %p73 = scmp.eq.s32.totalorder %s14, 1
    %p74 = por %p72, %p73
    %p75 = scmp.ne.s32.totalorder %s66, %s67
    %p76 = scmp.eq.s32.totalorder %s14, 0
    %p77 = por %p75, %p76
    %p78 = scmp.ne.s32.totalorder %s66, %s67
    %p79 = scmp.eq.s32.totalorder %s15, 1
    %p80 = por %p78, %p79
    %p82 = scmp.ne.s32.totalorder %s67, %s81
    %p83 = scmp.eq.s32.totalorder %s15, 0
    %p84 = por %p82, %p83
    %s85 = ssub.s32 %s9, %s16
    %p86 = scmp.eq.s32.totalorder %s85, 0
    %s88 = sadd.s32 %s87, 1
    %s89 = scalar_select %p86, %s87, %s88
    %p92 = pneg %p86
    %p93 = scmp.eq.s32.totalorder %s9, 1
    %p94 = por %p92, %p93
    %p95 = scmp.ne.s32.totalorder %s87, %s90
    %p96 = scmp.eq.s32.totalorder %s9, 0
    %p97 = por %p95, %p96
    %p98 = scmp.ne.s32.totalorder %s87, %s90
    %p99 = scmp.eq.s32.totalorder %s14, 1
    %p100 = por %p98, %p99
    %p101 = scmp.ne.s32.totalorder %s90, %s91
    %p102 = scmp.eq.s32.totalorder %s14, 0
    %p103 = por %p101, %p102
    %p104 = scmp.ne.s32.totalorder %s90, %s91
    %p105 = scmp.eq.s32.totalorder %s15, 1
    %p106 = por %p104, %p105
    %p108 = scmp.ne.s32.totalorder %s91, %s107
    %p109 = scmp.eq.s32.totalorder %s15, 0
    %p110 = por %p108, %p109
    %p111 = scmp.le.s32.totalorder 1, %s9
    %p112 = scmp.lt.s32.totalorder %s9, 3
    %p113 = pnand %p111, %p112
    %p114 = pneg %p113
    // Predicated region
    $region9: #{encoder_forward.7} parent=5 // pred_check
      _
    $region10: #{encoder_forward.7} parent=5 // pred_check_branch
      %116 = sbr.rel (%p113) target = $region12
    $region11: #{encoder_forward.7} parent=5 // pred_region
      %s117 = ssub.s32 %s9, 1
      // Predicated region
      $region13: #{encoder_forward.7} parent=11 // pred_check
        %p118 = pneg %p56
      $region14: #{encoder_forward.7} parent=11 // pred_check_branch
        %120 = sbr.rel (%p118) target = $region16
      $region15: #{encoder_forward.7} parent=11 // pred_region
        _
      $region16: #{encoder_forward.7} parent=11 // pred_fallthru
        _
      // Predicated region
      $region17: #{encoder_forward.7} parent=11 // pred_check
        %p121 = pneg %p77
      $region18: #{encoder_forward.7} parent=11 // pred_check_branch
        %123 = sbr.rel (%p121) target = $region20
      $region19: #{encoder_forward.7} parent=11 // pred_region
        _
      $region20: #{encoder_forward.7} parent=11 // pred_fallthru
        _
    $region12: #{encoder_forward.7} parent=5 // pred_fallthru
      _
    %p124 = scmp.lt.s32.totalorder %s9, 2
    // Predicated region
    $region21: #{encoder_forward.7} parent=5 // pred_check
      %p125 = pneg %p124
    $region22: #{encoder_forward.7} parent=5 // pred_check_branch
      %127 = sbr.rel (%p125) target = $region24
    $region23: #{encoder_forward.7} parent=5 // pred_region
      // Predicated region
      $region25: #{encoder_forward.7} parent=23 // pred_check
        %p128 = pneg %p29
      $region26: #{encoder_forward.7} parent=23 // pred_check_branch
        %130 = sbr.rel (%p128) target = $region28
      $region27: #{encoder_forward.7} parent=23 // pred_region
        %p131 = scmp.lt.s32.totalorder %s9, 1
        %s132 = scalar_select %p131, %s9, 1
        %s133 = smul.addr %s132, 4
        %s134 = smul.addr %s133, 4
        %s135 = scalar_lea.vmem %s0, %s134
      $region28: #{encoder_forward.7} parent=23 // pred_fallthru
        _
    $region24: #{encoder_forward.7} parent=5 // pred_fallthru
      _
    %p136 = scmp.le.s32.totalorder 1, %s9
    %p137 = scmp.lt.s32.totalorder %s9, 3
    %p138 = pnand %p136, %p137
    %p139 = pneg %p138
    // Predicated region
    $region29: #{encoder_forward.7} parent=5 // pred_check
      _
    $region30: #{encoder_forward.7} parent=5 // pred_check_branch
      %141 = sbr.rel (%p138) target = $region32
    $region31: #{encoder_forward.7} parent=5 // pred_region
      %s142 = ssub.s32 %s9, 1
      %p143 = scmp.lt.s32.totalorder %s14, 1
      %s144 = scalar_select %p143, %s14, 1
      %s145 = smul.addr %s144, 4
      %s146 = smul.addr %s145, 4
      %s147 = scalar_lea.vmem %s0, %s146
      %p148 = pneg %p35
      %p149 = pneg %p32
      %p150 = pneg %p56
      %p151 = pneg %p53
      %p152 = pneg %p77
      %p153 = pneg %p74
      %p154 = pneg %p103
      %p155 = pneg %p100
      %p156 = scmp.lt.s32.totalorder %s14, 1
      %s157 = scalar_select %p156, %s14, 1
      %s158 = smul.addr %s157, 4
      %s159 = scalar_lea.vmem %s3, %s158
      %p160 = scmp.lt.s32.totalorder %s14, 1
      %s161 = scalar_select %p160, %s14, 1
      %s162 = smul.addr %s161, 4
      %s163 = smul.addr %s162, 4
      %s164 = scalar_lea.vmem %s0, %s163
      %p165 = scmp.lt.s32.totalorder %s14, 1
      %s166 = scalar_select %p165, %s14, 1
      %s167 = smul.addr %s166, 4
      %s168 = scalar_lea.vmem %s3, %s167
      %v170 = vld [vmem:[%s164] sm:$0xff]
      %v171 = vld [vmem:[%s164 + $0x8] sm:$0xff]
      %v172 = vld [vmem:[%s1] sm:$0xf]
      %v173 = vld [vmem:[%s1 + $0x4] sm:$0xf]
      %v174 = vld [vmem:[%s1 + $0x8] sm:$0xf]
      %v175 = vld [vmem:[%s1 + $0xc] sm:$0xf]
      %v176 = vld [vmem:[%s1 + $0x10] sm:$0xf]
      %v177 = vld [vmem:[%s1 + $0x14] sm:$0xf]
      %v178 = vld [vmem:[%s1 + $0x18] sm:$0xf]
      %v179 = vld [vmem:[%s1 + $0x1c] sm:$0xf]
      %v180 = vld [vmem:[%s1 + $0x20] sm:$0xf]
      %v181 = vld [vmem:[%s1 + $0x24] sm:$0xf]
      %v182 = vld [vmem:[%s1 + $0x28] sm:$0xf]
      %v183 = vld [vmem:[%s1 + $0x2c] sm:$0xf]
      %v184 = vld [vmem:[%s1 + $0x30] sm:$0xf]
      %v185 = vld [vmem:[%s1 + $0x34] sm:$0xf]
      %v186 = vld [vmem:[%s1 + $0x38] sm:$0xf]
      %v187 = vld [vmem:[%s1 + $0x3c] sm:$0xf]
      %v188 = vld [vmem:[%s1 + $0x40] sm:$0xf]
      %v189 = vld [vmem:[%s1 + $0x44] sm:$0xf]
      %v190 = vld [vmem:[%s1 + $0x48] sm:$0xf]
      %v191 = vld [vmem:[%s1 + $0x4c] sm:$0xf]
      %v192 = vld [vmem:[%s1 + $0x50] sm:$0xf]
      %v193 = vld [vmem:[%s1 + $0x54] sm:$0xf]
      %v194 = vld [vmem:[%s1 + $0x58] sm:$0xf]
      %v195 = vld [vmem:[%s1 + $0x5c] sm:$0xf]
      %v196 = vld [vmem:[%s1 + $0x60] sm:$0xf]
      %v197 = vld [vmem:[%s1 + $0x64] sm:$0xf]
      %v198 = vld [vmem:[%s1 + $0x68] sm:$0xf]
      %v199 = vld [vmem:[%s1 + $0x6c] sm:$0xf]
      %v200 = vld [vmem:[%s1 + $0x70] sm:$0xf]
      %v201 = vld [vmem:[%s1 + $0x74] sm:$0xf]
      %v202 = vld [vmem:[%s1 + $0x78] sm:$0xf]
      %v203 = vld [vmem:[%s1 + $0x7c] sm:$0xf]
      %v204 = vld [vmem:[%s1 + $0x80] sm:$0xf]
      %v205 = vld [vmem:[%s1 + $0x84] sm:$0xf]
      %v206 = vld [vmem:[%s1 + $0x88] sm:$0xf]
      %v207 = vld [vmem:[%s1 + $0x8c] sm:$0xf]
      %v208 = vld [vmem:[%s1 + $0x90] sm:$0xf]
      %v209 = vld [vmem:[%s1 + $0x94] sm:$0xf]
      %v210 = vld [vmem:[%s1 + $0x98] sm:$0xf]
      %v211 = vld [vmem:[%s1 + $0x9c] sm:$0xf]
      %v212 = vld [vmem:[%s1 + $0xa0] sm:$0xf]
      %v213 = vld [vmem:[%s1 + $0xa4] sm:$0xf]
      %v214 = vld [vmem:[%s1 + $0xa8] sm:$0xf]
      %v215 = vld [vmem:[%s1 + $0xac] sm:$0xf]
      %v216 = vld [vmem:[%s1 + $0xb0] sm:$0xf]
      %v217 = vld [vmem:[%s1 + $0xb4] sm:$0xf]
      %v218 = vld [vmem:[%s1 + $0xb8] sm:$0xf]
      %v219 = vld [vmem:[%s1 + $0xbc] sm:$0xf]
      %v220 = vld [vmem:[%s1 + $0xc0] sm:$0xf]
      %v221 = vld [vmem:[%s1 + $0xc4] sm:$0xf]
      %v222 = vld [vmem:[%s1 + $0xc8] sm:$0xf]
      %v223 = vld [vmem:[%s1 + $0xcc] sm:$0xf]
      %v224 = vld [vmem:[%s1 + $0xd0] sm:$0xf]
      %v225 = vld [vmem:[%s1 + $0xd4] sm:$0xf]
      %v226 = vld [vmem:[%s1 + $0xd8] sm:$0xf]
      %v227 = vld [vmem:[%s1 + $0xdc] sm:$0xf]
      %v228 = vld [vmem:[%s1 + $0xe0] sm:$0xf]
      %v229 = vld [vmem:[%s1 + $0xe4] sm:$0xf]
      %v230 = vld [vmem:[%s1 + $0xe8] sm:$0xf]
      %v231 = vld [vmem:[%s1 + $0xec] sm:$0xf]
      %v232 = vld [vmem:[%s1 + $0xf0] sm:$0xf]
      %v233 = vld [vmem:[%s1 + $0xf4] sm:$0xf]
      %v234 = vld [vmem:[%s1 + $0xf8] sm:$0xf]
      %v235 = vld [vmem:[%s1 + $0xfc] sm:$0xf]
      %v236 = vld [vmem:[%s2] sm:$0x1]
      %v238 = vlaneseq
      %v239 = vshrl.u32 %v238, 7
      %v240 = vsub.s32 0, %v239
      %v241 = vrot.slane %v236, %v240
      %v245 = vunpack.c.l.b16 %v170
      %v246 = vunpack.c.h.b16 %v170
      %v247 = vunpack.c.l.b16 %v171
      %v248 = vunpack.c.h.b16 %v171
      %v249 = vpack.c.b16 %v245, %v245
      %v250 = vpack.c.b16 %v246, %v246
      %v251 = vpack.c.b16 %v247, %v247
      %v252 = vpack.c.b16 %v248, %v248
      %v321 = vunpack.c.l.b16 %v172
      %v322 = vunpack.c.l.b16 %v173
      %v323 = vunpack.c.l.b16 %v174
      %v324 = vunpack.c.l.b16 %v175
      %v325 = vunpack.c.l.b16 %v176
      %v326 = vunpack.c.l.b16 %v177
      %v327 = vunpack.c.l.b16 %v178
      %v328 = vunpack.c.l.b16 %v179
      %v329 = vunpack.c.l.b16 %v180
      %v330 = vunpack.c.l.b16 %v181
      %v331 = vunpack.c.l.b16 %v182
      %v332 = vunpack.c.l.b16 %v183
      %v333 = vunpack.c.l.b16 %v184
      %v334 = vunpack.c.l.b16 %v185
      %v335 = vunpack.c.l.b16 %v186
      %v336 = vunpack.c.l.b16 %v187
      %v337 = vunpack.c.l.b16 %v188
      %v338 = vunpack.c.l.b16 %v189
      %v339 = vunpack.c.l.b16 %v190
      %v340 = vunpack.c.l.b16 %v191
      %v341 = vunpack.c.l.b16 %v192
      %v342 = vunpack.c.l.b16 %v193
      %v343 = vunpack.c.l.b16 %v194
      %v344 = vunpack.c.l.b16 %v195
      %v345 = vunpack.c.l.b16 %v196
      %v346 = vunpack.c.l.b16 %v197
      %v347 = vunpack.c.l.b16 %v198
      %v348 = vunpack.c.l.b16 %v199
      %v349 = vunpack.c.l.b16 %v200
      %v350 = vunpack.c.l.b16 %v201
      %v351 = vunpack.c.l.b16 %v202
      %v352 = vunpack.c.l.b16 %v203
      %v353 = vunpack.c.l.b16 %v204
      %v354 = vunpack.c.l.b16 %v205
      %v355 = vunpack.c.l.b16 %v206
      %v356 = vunpack.c.l.b16 %v207
      %v357 = vunpack.c.l.b16 %v208
      %v358 = vunpack.c.l.b16 %v209
      %v359 = vunpack.c.l.b16 %v210
      %v360 = vunpack.c.l.b16 %v211
      %v361 = vunpack.c.l.b16 %v212
      %v362 = vunpack.c.l.b16 %v213
      %v363 = vunpack.c.l.b16 %v214
      %v364 = vunpack.c.l.b16 %v215
      %v365 = vunpack.c.l.b16 %v216
      %v366 = vunpack.c.l.b16 %v217
      %v367 = vunpack.c.l.b16 %v218
      %v368 = vunpack.c.l.b16 %v219
      %v369 = vunpack.c.l.b16 %v220
      %v370 = vunpack.c.l.b16 %v221
      %v371 = vunpack.c.l.b16 %v222
      %v372 = vunpack.c.l.b16 %v223
      %v373 = vunpack.c.l.b16 %v224
      %v374 = vunpack.c.l.b16 %v225
      %v375 = vunpack.c.l.b16 %v226
      %v376 = vunpack.c.l.b16 %v227
      %v377 = vunpack.c.l.b16 %v228
      %v378 = vunpack.c.l.b16 %v229
      %v379 = vunpack.c.l.b16 %v230
      %v380 = vunpack.c.l.b16 %v231
      %v381 = vunpack.c.l.b16 %v232
      %v382 = vunpack.c.l.b16 %v233
      %v383 = vunpack.c.l.b16 %v234
      %v384 = vunpack.c.l.b16 %v235
      %v385 = vpack.c.b16 %v322, %v321
      %v386 = vpack.c.b16 %v324, %v323
      %v387 = vpack.c.b16 %v326, %v325
      %v388 = vpack.c.b16 %v328, %v327
      %v389 = vpack.c.b16 %v330, %v329
      %v390 = vpack.c.b16 %v332, %v331
      %v391 = vpack.c.b16 %v334, %v333
      %v392 = vpack.c.b16 %v336, %v335
      %v393 = vpack.c.b16 %v338, %v337
      %v394 = vpack.c.b16 %v340, %v339
      %v395 = vpack.c.b16 %v342, %v341
      %v396 = vpack.c.b16 %v344, %v343
      %v397 = vpack.c.b16 %v346, %v345
      %v398 = vpack.c.b16 %v348, %v347
      %v399 = vpack.c.b16 %v350, %v349
      %v400 = vpack.c.b16 %v352, %v351
      %v401 = vpack.c.b16 %v354, %v353
      %v402 = vpack.c.b16 %v356, %v355
      %v403 = vpack.c.b16 %v358, %v357
      %v404 = vpack.c.b16 %v360, %v359
      %v405 = vpack.c.b16 %v362, %v361
      %v406 = vpack.c.b16 %v364, %v363
      %v407 = vpack.c.b16 %v366, %v365
      %v408 = vpack.c.b16 %v368, %v367
      %v409 = vpack.c.b16 %v370, %v369
      %v410 = vpack.c.b16 %v372, %v371
      %v411 = vpack.c.b16 %v374, %v373
      %v412 = vpack.c.b16 %v376, %v375
      %v413 = vpack.c.b16 %v378, %v377
      %v414 = vpack.c.b16 %v380, %v379
      %v415 = vpack.c.b16 %v382, %v381
      %v416 = vpack.c.b16 %v384, %v383
      %449 = vmatprep.subr.bf16.mxu0 0
      %450 = vmatpush1.bf16.msra.mxu0 %v385
      %451 = vmatprep.subr.bf16.mxu0 0
      %452 = vmatpush1.bf16.msra.mxu0 %v386
      %453 = vmatprep.subr.bf16.mxu0 0
      %454 = vmatpush1.bf16.msra.mxu0 %v387
      %455 = vmatprep.subr.bf16.mxu0 0
      %456 = vmatpush1.bf16.msra.mxu0 %v388
      %457 = vmatprep.subr.bf16.mxu0 0
      %458 = vmatpush1.bf16.msra.mxu0 %v389
      %459 = vmatprep.subr.bf16.mxu0 0
      %460 = vmatpush1.bf16.msra.mxu0 %v390
      %461 = vmatprep.subr.bf16.mxu0 0
      %462 = vmatpush1.bf16.msra.mxu0 %v391
      %463 = vmatprep.subr.bf16.mxu0 0
      %464 = vmatpush1.bf16.msra.mxu0 %v392
      %465 = vmatprep.subr.bf16.mxu0 0
      %466 = vmatpush1.bf16.msra.mxu0 %v393
      %467 = vmatprep.subr.bf16.mxu0 0
      %468 = vmatpush1.bf16.msra.mxu0 %v394
      %469 = vmatprep.subr.bf16.mxu0 0
      %470 = vmatpush1.bf16.msra.mxu0 %v395
      %471 = vmatprep.subr.bf16.mxu0 0
      %472 = vmatpush1.bf16.msra.mxu0 %v396
      %473 = vmatprep.subr.bf16.mxu0 0
      %474 = vmatpush1.bf16.msra.mxu0 %v397
      %475 = vmatprep.subr.bf16.mxu0 0
      %476 = vmatpush1.bf16.msra.mxu0 %v398
      %477 = vmatprep.subr.bf16.mxu0 0
      %478 = vmatpush1.bf16.msra.mxu0 %v399
      %479 = vmatprep.subr.bf16.mxu0 0
      %480 = vmatpush1.bf16.msra.mxu0 %v400
      %481 = vmatprep.mubr.bf16.mxu0 %v250
      %482 = vmatmul.mubr.bf16.gmra.mrb[0].mxu0 %v249
      %v483 = vpop.f32.mrb[0].mxu0
      %v484 = vadd.f32 %v241, %v483
      %v485 = vpop.f32.mrb[0].mxu0
      %v486 = vpop.f32.mrb[0].mxu0
      %v487 = vpop.f32.mrb[0].mxu0
      %488 = vdwg.mxu0
      %489 = vmatprep.subr.bf16.mxu0 0
      %490 = vmatpush1.bf16.msra.mxu0 %v401
      %491 = vmatprep.subr.bf16.mxu0 0
      %492 = vmatpush1.bf16.msra.mxu0 %v402
      %493 = vmatprep.subr.bf16.mxu0 0
      %494 = vmatpush1.bf16.msra.mxu0 %v403
      %495 = vmatprep.subr.bf16.mxu0 0
      %496 = vmatpush1.bf16.msra.mxu0 %v404
      %497 = vmatprep.subr.bf16.mxu0 0
      %498 = vmatpush1.bf16.msra.mxu0 %v405
      %499 = vmatprep.subr.bf16.mxu0 0
      %500 = vmatpush1.bf16.msra.mxu0 %v406
      %501 = vmatprep.subr.bf16.mxu0 0
      %502 = vmatpush1.bf16.msra.mxu0 %v407
      %503 = vmatprep.subr.bf16.mxu0 0
      %504 = vmatpush1.bf16.msra.mxu0 %v408
      %505 = vmatprep.subr.bf16.mxu0 0
      %506 = vmatpush1.bf16.msra.mxu0 %v409
      %507 = vmatprep.subr.bf16.mxu0 0
      %508 = vmatpush1.bf16.msra.mxu0 %v410
      %509 = vmatprep.subr.bf16.mxu0 0
      %510 = vmatpush1.bf16.msra.mxu0 %v411
      %511 = vmatprep.subr.bf16.mxu0 0
      %512 = vmatpush1.bf16.msra.mxu0 %v412
      %513 = vmatprep.subr.bf16.mxu0 0
      %514 = vmatpush1.bf16.msra.mxu0 %v413
      %515 = vmatprep.subr.bf16.mxu0 0
      %516 = vmatpush1.bf16.msra.mxu0 %v414
      %517 = vmatprep.subr.bf16.mxu0 0
      %518 = vmatpush1.bf16.msra.mxu0 %v415
      %519 = vmatprep.subr.bf16.mxu0 0
      %520 = vmatpush1.bf16.msra.mxu0 %v416
      %521 = vmatprep.mubr.bf16.mxu0 %v252
      %522 = vmatmul.mubr.bf16.gmra.mrb[0].mxu0 %v251
      %v523 = vpop.f32.mrb[0].mxu0
      %v524 = vadd.f32 %v484, %v523
      %v525 = vpop.f32.mrb[0].mxu0
      %v526 = vpop.f32.mrb[0].mxu0
      %v527 = vpop.f32.mrb[0].mxu0
      %528 = vdwg.mxu0
      %v529 = vmax.f32 %v524, 0.0
      %v530 = vpack.c.bf16 %v529, %v529
      %vm531 = vcmask 519168
      %532 = vst.msk [vmem:[%s168] sm:$0xf] %vm531, %v530
      %p533 = scmp.lt.s32.totalorder %s14, 1
      %s534 = scalar_select %p533, %s14, 1
      %s535 = smul.addr %s534, 4
      %s536 = scalar_lea.vmem %s3, %s535
      // Predicated region
      $region33: #{encoder_forward.7} parent=31 // pred_check
        %p537 = pneg %p100
      $region34: #{encoder_forward.7} parent=31 // pred_check_branch
        %539 = sbr.rel (%p537) target = $region36
      $region35: #{encoder_forward.7} parent=31 // pred_region
        _
      $region36: #{encoder_forward.7} parent=31 // pred_fallthru
        _
    $region32: #{encoder_forward.7} parent=5 // pred_fallthru
      _
    %p540 = scmp.le.s32.totalorder 2, %s9
    // Predicated region
    $region37: #{encoder_forward.7} parent=5 // pred_check
      %p541 = pneg %p540
    $region38: #{encoder_forward.7} parent=5 // pred_check_branch
      %543 = sbr.rel (%p541) target = $region40
    $region39: #{encoder_forward.7} parent=5 // pred_region
      %s544 = ssub.s32 %s9, 2
      // Predicated region
      $region41: #{encoder_forward.7} parent=39 // pred_check
        %p545 = pneg %p106
      $region42: #{encoder_forward.7} parent=39 // pred_check_branch
        %547 = sbr.rel (%p545) target = $region44
      $region43: #{encoder_forward.7} parent=39 // pred_region
        %p548 = scmp.lt.s32.totalorder %s15, 1
        %s549 = scalar_select %p548, %s15, 1
        %s550 = smul.addr %s549, 4
        %s551 = scalar_lea.vmem %s3, %s550
      $region44: #{encoder_forward.7} parent=39 // pred_fallthru
        _
    $region40: #{encoder_forward.7} parent=5 // pred_fallthru
      _
  $region6: #{encoder_forward.7} parent=0 // loop_footer
    %s13 = sadd.s32 1, %s9
  $region7: #{encoder_forward.7} parent=0 // loop_footer_branch
    %8 = sbr.rel target = $region3
  $region8: #{encoder_forward.7} parent=0 // loop_exit
    _

</llo_original>
